<compile_context>
chip_gen: v7x
topology: tpu7x:2x2x1
jax: 0.10.0
libtpu: 0.0.40
codegen_flags: <defaults>
</compile_context>

<pallas_src>
import functools
import math

import jax
import jax.numpy as jnp
from jax import lax
from jax.experimental import pallas as pl
from jax.experimental.pallas import tpu as pltpu


def _layernorm(v, g, b, eps):
    mu = jnp.mean(v, axis=-1, keepdims=True)
    var = jnp.mean((v - mu) ** 2, axis=-1, keepdims=True)
    return (v - mu) * lax.rsqrt(var + eps) * g + b


# Contract dim 1 of both operands => q @ k^T on the MXU without materializing a transpose.
_TRANS_B = (((1,), (1,)), ((), ()))


def gpt2_block_kernel(
    x_ref,
    ln1g_ref, ln1b_ref, ln2g_ref, ln2b_ref,
    wqkv_ref, bqkv_ref, wo_ref, bo_ref,
    w1_ref, b1_ref, w2_ref, b2_ref,
    o_ref,
    qkv_scr, ctx_scr, skip_scr,
    *opt_scr,
    num_heads, eps,
):
    ffn_acc = opt_scr[0] if opt_scr else None      # None => accumulate into o_ref (f32 out)
    f = pl.program_id(1)
    n_f = pl.num_programs(1)
    _, S, D = x_ref.shape
    Dh = D // num_heads

    # ---- LN1 + attention + LN2: once per batch element (first FFN-tile step) ----
    @pl.when(f == 0)
    def _attention():
        x = x_ref[0].astype(jnp.float32)                       # (S, D)
        xn = _layernorm(x, ln1g_ref[...], ln1b_ref[...], eps)
        skip_scr[...] = xn                                     # park xn; bounds its live range
        xn_bf = xn.astype(jnp.bfloat16)

        # Fused QKV projection: single wide MXU pass, f32 accumulation.
        qkv = jnp.dot(xn_bf, wqkv_ref[...],
                      preferred_element_type=jnp.float32) + bqkv_ref[...]
        # Stage bf16 q|k|v in VMEM immediately (halves + bounds the (S, 3D) temp);
        # 1/sqrt(Dh) is folded into q once.
        qkv_scr[:, :D] = (qkv[:, :D] * jnp.float32(1.0 / math.sqrt(Dh))).astype(jnp.bfloat16)
        qkv_scr[:, D:] = qkv[:, D:].astype(jnp.bfloat16)

        # Per-head attention: each head writes its bf16 context into ctx_scr;
        # the output projection is ONE full-K matmul after the loop.
        # TODO(synk): for long sequences (S >= ~1024 on v7x) switch to a KV-tiled
        # online-softmax (flash) loop and add a parallel query-tile grid axis.
        # TODO(synk): process heads in lane-aligned 128-wide pairs when Dh == 64
        # to avoid per-head misaligned lane slices.
        for h in range(num_heads):                              # static unroll, no cross-head values
            q_h = qkv_scr[:, h * Dh:(h + 1) * Dh]
            k_h = qkv_scr[:, D + h * Dh:D + (h + 1) * Dh]
            v_h = qkv_scr[:, 2 * D + h * Dh:2 * D + (h + 1) * Dh]
            scores = lax.dot_general(q_h, k_h, _TRANS_B,
                                     preferred_element_type=jnp.float32)   # (S, S)
            scores = scores - jnp.max(scores, axis=-1, keepdims=True)
            p = jnp.exp(scores)                                 # unnormalized, <= 1
            denom = jnp.sum(p, axis=-1, keepdims=True)          # (S, 1)
            ctx_h = jnp.dot(p.astype(jnp.bfloat16), v_h,
                            preferred_element_type=jnp.float32)  # (S, Dh)
            # Normalize the (S, Dh) context, not the (S, S) probabilities.
            ctx_scr[:, h * Dh:(h + 1) * Dh] = (
                ctx_h * pl.reciprocal(denom, approx=True)).astype(jnp.bfloat16)

        # Single full-contraction output projection (K = D).
        mha = jnp.dot(ctx_scr[...], wo_ref[...],
                      preferred_element_type=jnp.float32) + bo_ref[...]

        # Residual uses xn (post-LN1), matching the reference module.
        skip_scr[...] = _layernorm(skip_scr[...] + mha, ln2g_ref[...], ln2b_ref[...], eps)

        # Init the FFN accumulator.
        if ffn_acc is not None:
            ffn_acc[...] = jnp.zeros_like(ffn_acc)
        else:
            o_ref[0] = jnp.zeros((S, D), o_ref.dtype)

    # ---- FFN tile: h1_f = GELU(skip @ W1[:, f]) ; acc += h1_f @ W2[f, :] ----
    skip_bf = skip_scr[...].astype(jnp.bfloat16)
    h1 = jnp.dot(skip_bf, w1_ref[...], preferred_element_type=jnp.float32) + b1_ref[...]
    # Exact (erf) GELU to match the reference numerics.
    # TODO(synk): switch to tanh-GELU (EUP slot) on v6e/v7x if tolerance allows.
    h1 = 0.5 * h1 * (1.0 + lax.erf(h1 * jnp.float32(1.0 / math.sqrt(2.0))))
    contrib = jnp.dot(h1.astype(jnp.bfloat16), w2_ref[...],
                      preferred_element_type=jnp.float32)

    # TODO(synk): dropout layers are identity here (eval mode); training dropout not implemented.
    if ffn_acc is not None:
        ffn_acc[...] += contrib

        @pl.when(f == n_f - 1)
        def _write_out():
            o_ref[0] = (skip_scr[...] + ffn_acc[...] + b2_ref[...]).astype(o_ref.dtype)
    else:
        # Output block is resident across the f axis: accumulate directly into it.
        o_ref[0] = o_ref[0] + contrib

        @pl.when(f == n_f - 1)
        def _finalize():
            o_ref[0] = o_ref[0] + skip_scr[...] + b2_ref[...]


def prepare_gpt2_block_params(params):
    """One-time weight fusion / casting, hoisted out of the per-call path."""
    bf16, f32 = jnp.bfloat16, jnp.float32
    return {
        "ln1_g": params["ln1_g"].astype(f32), "ln1_b": params["ln1_b"].astype(f32),
        "ln2_g": params["ln2_g"].astype(f32), "ln2_b": params["ln2_b"].astype(f32),
        "wqkv": jnp.concatenate([params["wq"], params["wk"], params["wv"]], axis=1).astype(bf16),
        "bqkv": jnp.concatenate([params["bq"], params["bk"], params["bv"]], axis=1).astype(f32),
        "wo": params["wo"].astype(bf16), "bo": params["bo"].astype(f32),
        "w1": params["w1"].astype(bf16), "b1": params["b1"].astype(f32),
        "w2": params["w2"].astype(bf16), "b2": params["b2"].astype(f32),
    }


def gpt2_block(x, prep, *, num_heads, eps=1e-6, ff_tile=None):
    B, S, D = x.shape
    F = prep["w1"].shape[1]
    acc_in_out = x.dtype == jnp.float32          # accumulate FFN directly into the output block

    # Generation-aware VMEM budget: leave headroom below the physical per-core capacity.
    try:
        vmem_cap = int(pltpu.get_tpu_info().vmem_capacity_bytes)
    except Exception:
        vmem_cap = 64 * 1024 * 1024              # conservative (v7x-sized) fallback
    budget = (vmem_cap * 3) // 4                 # ~48 MiB on v7x, ~96 MiB on 128 MiB parts

    xb = jnp.dtype(x.dtype).itemsize

    def estimate(tf, single_buf):
        bf, f4 = 2, 4
        inv = 1 if single_buf else 2
        weights = inv * (3 * D * D * bf + D * D * bf + 9 * D * f4)           # Wqkv, Wo, LN + biases
        io = 2 * S * D * xb + 2 * S * D * xb                                 # x block + out block
        ffn_w = 2 * (D * tf * bf + tf * f4 + tf * D * bf)                    # W1/b1/W2 tiles (x2 bufs)
        scratch = S * 3 * D * bf + S * D * bf + S * D * f4 + (0 if acc_in_out else S * D * f4)
        temps = S * 3 * D * f4 + S * S * f4 + 2 * S * D * f4 + 2 * S * tf * f4
        return weights + io + ffn_w + scratch + temps

    # FFN hidden-dim tile: largest 128-multiple candidate that fits the budget.
    if ff_tile is not None and F % ff_tile == 0:
        TF = ff_tile
    else:
        cands = [F] + [c for c in (4096, 2048, 1024, 512, 256, 128) if c < F and F % c == 0]
        TF = cands[-1]
        for c in cands:
            if estimate(c, True) <= budget:
                TF = c
                break
    n_f = F // TF

    def build(single_buffer):
        est = estimate(TF, single_buffer)
        vmem_limit = None
        if est > 12 * 1024 * 1024:               # only raise the scoped limit when needed
            vmem_limit = min(budget, int(1.4 * est))

        def const(shape):
            # Grid-invariant operands: single-buffer on request (saves duplicated weight VMEM).
            if single_buffer:
                return pl.BlockSpec(shape, lambda b, f: (0, 0), pipeline_mode=pl.Buffered(1))
            return pl.BlockSpec(shape, lambda b, f: (0, 0))

        scratch = [
            pltpu.VMEM((S, 3 * D), jnp.bfloat16),   # staged q|k|v (bf16)
            pltpu.VMEM((S, D), jnp.bfloat16),       # per-head contexts (concat-free)
            pltpu.VMEM((S, D), jnp.float32),        # xn, then skip = LN2(xn + mha)
        ]
        if not acc_in_out:
            scratch.append(pltpu.VMEM((S, D), jnp.float32))   # f32 FFN accumulator

        kernel = functools.partial(gpt2_block_kernel, num_heads=num_heads, eps=eps)
        return pl.pallas_call(
            kernel,
            out_shape=jax.ShapeDtypeStruct((B, S, D), x.dtype),
            grid_spec=pltpu.PrefetchScalarGridSpec(
                num_scalar_prefetch=0,
                grid=(B, n_f),
                in_specs=[
                    pl.BlockSpec((1, S, D), lambda b, f: (b, 0, 0)),   # x
                    const((1, D)), const((1, D)),                      # ln1 gamma/beta
                    const((1, D)), const((1, D)),                      # ln2 gamma/beta
                    const((D, 3 * D)), const((1, 3 * D)),              # Wqkv (bf16), bqkv
                    const((D, D)), const((1, D)),                      # Wo (bf16), bo
                    pl.BlockSpec((D, TF), lambda b, f: (0, f)),        # W1 tile (bf16)
                    pl.BlockSpec((1, TF), lambda b, f: (0, f)),        # b1 tile
                    pl.BlockSpec((TF, D), lambda b, f: (f, 0)),        # W2 tile (bf16)
                    const((1, D)),                                     # b2 (added once at the end)
                ],
                out_specs=pl.BlockSpec((1, S, D), lambda b, f: (b, 0, 0)),
                scratch_shapes=scratch,
            ),
            compiler_params=pltpu.CompilerParams(
                dimension_semantics=("parallel", "arbitrary"),
                vmem_limit_bytes=vmem_limit,
            ),
        )

    args = (
        x,
        prep["ln1_g"], prep["ln1_b"], prep["ln2_g"], prep["ln2_b"],
        prep["wqkv"], prep["bqkv"], prep["wo"], prep["bo"],
        prep["w1"], prep["b1"], prep["w2"], prep["b2"],
    )
    try:
        return build(single_buffer=True)(*args)
    except Exception:
        # pl.Buffered(1) unsupported on this jax/backend combo: fall back to default buffering.
        return build(single_buffer=False)(*args)


def gpt2_block_ref(x, params, *, num_heads, eps=1e-6):
    """Pure-JAX f32 reference mirroring the PyTorch forward (eval mode, mask=None)."""
    B, S, D = x.shape
    Dh = D // num_heads
    xn = _layernorm(x, params["ln1_g"], params["ln1_b"], eps)

    def proj(v, w, b):
        return jnp.einsum("bsd,df->bsf", v, w) + b

    q = proj(xn, params["wq"], params["bq"]).reshape(B, S, num_heads, Dh).transpose(0, 2, 1, 3)
    k = proj(xn, params["wk"], params["bk"]).reshape(B, S, num_heads, Dh).transpose(0, 2, 1, 3)
    v = proj(xn, params["wv"], params["bv"]).reshape(B, S, num_heads, Dh).transpose(0, 2, 1, 3)
    scores = jnp.einsum("bhqd,bhkd->bhqk", q, k) / math.sqrt(Dh)
    p = jax.nn.softmax(scores, axis=-1)
    ctx = jnp.einsum("bhqk,bhkd->bhqd", p, v).transpose(0, 2, 1, 3).reshape(B, S, D)
    mha = proj(ctx, params["wo"], params["bo"])

    skip = _layernorm(xn + mha, params["ln2_g"], params["ln2_b"], eps)
    h1 = proj(skip, params["w1"], params["b1"])
    h1 = 0.5 * h1 * (1.0 + lax.erf(h1 / jnp.sqrt(jnp.float32(2.0))))
    ffn = proj(h1, params["w2"], params["b2"])
    return skip + ffn


if __name__ == "__main__":
    B, S, D, H, F = 2, 8, 32, 4, 64
    key = jax.random.PRNGKey(0)
    ks = jax.random.split(key, 17)

    def w(k, shape, scale=0.02):
        return (scale * jax.random.normal(k, shape)).astype(jnp.float32)

    params = {
        "ln1_g": (1.0 + w(ks[0], (1, D))), "ln1_b": w(ks[1], (1, D)),
        "ln2_g": (1.0 + w(ks[2], (1, D))), "ln2_b": w(ks[3], (1, D)),
        "wq": w(ks[4], (D, D)), "bq": w(ks[5], (1, D)),
        "wk": w(ks[6], (D, D)), "bk": w(ks[7], (1, D)),
        "wv": w(ks[8], (D, D)), "bv": w(ks[9], (1, D)),
        "wo": w(ks[10], (D, D)), "bo": w(ks[11], (1, D)),
        "w1": w(ks[12], (D, F)), "b1": w(ks[13], (1, F)),
        "w2": w(ks[14], (F, D)), "b2": w(ks[15], (1, D)),
    }
    x = jax.random.normal(ks[16], (B, S, D), dtype=jnp.float32)

    prep = prepare_gpt2_block_params(params)     # one-time weight fusion / casts
    out = jax.block_until_ready(gpt2_block(x, prep, num_heads=H))

    ref = gpt2_block_ref(x, params, num_heads=H)
    assert out.shape == (B, S, D)
    # bf16 MXU inputs with f32 accumulation (+ approx softmax reciprocal): compare against
    # the f32 reference with a tolerance that covers bf16 rounding.
    assert jnp.allclose(out, ref, atol=1e-2, rtol=1e-2), (
        "mismatch vs pure-JAX reference, max abs err = "
        f"{float(jnp.max(jnp.abs(out - ref)))}"
    )

    print("KERNEL_OK")
</pallas_src>

<mosaic_0001>
module attributes {stable_mosaic.version = 11 : i64} {
  func.func @gpt2_block_kernel(%arg0: i32, %arg1: i32, %arg2: memref<1x8x32xf32, #tpu.memory_space<vmem>>, %arg3: memref<1x32xf32, #tpu.memory_space<vmem>>, %arg4: memref<1x32xf32, #tpu.memory_space<vmem>>, %arg5: memref<1x32xf32, #tpu.memory_space<vmem>>, %arg6: memref<1x32xf32, #tpu.memory_space<vmem>>, %arg7: memref<32x96xbf16, #tpu.memory_space<vmem>>, %arg8: memref<1x96xf32, #tpu.memory_space<vmem>>, %arg9: memref<32x32xbf16, #tpu.memory_space<vmem>>, %arg10: memref<1x32xf32, #tpu.memory_space<vmem>>, %arg11: memref<32x64xbf16, #tpu.memory_space<vmem>>, %arg12: memref<1x64xf32, #tpu.memory_space<vmem>>, %arg13: memref<64x32xbf16, #tpu.memory_space<vmem>>, %arg14: memref<1x32xf32, #tpu.memory_space<vmem>>, %arg15: memref<1x8x32xf32, #tpu.memory_space<vmem>>, %arg16: memref<8x96xbf16, #tpu.memory_space<vmem>>, %arg17: memref<8x32xbf16, #tpu.memory_space<vmem>>, %arg18: memref<8x32xf32, #tpu.memory_space<vmem>>) attributes {dimension_semantics = [#tpu.dimension_semantics<parallel>, #tpu.dimension_semantics<arbitrary>], iteration_bounds = array<i64: 2, 1>, scalar_prefetch = 0 : i64, scratch_operands = 3 : i64, tpu.core_type = #tpu.core_type<tc>, window_params = [{transform_indices = @transform_0, window_bounds = array<i64: 1, 8, 32>}, {pipeline_mode = #tpu.pipeline_mode<synchronous>, transform_indices = @transform_1, window_bounds = array<i64: 1, 32>}, {pipeline_mode = #tpu.pipeline_mode<synchronous>, transform_indices = @transform_2, window_bounds = array<i64: 1, 32>}, {pipeline_mode = #tpu.pipeline_mode<synchronous>, transform_indices = @transform_3, window_bounds = array<i64: 1, 32>}, {pipeline_mode = #tpu.pipeline_mode<synchronous>, transform_indices = @transform_4, window_bounds = array<i64: 1, 32>}, {pipeline_mode = #tpu.pipeline_mode<synchronous>, transform_indices = @transform_5, window_bounds = array<i64: 32, 96>}, {pipeline_mode = #tpu.pipeline_mode<synchronous>, transform_indices = @transform_6, window_bounds = array<i64: 1, 96>}, {pipeline_mode = #tpu.pipeline_mode<synchronous>, transform_indices = @transform_7, window_bounds = array<i64: 32, 32>}, {pipeline_mode = #tpu.pipeline_mode<synchronous>, transform_indices = @transform_8, window_bounds = array<i64: 1, 32>}, {transform_indices = @transform_9, window_bounds = array<i64: 32, 64>}, {transform_indices = @transform_10, window_bounds = array<i64: 1, 64>}, {transform_indices = @transform_11, window_bounds = array<i64: 64, 32>}, {pipeline_mode = #tpu.pipeline_mode<synchronous>, transform_indices = @transform_12, window_bounds = array<i64: 1, 32>}, {transform_indices = @transform_13, window_bounds = array<i64: 1, 8, 32>}]} {
    %c0_i32 = arith.constant 0 : i32
    %0 = arith.cmpi eq, %arg1, %c0_i32 : i32
    %1 = arith.extui %0 : i1 to i32
    %c0_i32_0 = arith.constant 0 : i32
    %2 = arith.cmpi ne, %1, %c0_i32_0 : i32
    scf.if %2 {
      %c0_20 = arith.constant 0 : index
      %c0_21 = arith.constant 0 : index
      %c0_22 = arith.constant 0 : index
      %30 = vector.load %arg2[%c0_20, %c0_21, %c0_22] : memref<1x8x32xf32, #tpu.memory_space<vmem>>, vector<1x8x32xf32>
      %31 = vector.shape_cast %30 : vector<1x8x32xf32> to vector<8x32xf32>
      %c0_23 = arith.constant 0 : index
      %c0_24 = arith.constant 0 : index
      %32 = vector.load %arg3[%c0_23, %c0_24] : memref<1x32xf32, #tpu.memory_space<vmem>>, vector<1x32xf32>
      %c0_25 = arith.constant 0 : index
      %c0_26 = arith.constant 0 : index
      %33 = vector.load %arg4[%c0_25, %c0_26] : memref<1x32xf32, #tpu.memory_space<vmem>>, vector<1x32xf32>
      %cst_27 = arith.constant dense<0.000000e+00> : vector<8xf32>
      %34 = vector.multi_reduction <add>, %31, %cst_27 [1] : vector<8x32xf32> to vector<8xf32>
      %35 = vector.shape_cast %34 : vector<8xf32> to vector<8x1xf32>
      %cst_28 = arith.constant 3.200000e+01 : f32
      %36 = vector.broadcast %cst_28 : f32 to vector<8x1xf32>
      %37 = arith.divf %35, %36 : vector<8x1xf32>
      %38 = vector.broadcast %37 : vector<8x1xf32> to vector<8x32xf32>
      %39 = arith.subf %31, %38 : vector<8x32xf32>
      %40 = arith.mulf %39, %39 : vector<8x32xf32>
      %cst_29 = arith.constant dense<0.000000e+00> : vector<8xf32>
      %41 = vector.multi_reduction <add>, %40, %cst_29 [1] : vector<8x32xf32> to vector<8xf32>
      %42 = vector.shape_cast %41 : vector<8xf32> to vector<8x1xf32>
      %cst_30 = arith.constant 3.200000e+01 : f32
      %43 = vector.broadcast %cst_30 : f32 to vector<8x1xf32>
      %44 = arith.divf %42, %43 : vector<8x1xf32>
      %45 = vector.broadcast %37 : vector<8x1xf32> to vector<8x32xf32>
      %46 = arith.subf %31, %45 : vector<8x32xf32>
      %cst_31 = arith.constant 9.99999997E-7 : f32
      %47 = vector.broadcast %cst_31 : f32 to vector<8x1xf32>
      %48 = arith.addf %44, %47 : vector<8x1xf32>
      %49 = math.rsqrt %48 : vector<8x1xf32>
      %50 = vector.broadcast %49 : vector<8x1xf32> to vector<8x32xf32>
      %51 = arith.mulf %46, %50 : vector<8x32xf32>
      %52 = vector.broadcast %32 : vector<1x32xf32> to vector<8x32xf32>
      %53 = arith.mulf %51, %52 : vector<8x32xf32>
      %54 = vector.broadcast %33 : vector<1x32xf32> to vector<8x32xf32>
      %55 = arith.addf %53, %54 : vector<8x32xf32>
      %c0_32 = arith.constant 0 : index
      %c0_33 = arith.constant 0 : index
      %56 = vector.load %arg18[%c0_32, %c0_33] : memref<8x32xf32, #tpu.memory_space<vmem>>, vector<8x32xf32>
      tpu.vector_store %arg18[%c0_32, %c0_33], %55 {strides = array<i32>} : memref<8x32xf32, #tpu.memory_space<vmem>>, vector<8x32xf32>,
      %57 = arith.truncf %55 : vector<8x32xf32> to vector<8x32xbf16>
      %c0_34 = arith.constant 0 : index
      %c0_35 = arith.constant 0 : index
      %58 = vector.load %arg7[%c0_34, %c0_35] : memref<32x96xbf16, #tpu.memory_space<vmem>>, vector<32x96xbf16>
      %cst_36 = arith.constant dense<0.000000e+00> : vector<8x96xf32>
      %59 = tpu.matmul %57, %58, %cst_36 {dimension_numbers = #tpu.dot_dimension_numbers<[1], [0], [0], [1], [0, 0, 1, 1], [], []>} : vector<8x32xbf16>, vector<32x96xbf16>, vector<8x96xf32> -> vector<8x96xf32>
      %c0_37 = arith.constant 0 : index
      %c0_38 = arith.constant 0 : index
      %60 = vector.load %arg8[%c0_37, %c0_38] : memref<1x96xf32, #tpu.memory_space<vmem>>, vector<1x96xf32>
      %61 = vector.broadcast %60 : vector<1x96xf32> to vector<8x96xf32>
      %62 = arith.addf %59, %61 : vector<8x96xf32>
      %63 = vector.extract_strided_slice %62 {offsets = [0, 0], sizes = [8, 32], strides = [1, 1]} : vector<8x96xf32> to vector<8x32xf32>
      %cst_39 = arith.constant 0.353553385 : f32
      %64 = vector.broadcast %cst_39 : f32 to vector<8x32xf32>
      %65 = arith.mulf %63, %64 : vector<8x32xf32>
      %66 = arith.truncf %65 : vector<8x32xf32> to vector<8x32xbf16>
      %c0_40 = arith.constant 0 : index
      %c0_41 = arith.constant 0 : index
      %67 = vector.load %arg16[%c0_40, %c0_41] : memref<8x96xbf16, #tpu.memory_space<vmem>>, vector<8x32xbf16>
      tpu.vector_store %arg16[%c0_40, %c0_41], %66 {strides = array<i32>} : memref<8x96xbf16, #tpu.memory_space<vmem>>, vector<8x32xbf16>,
      %68 = vector.extract_strided_slice %62 {offsets = [0, 32], sizes = [8, 64], strides = [1, 1]} : vector<8x96xf32> to vector<8x64xf32>
      %69 = arith.truncf %68 : vector<8x64xf32> to vector<8x64xbf16>
      %c0_42 = arith.constant 0 : index
      %c32 = arith.constant 32 : index
      %70 = vector.load %arg16[%c0_42, %c32] : memref<8x96xbf16, #tpu.memory_space<vmem>>, vector<8x64xbf16>
      tpu.vector_store %arg16[%c0_42, %c32], %69 {strides = array<i32>} : memref<8x96xbf16, #tpu.memory_space<vmem>>, vector<8x64xbf16>,
      %c0_43 = arith.constant 0 : index
      %c0_44 = arith.constant 0 : index
      %71 = vector.load %arg16[%c0_43, %c0_44] : memref<8x96xbf16, #tpu.memory_space<vmem>>, vector<8x8xbf16>
      %c0_45 = arith.constant 0 : index
      %c32_46 = arith.constant 32 : index
      %72 = vector.load %arg16[%c0_45, %c32_46] : memref<8x96xbf16, #tpu.memory_space<vmem>>, vector<8x8xbf16>
      %c0_47 = arith.constant 0 : index
      %c64 = arith.constant 64 : index
      %73 = vector.load %arg16[%c0_47, %c64] : memref<8x96xbf16, #tpu.memory_space<vmem>>, vector<8x8xbf16>
      %cst_48 = arith.constant dense<0.000000e+00> : vector<8x8xf32>
      %74 = tpu.matmul %71, %72, %cst_48 {dimension_numbers = #tpu.dot_dimension_numbers<[1], [1], [0], [0], [0, 0, 1, 0], [], []>} : vector<8x8xbf16>, vector<8x8xbf16>, vector<8x8xf32> -> vector<8x8xf32>
      %cst_49 = arith.constant dense<0xFF800000> : vector<8xf32>
      %75 = vector.multi_reduction <maximumf>, %74, %cst_49 [1] : vector<8x8xf32> to vector<8xf32>
      %76 = vector.shape_cast %75 : vector<8xf32> to vector<8x1xf32>
      %77 = vector.broadcast %76 : vector<8x1xf32> to vector<8x8xf32>
      %78 = arith.subf %74, %77 : vector<8x8xf32>
      %79 = math.exp %78 : vector<8x8xf32>
      %cst_50 = arith.constant dense<0.000000e+00> : vector<8xf32>
      %80 = vector.multi_reduction <add>, %79, %cst_50 [1] : vector<8x8xf32> to vector<8xf32>
      %81 = vector.shape_cast %80 : vector<8xf32> to vector<8x1xf32>
      %82 = arith.truncf %79 : vector<8x8xf32> to vector<8x8xbf16>
      %cst_51 = arith.constant dense<0.000000e+00> : vector<8x8xf32>
      %83 = tpu.matmul %82, %73, %cst_51 {dimension_numbers = #tpu.dot_dimension_numbers<[1], [0], [0], [1], [0, 0, 1, 1], [], []>} : vector<8x8xbf16>, vector<8x8xbf16>, vector<8x8xf32> -> vector<8x8xf32>
      %84 = tpu.reciprocal %81 {approx = true} : vector<8x1xf32> -> vector<8x1xf32>
      %85 = vector.broadcast %84 : vector<8x1xf32> to vector<8x8xf32>
      %86 = arith.mulf %83, %85 : vector<8x8xf32>
      %87 = arith.truncf %86 : vector<8x8xf32> to vector<8x8xbf16>
      %c0_52 = arith.constant 0 : index
      %c0_53 = arith.constant 0 : index
      %88 = vector.load %arg17[%c0_52, %c0_53] : memref<8x32xbf16, #tpu.memory_space<vmem>>, vector<8x8xbf16>
      tpu.vector_store %arg17[%c0_52, %c0_53], %87 {strides = array<i32>} : memref<8x32xbf16, #tpu.memory_space<vmem>>, vector<8x8xbf16>,
      %c0_54 = arith.constant 0 : index
      %c8 = arith.constant 8 : index
      %89 = vector.load %arg16[%c0_54, %c8] : memref<8x96xbf16, #tpu.memory_space<vmem>>, vector<8x8xbf16>
      %c0_55 = arith.constant 0 : index
      %c40 = arith.constant 40 : index
      %90 = vector.load %arg16[%c0_55, %c40] : memref<8x96xbf16, #tpu.memory_space<vmem>>, vector<8x8xbf16>
      %c0_56 = arith.constant 0 : index
      %c72 = arith.constant 72 : index
      %91 = vector.load %arg16[%c0_56, %c72] : memref<8x96xbf16, #tpu.memory_space<vmem>>, vector<8x8xbf16>
      %cst_57 = arith.constant dense<0.000000e+00> : vector<8x8xf32>
      %92 = tpu.matmul %89, %90, %cst_57 {dimension_numbers = #tpu.dot_dimension_numbers<[1], [1], [0], [0], [0, 0, 1, 0], [], []>} : vector<8x8xbf16>, vector<8x8xbf16>, vector<8x8xf32> -> vector<8x8xf32>
      %cst_58 = arith.constant dense<0xFF800000> : vector<8xf32>
      %93 = vector.multi_reduction <maximumf>, %92, %cst_58 [1] : vector<8x8xf32> to vector<8xf32>
      %94 = vector.shape_cast %93 : vector<8xf32> to vector<8x1xf32>
      %95 = vector.broadcast %94 : vector<8x1xf32> to vector<8x8xf32>
      %96 = arith.subf %92, %95 : vector<8x8xf32>
      %97 = math.exp %96 : vector<8x8xf32>
      %cst_59 = arith.constant dense<0.000000e+00> : vector<8xf32>
      %98 = vector.multi_reduction <add>, %97, %cst_59 [1] : vector<8x8xf32> to vector<8xf32>
      %99 = vector.shape_cast %98 : vector<8xf32> to vector<8x1xf32>
      %100 = arith.truncf %97 : vector<8x8xf32> to vector<8x8xbf16>
      %cst_60 = arith.constant dense<0.000000e+00> : vector<8x8xf32>
      %101 = tpu.matmul %100, %91, %cst_60 {dimension_numbers = #tpu.dot_dimension_numbers<[1], [0], [0], [1], [0, 0, 1, 1], [], []>} : vector<8x8xbf16>, vector<8x8xbf16>, vector<8x8xf32> -> vector<8x8xf32>
      %102 = tpu.reciprocal %99 {approx = true} : vector<8x1xf32> -> vector<8x1xf32>
      %103 = vector.broadcast %102 : vector<8x1xf32> to vector<8x8xf32>
      %104 = arith.mulf %101, %103 : vector<8x8xf32>
      %105 = arith.truncf %104 : vector<8x8xf32> to vector<8x8xbf16>
      %c0_61 = arith.constant 0 : index
      %c8_62 = arith.constant 8 : index
      %106 = vector.load %arg17[%c0_61, %c8_62] : memref<8x32xbf16, #tpu.memory_space<vmem>>, vector<8x8xbf16>
      tpu.vector_store %arg17[%c0_61, %c8_62], %105 {strides = array<i32>} : memref<8x32xbf16, #tpu.memory_space<vmem>>, vector<8x8xbf16>,
      %c0_63 = arith.constant 0 : index
      %c16 = arith.constant 16 : index
      %107 = vector.load %arg16[%c0_63, %c16] : memref<8x96xbf16, #tpu.memory_space<vmem>>, vector<8x8xbf16>
      %c0_64 = arith.constant 0 : index
      %c48 = arith.constant 48 : index
      %108 = vector.load %arg16[%c0_64, %c48] : memref<8x96xbf16, #tpu.memory_space<vmem>>, vector<8x8xbf16>
      %c0_65 = arith.constant 0 : index
      %c80 = arith.constant 80 : index
      %109 = vector.load %arg16[%c0_65, %c80] : memref<8x96xbf16, #tpu.memory_space<vmem>>, vector<8x8xbf16>
      %cst_66 = arith.constant dense<0.000000e+00> : vector<8x8xf32>
      %110 = tpu.matmul %107, %108, %cst_66 {dimension_numbers = #tpu.dot_dimension_numbers<[1], [1], [0], [0], [0, 0, 1, 0], [], []>} : vector<8x8xbf16>, vector<8x8xbf16>, vector<8x8xf32> -> vector<8x8xf32>
      %cst_67 = arith.constant dense<0xFF800000> : vector<8xf32>
      %111 = vector.multi_reduction <maximumf>, %110, %cst_67 [1] : vector<8x8xf32> to vector<8xf32>
      %112 = vector.shape_cast %111 : vector<8xf32> to vector<8x1xf32>
      %113 = vector.broadcast %112 : vector<8x1xf32> to vector<8x8xf32>
      %114 = arith.subf %110, %113 : vector<8x8xf32>
      %115 = math.exp %114 : vector<8x8xf32>
      %cst_68 = arith.constant dense<0.000000e+00> : vector<8xf32>
      %116 = vector.multi_reduction <add>, %115, %cst_68 [1] : vector<8x8xf32> to vector<8xf32>
      %117 = vector.shape_cast %116 : vector<8xf32> to vector<8x1xf32>
      %118 = arith.truncf %115 : vector<8x8xf32> to vector<8x8xbf16>
      %cst_69 = arith.constant dense<0.000000e+00> : vector<8x8xf32>
      %119 = tpu.matmul %118, %109, %cst_69 {dimension_numbers = #tpu.dot_dimension_numbers<[1], [0], [0], [1], [0, 0, 1, 1], [], []>} : vector<8x8xbf16>, vector<8x8xbf16>, vector<8x8xf32> -> vector<8x8xf32>
      %120 = tpu.reciprocal %117 {approx = true} : vector<8x1xf32> -> vector<8x1xf32>
      %121 = vector.broadcast %120 : vector<8x1xf32> to vector<8x8xf32>
      %122 = arith.mulf %119, %121 : vector<8x8xf32>
      %123 = arith.truncf %122 : vector<8x8xf32> to vector<8x8xbf16>
      %c0_70 = arith.constant 0 : index
      %c16_71 = arith.constant 16 : index
      %124 = vector.load %arg17[%c0_70, %c16_71] : memref<8x32xbf16, #tpu.memory_space<vmem>>, vector<8x8xbf16>
      tpu.vector_store %arg17[%c0_70, %c16_71], %123 {strides = array<i32>} : memref<8x32xbf16, #tpu.memory_space<vmem>>, vector<8x8xbf16>,
      %c0_72 = arith.constant 0 : index
      %c24 = arith.constant 24 : index
      %125 = vector.load %arg16[%c0_72, %c24] : memref<8x96xbf16, #tpu.memory_space<vmem>>, vector<8x8xbf16>
      %c0_73 = arith.constant 0 : index
      %c56 = arith.constant 56 : index
      %126 = vector.load %arg16[%c0_73, %c56] : memref<8x96xbf16, #tpu.memory_space<vmem>>, vector<8x8xbf16>
      %c0_74 = arith.constant 0 : index
      %c88 = arith.constant 88 : index
      %127 = vector.load %arg16[%c0_74, %c88] : memref<8x96xbf16, #tpu.memory_space<vmem>>, vector<8x8xbf16>
      %cst_75 = arith.constant dense<0.000000e+00> : vector<8x8xf32>
      %128 = tpu.matmul %125, %126, %cst_75 {dimension_numbers = #tpu.dot_dimension_numbers<[1], [1], [0], [0], [0, 0, 1, 0], [], []>} : vector<8x8xbf16>, vector<8x8xbf16>, vector<8x8xf32> -> vector<8x8xf32>
      %cst_76 = arith.constant dense<0xFF800000> : vector<8xf32>
      %129 = vector.multi_reduction <maximumf>, %128, %cst_76 [1] : vector<8x8xf32> to vector<8xf32>
      %130 = vector.shape_cast %129 : vector<8xf32> to vector<8x1xf32>
      %131 = vector.broadcast %130 : vector<8x1xf32> to vector<8x8xf32>
      %132 = arith.subf %128, %131 : vector<8x8xf32>
      %133 = math.exp %132 : vector<8x8xf32>
      %cst_77 = arith.constant dense<0.000000e+00> : vector<8xf32>
      %134 = vector.multi_reduction <add>, %133, %cst_77 [1] : vector<8x8xf32> to vector<8xf32>
      %135 = vector.shape_cast %134 : vector<8xf32> to vector<8x1xf32>
      %136 = arith.truncf %133 : vector<8x8xf32> to vector<8x8xbf16>
      %cst_78 = arith.constant dense<0.000000e+00> : vector<8x8xf32>
      %137 = tpu.matmul %136, %127, %cst_78 {dimension_numbers = #tpu.dot_dimension_numbers<[1], [0], [0], [1], [0, 0, 1, 1], [], []>} : vector<8x8xbf16>, vector<8x8xbf16>, vector<8x8xf32> -> vector<8x8xf32>
      %138 = tpu.reciprocal %135 {approx = true} : vector<8x1xf32> -> vector<8x1xf32>
      %139 = vector.broadcast %138 : vector<8x1xf32> to vector<8x8xf32>
      %140 = arith.mulf %137, %139 : vector<8x8xf32>
      %141 = arith.truncf %140 : vector<8x8xf32> to vector<8x8xbf16>
      %c0_79 = arith.constant 0 : index
      %c24_80 = arith.constant 24 : index
      %142 = vector.load %arg17[%c0_79, %c24_80] : memref<8x32xbf16, #tpu.memory_space<vmem>>, vector<8x8xbf16>
      tpu.vector_store %arg17[%c0_79, %c24_80], %141 {strides = array<i32>} : memref<8x32xbf16, #tpu.memory_space<vmem>>, vector<8x8xbf16>,
      %c0_81 = arith.constant 0 : index
      %c0_82 = arith.constant 0 : index
      %143 = vector.load %arg17[%c0_81, %c0_82] : memref<8x32xbf16, #tpu.memory_space<vmem>>, vector<8x32xbf16>
      %c0_83 = arith.constant 0 : index
      %c0_84 = arith.constant 0 : index
      %144 = vector.load %arg9[%c0_83, %c0_84] : memref<32x32xbf16, #tpu.memory_space<vmem>>, vector<32x32xbf16>
      %cst_85 = arith.constant dense<0.000000e+00> : vector<8x32xf32>
      %145 = tpu.matmul %143, %144, %cst_85 {dimension_numbers = #tpu.dot_dimension_numbers<[1], [0], [0], [1], [0, 0, 1, 1], [], []>} : vector<8x32xbf16>, vector<32x32xbf16>, vector<8x32xf32> -> vector<8x32xf32>
      %c0_86 = arith.constant 0 : index
      %c0_87 = arith.constant 0 : index
      %146 = vector.load %arg10[%c0_86, %c0_87] : memref<1x32xf32, #tpu.memory_space<vmem>>, vector<1x32xf32>
      %147 = vector.broadcast %146 : vector<1x32xf32> to vector<8x32xf32>
      %148 = arith.addf %145, %147 : vector<8x32xf32>
      %c0_88 = arith.constant 0 : index
      %c0_89 = arith.constant 0 : index
      %149 = vector.load %arg18[%c0_88, %c0_89] : memref<8x32xf32, #tpu.memory_space<vmem>>, vector<8x32xf32>
      %150 = arith.addf %149, %148 : vector<8x32xf32>
      %c0_90 = arith.constant 0 : index
      %c0_91 = arith.constant 0 : index
      %151 = vector.load %arg5[%c0_90, %c0_91] : memref<1x32xf32, #tpu.memory_space<vmem>>, vector<1x32xf32>
      %c0_92 = arith.constant 0 : index
      %c0_93 = arith.constant 0 : index
      %152 = vector.load %arg6[%c0_92, %c0_93] : memref<1x32xf32, #tpu.memory_space<vmem>>, vector<1x32xf32>
      %cst_94 = arith.constant dense<0.000000e+00> : vector<8xf32>
      %153 = vector.multi_reduction <add>, %150, %cst_94 [1] : vector<8x32xf32> to vector<8xf32>
      %154 = vector.shape_cast %153 : vector<8xf32> to vector<8x1xf32>
      %cst_95 = arith.constant 3.200000e+01 : f32
      %155 = vector.broadcast %cst_95 : f32 to vector<8x1xf32>
      %156 = arith.divf %154, %155 : vector<8x1xf32>
      %157 = vector.broadcast %156 : vector<8x1xf32> to vector<8x32xf32>
      %158 = arith.subf %150, %157 : vector<8x32xf32>
      %159 = arith.mulf %158, %158 : vector<8x32xf32>
      %cst_96 = arith.constant dense<0.000000e+00> : vector<8xf32>
      %160 = vector.multi_reduction <add>, %159, %cst_96 [1] : vector<8x32xf32> to vector<8xf32>
      %161 = vector.shape_cast %160 : vector<8xf32> to vector<8x1xf32>
      %cst_97 = arith.constant 3.200000e+01 : f32
      %162 = vector.broadcast %cst_97 : f32 to vector<8x1xf32>
      %163 = arith.divf %161, %162 : vector<8x1xf32>
      %164 = vector.broadcast %156 : vector<8x1xf32> to vector<8x32xf32>
      %165 = arith.subf %150, %164 : vector<8x32xf32>
      %cst_98 = arith.constant 9.99999997E-7 : f32
      %166 = vector.broadcast %cst_98 : f32 to vector<8x1xf32>
      %167 = arith.addf %163, %166 : vector<8x1xf32>
      %168 = math.rsqrt %167 : vector<8x1xf32>
      %169 = vector.broadcast %168 : vector<8x1xf32> to vector<8x32xf32>
      %170 = arith.mulf %165, %169 : vector<8x32xf32>
      %171 = vector.broadcast %151 : vector<1x32xf32> to vector<8x32xf32>
      %172 = arith.mulf %170, %171 : vector<8x32xf32>
      %173 = vector.broadcast %152 : vector<1x32xf32> to vector<8x32xf32>
      %174 = arith.addf %172, %173 : vector<8x32xf32>
      %c0_99 = arith.constant 0 : index
      %c0_100 = arith.constant 0 : index
      %175 = vector.load %arg18[%c0_99, %c0_100] : memref<8x32xf32, #tpu.memory_space<vmem>>, vector<8x32xf32>
      tpu.vector_store %arg18[%c0_99, %c0_100], %174 {strides = array<i32>} : memref<8x32xf32, #tpu.memory_space<vmem>>, vector<8x32xf32>,
      %cst_101 = arith.constant 0.000000e+00 : f32
      %176 = vector.broadcast %cst_101 : f32 to vector<8x32xf32>
      %c0_102 = arith.constant 0 : index
      %c0_103 = arith.constant 0 : index
      %c0_104 = arith.constant 0 : index
      %177 = vector.load %arg15[%c0_102, %c0_103, %c0_104] : memref<1x8x32xf32, #tpu.memory_space<vmem>>, vector<1x8x32xf32>
      %178 = vector.shape_cast %177 : vector<1x8x32xf32> to vector<8x32xf32>
      %179 = vector.shape_cast %176 : vector<8x32xf32> to vector<1x8x32xf32>
      tpu.vector_store %arg15[%c0_102, %c0_103, %c0_104], %179 {strides = array<i32>} : memref<1x8x32xf32, #tpu.memory_space<vmem>>, vector<1x8x32xf32>,
    } else {
    }
    %c0 = arith.constant 0 : index
    %c0_1 = arith.constant 0 : index
    %3 = vector.load %arg18[%c0, %c0_1] : memref<8x32xf32, #tpu.memory_space<vmem>>, vector<8x32xf32>
    %4 = arith.truncf %3 : vector<8x32xf32> to vector<8x32xbf16>
    %c0_2 = arith.constant 0 : index
    %c0_3 = arith.constant 0 : index
    %5 = vector.load %arg11[%c0_2, %c0_3] : memref<32x64xbf16, #tpu.memory_space<vmem>>, vector<32x64xbf16>
    %cst = arith.constant dense<0.000000e+00> : vector<8x64xf32>
    %6 = tpu.matmul %4, %5, %cst {dimension_numbers = #tpu.dot_dimension_numbers<[1], [0], [0], [1], [0, 0, 1, 1], [], []>} : vector<8x32xbf16>, vector<32x64xbf16>, vector<8x64xf32> -> vector<8x64xf32>
    %c0_4 = arith.constant 0 : index
    %c0_5 = arith.constant 0 : index
    %7 = vector.load %arg12[%c0_4, %c0_5] : memref<1x64xf32, #tpu.memory_space<vmem>>, vector<1x64xf32>
    %8 = vector.broadcast %7 : vector<1x64xf32> to vector<8x64xf32>
    %9 = arith.addf %6, %8 : vector<8x64xf32>
    %cst_6 = arith.constant 5.000000e-01 : f32
    %10 = vector.broadcast %cst_6 : f32 to vector<8x64xf32>
    %11 = arith.mulf %10, %9 : vector<8x64xf32>
    %cst_7 = arith.constant 0.707106769 : f32
    %12 = vector.broadcast %cst_7 : f32 to vector<8x64xf32>
    %13 = arith.mulf %9, %12 : vector<8x64xf32>
    %14 = math.erf %13 : vector<8x64xf32>
    %cst_8 = arith.constant 1.000000e+00 : f32
    %15 = vector.broadcast %cst_8 : f32 to vector<8x64xf32>
    %16 = arith.addf %15, %14 : vector<8x64xf32>
    %17 = arith.mulf %11, %16 : vector<8x64xf32>
    %18 = arith.truncf %17 : vector<8x64xf32> to vector<8x64xbf16>
    %c0_9 = arith.constant 0 : index
    %c0_10 = arith.constant 0 : index
    %19 = vector.load %arg13[%c0_9, %c0_10] : memref<64x32xbf16, #tpu.memory_space<vmem>>, vector<64x32xbf16>
    %cst_11 = arith.constant dense<0.000000e+00> : vector<8x32xf32>
    %20 = tpu.matmul %18, %19, %cst_11 {dimension_numbers = #tpu.dot_dimension_numbers<[1], [0], [0], [1], [0, 0, 1, 1], [], []>} : vector<8x64xbf16>, vector<64x32xbf16>, vector<8x32xf32> -> vector<8x32xf32>
    %c0_12 = arith.constant 0 : index
    %c0_13 = arith.constant 0 : index
    %c0_14 = arith.constant 0 : index
    %21 = vector.load %arg15[%c0_12, %c0_13, %c0_14] : memref<1x8x32xf32, #tpu.memory_space<vmem>>, vector<1x8x32xf32>
    %22 = vector.shape_cast %21 : vector<1x8x32xf32> to vector<8x32xf32>
    %23 = arith.addf %22, %20 : vector<8x32xf32>
    %c0_15 = arith.constant 0 : index
    %c0_16 = arith.constant 0 : index
    %c0_17 = arith.constant 0 : index
    %24 = vector.load %arg15[%c0_15, %c0_16, %c0_17] : memref<1x8x32xf32, #tpu.memory_space<vmem>>, vector<1x8x32xf32>
    %25 = vector.shape_cast %24 : vector<1x8x32xf32> to vector<8x32xf32>
    %26 = vector.shape_cast %23 : vector<8x32xf32> to vector<1x8x32xf32>
    tpu.vector_store %arg15[%c0_15, %c0_16, %c0_17], %26 {strides = array<i32>} : memref<1x8x32xf32, #tpu.memory_space<vmem>>, vector<1x8x32xf32>,
    %c0_i32_18 = arith.constant 0 : i32
    %27 = arith.cmpi eq, %arg1, %c0_i32_18 : i32
    %28 = arith.extui %27 : i1 to i32
    %c0_i32_19 = arith.constant 0 : i32
    %29 = arith.cmpi ne, %28, %c0_i32_19 : i32
    scf.if %29 {
      %c0_20 = arith.constant 0 : index
      %c0_21 = arith.constant 0 : index
      %c0_22 = arith.constant 0 : index
      %30 = vector.load %arg15[%c0_20, %c0_21, %c0_22] : memref<1x8x32xf32, #tpu.memory_space<vmem>>, vector<1x8x32xf32>
      %31 = vector.shape_cast %30 : vector<1x8x32xf32> to vector<8x32xf32>
      %c0_23 = arith.constant 0 : index
      %c0_24 = arith.constant 0 : index
      %32 = vector.load %arg18[%c0_23, %c0_24] : memref<8x32xf32, #tpu.memory_space<vmem>>, vector<8x32xf32>
      %33 = arith.addf %31, %32 : vector<8x32xf32>
      %c0_25 = arith.constant 0 : index
      %c0_26 = arith.constant 0 : index
      %34 = vector.load %arg14[%c0_25, %c0_26] : memref<1x32xf32, #tpu.memory_space<vmem>>, vector<1x32xf32>
      %35 = vector.broadcast %34 : vector<1x32xf32> to vector<8x32xf32>
      %36 = arith.addf %33, %35 : vector<8x32xf32>
      %c0_27 = arith.constant 0 : index
      %c0_28 = arith.constant 0 : index
      %c0_29 = arith.constant 0 : index
      %37 = vector.load %arg15[%c0_27, %c0_28, %c0_29] : memref<1x8x32xf32, #tpu.memory_space<vmem>>, vector<1x8x32xf32>
      %38 = vector.shape_cast %37 : vector<1x8x32xf32> to vector<8x32xf32>
      %39 = vector.shape_cast %36 : vector<8x32xf32> to vector<1x8x32xf32>
      tpu.vector_store %arg15[%c0_27, %c0_28, %c0_29], %39 {strides = array<i32>} : memref<1x8x32xf32, #tpu.memory_space<vmem>>, vector<1x8x32xf32>,
    } else {
    }
    return
  }
  func.func @transform_0(%arg0: i32, %arg1: i32) -> (i32, i32, i32) {
    %c0_i32 = arith.constant 0 : i32
    %c0_i32_0 = arith.constant 0 : i32
    %c0_i32_1 = arith.constant 0 : i32
    return %arg0, %c0_i32, %c0_i32_0 : i32, i32, i32
  }
  func.func @transform_1(%arg0: i32, %arg1: i32) -> (i32, i32) {
    %c0_i32 = arith.constant 0 : i32
    %c0_i32_0 = arith.constant 0 : i32
    %c0_i32_1 = arith.constant 0 : i32
    return %c0_i32, %c0_i32_0 : i32, i32
  }
  func.func @transform_2(%arg0: i32, %arg1: i32) -> (i32, i32) {
    %c0_i32 = arith.constant 0 : i32
    %c0_i32_0 = arith.constant 0 : i32
    %c0_i32_1 = arith.constant 0 : i32
    return %c0_i32, %c0_i32_0 : i32, i32
  }
  func.func @transform_3(%arg0: i32, %arg1: i32) -> (i32, i32) {
    %c0_i32 = arith.constant 0 : i32
    %c0_i32_0 = arith.constant 0 : i32
    %c0_i32_1 = arith.constant 0 : i32
    return %c0_i32, %c0_i32_0 : i32, i32
  }
  func.func @transform_4(%arg0: i32, %arg1: i32) -> (i32, i32) {
    %c0_i32 = arith.constant 0 : i32
    %c0_i32_0 = arith.constant 0 : i32
    %c0_i32_1 = arith.constant 0 : i32
    return %c0_i32, %c0_i32_0 : i32, i32
  }
  func.func @transform_5(%arg0: i32, %arg1: i32) -> (i32, i32) {
    %c0_i32 = arith.constant 0 : i32
    %c0_i32_0 = arith.constant 0 : i32
    %c0_i32_1 = arith.constant 0 : i32
    return %c0_i32, %c0_i32_0 : i32, i32
  }
  func.func @transform_6(%arg0: i32, %arg1: i32) -> (i32, i32) {
    %c0_i32 = arith.constant 0 : i32
    %c0_i32_0 = arith.constant 0 : i32
    %c0_i32_1 = arith.constant 0 : i32
    return %c0_i32, %c0_i32_0 : i32, i32
  }
  func.func @transform_7(%arg0: i32, %arg1: i32) -> (i32, i32) {
    %c0_i32 = arith.constant 0 : i32
    %c0_i32_0 = arith.constant 0 : i32
    %c0_i32_1 = arith.constant 0 : i32
    return %c0_i32, %c0_i32_0 : i32, i32
  }
  func.func @transform_8(%arg0: i32, %arg1: i32) -> (i32, i32) {
    %c0_i32 = arith.constant 0 : i32
    %c0_i32_0 = arith.constant 0 : i32
    %c0_i32_1 = arith.constant 0 : i32
    return %c0_i32, %c0_i32_0 : i32, i32
  }
  func.func @transform_9(%arg0: i32, %arg1: i32) -> (i32, i32) {
    %c0_i32 = arith.constant 0 : i32
    %c0_i32_0 = arith.constant 0 : i32
    return %c0_i32, %arg1 : i32, i32
  }
  func.func @transform_10(%arg0: i32, %arg1: i32) -> (i32, i32) {
    %c0_i32 = arith.constant 0 : i32
    %c0_i32_0 = arith.constant 0 : i32
    return %c0_i32, %arg1 : i32, i32
  }
  func.func @transform_11(%arg0: i32, %arg1: i32) -> (i32, i32) {
    %c0_i32 = arith.constant 0 : i32
    %c0_i32_0 = arith.constant 0 : i32
    return %arg1, %c0_i32 : i32, i32
  }
  func.func @transform_12(%arg0: i32, %arg1: i32) -> (i32, i32) {
    %c0_i32 = arith.constant 0 : i32
    %c0_i32_0 = arith.constant 0 : i32
    %c0_i32_1 = arith.constant 0 : i32
    return %c0_i32, %c0_i32_0 : i32, i32
  }
  func.func @transform_13(%arg0: i32, %arg1: i32) -> (i32, i32, i32) {
    %c0_i32 = arith.constant 0 : i32
    %c0_i32_0 = arith.constant 0 : i32
    %c0_i32_1 = arith.constant 0 : i32
    return %arg0, %c0_i32, %c0_i32_0 : i32, i32, i32
  }
}

module attributes {stable_mosaic.version = 11 : i64} {
  func.func @gpt2_block_kernel(%arg0: i32, %arg1: i32, %arg2: memref<1x8x32xf32, #tpu.memory_space<vmem>>, %arg3: memref<1x32xf32, #tpu.memory_space<vmem>>, %arg4: memref<1x32xf32, #tpu.memory_space<vmem>>, %arg5: memref<1x32xf32, #tpu.memory_space<vmem>>, %arg6: memref<1x32xf32, #tpu.memory_space<vmem>>, %arg7: memref<32x96xbf16, #tpu.memory_space<vmem>>, %arg8: memref<1x96xf32, #tpu.memory_space<vmem>>, %arg9: memref<32x32xbf16, #tpu.memory_space<vmem>>, %arg10: memref<1x32xf32, #tpu.memory_space<vmem>>, %arg11: memref<32x64xbf16, #tpu.memory_space<vmem>>, %arg12: memref<1x64xf32, #tpu.memory_space<vmem>>, %arg13: memref<64x32xbf16, #tpu.memory_space<vmem>>, %arg14: memref<1x32xf32, #tpu.memory_space<vmem>>, %arg15: memref<1x8x32xf32, #tpu.memory_space<vmem>>, %arg16: memref<8x96xbf16, #tpu.memory_space<vmem>>, %arg17: memref<8x32xbf16, #tpu.memory_space<vmem>>, %arg18: memref<8x32xf32, #tpu.memory_space<vmem>>) attributes {dimension_semantics = [#tpu.dimension_semantics<parallel>, #tpu.dimension_semantics<arbitrary>], iteration_bounds = array<i64: 2, 1>, scalar_prefetch = 0 : i64, scratch_operands = 3 : i64, tpu.core_type = #tpu.core_type<tc>, window_params = [{transform_indices = @transform_0, window_bounds = array<i64: 1, 8, 32>}, {pipeline_mode = #tpu.pipeline_mode<synchronous>, transform_indices = @transform_1, window_bounds = array<i64: 1, 32>}, {pipeline_mode = #tpu.pipeline_mode<synchronous>, transform_indices = @transform_2, window_bounds = array<i64: 1, 32>}, {pipeline_mode = #tpu.pipeline_mode<synchronous>, transform_indices = @transform_3, window_bounds = array<i64: 1, 32>}, {pipeline_mode = #tpu.pipeline_mode<synchronous>, transform_indices = @transform_4, window_bounds = array<i64: 1, 32>}, {pipeline_mode = #tpu.pipeline_mode<synchronous>, transform_indices = @transform_5, window_bounds = array<i64: 32, 96>}, {pipeline_mode = #tpu.pipeline_mode<synchronous>, transform_indices = @transform_6, window_bounds = array<i64: 1, 96>}, {pipeline_mode = #tpu.pipeline_mode<synchronous>, transform_indices = @transform_7, window_bounds = array<i64: 32, 32>}, {pipeline_mode = #tpu.pipeline_mode<synchronous>, transform_indices = @transform_8, window_bounds = array<i64: 1, 32>}, {transform_indices = @transform_9, window_bounds = array<i64: 32, 64>}, {transform_indices = @transform_10, window_bounds = array<i64: 1, 64>}, {transform_indices = @transform_11, window_bounds = array<i64: 64, 32>}, {pipeline_mode = #tpu.pipeline_mode<synchronous>, transform_indices = @transform_12, window_bounds = array<i64: 1, 32>}, {transform_indices = @transform_13, window_bounds = array<i64: 1, 8, 32>}]} {
    %c0_i32 = arith.constant 0 : i32
    %0 = arith.cmpi eq, %arg1, %c0_i32 : i32
    %1 = arith.extui %0 : i1 to i32
    %c0_i32_0 = arith.constant 0 : i32
    %2 = arith.cmpi ne, %1, %c0_i32_0 : i32
    scf.if %2 {
      %c0_20 = arith.constant 0 : index
      %c0_21 = arith.constant 0 : index
      %c0_22 = arith.constant 0 : index
      %30 = vector.load %arg2[%c0_20, %c0_21, %c0_22] : memref<1x8x32xf32, #tpu.memory_space<vmem>>, vector<1x8x32xf32>
      %31 = vector.shape_cast %30 : vector<1x8x32xf32> to vector<8x32xf32>
      %c0_23 = arith.constant 0 : index
      %c0_24 = arith.constant 0 : index
      %32 = vector.load %arg3[%c0_23, %c0_24] : memref<1x32xf32, #tpu.memory_space<vmem>>, vector<1x32xf32>
      %c0_25 = arith.constant 0 : index
      %c0_26 = arith.constant 0 : index
      %33 = vector.load %arg4[%c0_25, %c0_26] : memref<1x32xf32, #tpu.memory_space<vmem>>, vector<1x32xf32>
      %cst_27 = arith.constant dense<0.000000e+00> : vector<8xf32>
      %34 = vector.multi_reduction <add>, %31, %cst_27 [1] : vector<8x32xf32> to vector<8xf32>
      %35 = vector.shape_cast %34 : vector<8xf32> to vector<8x1xf32>
      %cst_28 = arith.constant 3.200000e+01 : f32
      %36 = vector.broadcast %cst_28 : f32 to vector<8x1xf32>
      %37 = arith.divf %35, %36 : vector<8x1xf32>
      %38 = vector.broadcast %37 : vector<8x1xf32> to vector<8x32xf32>
      %39 = arith.subf %31, %38 : vector<8x32xf32>
      %40 = arith.mulf %39, %39 : vector<8x32xf32>
      %cst_29 = arith.constant dense<0.000000e+00> : vector<8xf32>
      %41 = vector.multi_reduction <add>, %40, %cst_29 [1] : vector<8x32xf32> to vector<8xf32>
      %42 = vector.shape_cast %41 : vector<8xf32> to vector<8x1xf32>
      %cst_30 = arith.constant 3.200000e+01 : f32
      %43 = vector.broadcast %cst_30 : f32 to vector<8x1xf32>
      %44 = arith.divf %42, %43 : vector<8x1xf32>
      %45 = vector.broadcast %37 : vector<8x1xf32> to vector<8x32xf32>
      %46 = arith.subf %31, %45 : vector<8x32xf32>
      %cst_31 = arith.constant 9.99999997E-7 : f32
      %47 = vector.broadcast %cst_31 : f32 to vector<8x1xf32>
      %48 = arith.addf %44, %47 : vector<8x1xf32>
      %49 = math.rsqrt %48 : vector<8x1xf32>
      %50 = vector.broadcast %49 : vector<8x1xf32> to vector<8x32xf32>
      %51 = arith.mulf %46, %50 : vector<8x32xf32>
      %52 = vector.broadcast %32 : vector<1x32xf32> to vector<8x32xf32>
      %53 = arith.mulf %51, %52 : vector<8x32xf32>
      %54 = vector.broadcast %33 : vector<1x32xf32> to vector<8x32xf32>
      %55 = arith.addf %53, %54 : vector<8x32xf32>
      %c0_32 = arith.constant 0 : index
      %c0_33 = arith.constant 0 : index
      %56 = vector.load %arg18[%c0_32, %c0_33] : memref<8x32xf32, #tpu.memory_space<vmem>>, vector<8x32xf32>
      tpu.vector_store %arg18[%c0_32, %c0_33], %55 {strides = array<i32>} : memref<8x32xf32, #tpu.memory_space<vmem>>, vector<8x32xf32>,
      %57 = arith.truncf %55 : vector<8x32xf32> to vector<8x32xbf16>
      %c0_34 = arith.constant 0 : index
      %c0_35 = arith.constant 0 : index
      %58 = vector.load %arg7[%c0_34, %c0_35] : memref<32x96xbf16, #tpu.memory_space<vmem>>, vector<32x96xbf16>
      %cst_36 = arith.constant dense<0.000000e+00> : vector<8x96xf32>
      %59 = tpu.matmul %57, %58, %cst_36 {dimension_numbers = #tpu.dot_dimension_numbers<[1], [0], [0], [1], [0, 0, 1, 1], [], []>} : vector<8x32xbf16>, vector<32x96xbf16>, vector<8x96xf32> -> vector<8x96xf32>
      %c0_37 = arith.constant 0 : index
      %c0_38 = arith.constant 0 : index
      %60 = vector.load %arg8[%c0_37, %c0_38] : memref<1x96xf32, #tpu.memory_space<vmem>>, vector<1x96xf32>
      %61 = vector.broadcast %60 : vector<1x96xf32> to vector<8x96xf32>
      %62 = arith.addf %59, %61 : vector<8x96xf32>
      %63 = vector.extract_strided_slice %62 {offsets = [0, 0], sizes = [8, 32], strides = [1, 1]} : vector<8x96xf32> to vector<8x32xf32>
      %cst_39 = arith.constant 0.353553385 : f32
      %64 = vector.broadcast %cst_39 : f32 to vector<8x32xf32>
      %65 = arith.mulf %63, %64 : vector<8x32xf32>
      %66 = arith.truncf %65 : vector<8x32xf32> to vector<8x32xbf16>
      %c0_40 = arith.constant 0 : index
      %c0_41 = arith.constant 0 : index
      %67 = vector.load %arg16[%c0_40, %c0_41] : memref<8x96xbf16, #tpu.memory_space<vmem>>, vector<8x32xbf16>
      tpu.vector_store %arg16[%c0_40, %c0_41], %66 {strides = array<i32>} : memref<8x96xbf16, #tpu.memory_space<vmem>>, vector<8x32xbf16>,
      %68 = vector.extract_strided_slice %62 {offsets = [0, 32], sizes = [8, 64], strides = [1, 1]} : vector<8x96xf32> to vector<8x64xf32>
      %69 = arith.truncf %68 : vector<8x64xf32> to vector<8x64xbf16>
      %c0_42 = arith.constant 0 : index
      %c32 = arith.constant 32 : index
      %70 = vector.load %arg16[%c0_42, %c32] : memref<8x96xbf16, #tpu.memory_space<vmem>>, vector<8x64xbf16>
      tpu.vector_store %arg16[%c0_42, %c32], %69 {strides = array<i32>} : memref<8x96xbf16, #tpu.memory_space<vmem>>, vector<8x64xbf16>,
      %c0_43 = arith.constant 0 : index
      %c0_44 = arith.constant 0 : index
      %71 = vector.load %arg16[%c0_43, %c0_44] : memref<8x96xbf16, #tpu.memory_space<vmem>>, vector<8x8xbf16>
      %c0_45 = arith.constant 0 : index
      %c32_46 = arith.constant 32 : index
      %72 = vector.load %arg16[%c0_45, %c32_46] : memref<8x96xbf16, #tpu.memory_space<vmem>>, vector<8x8xbf16>
      %c0_47 = arith.constant 0 : index
      %c64 = arith.constant 64 : index
      %73 = vector.load %arg16[%c0_47, %c64] : memref<8x96xbf16, #tpu.memory_space<vmem>>, vector<8x8xbf16>
      %cst_48 = arith.constant dense<0.000000e+00> : vector<8x8xf32>
      %74 = tpu.matmul %71, %72, %cst_48 {dimension_numbers = #tpu.dot_dimension_numbers<[1], [1], [0], [0], [0, 0, 1, 0], [], []>} : vector<8x8xbf16>, vector<8x8xbf16>, vector<8x8xf32> -> vector<8x8xf32>
      %cst_49 = arith.constant dense<0xFF800000> : vector<8xf32>
      %75 = vector.multi_reduction <maximumf>, %74, %cst_49 [1] : vector<8x8xf32> to vector<8xf32>
      %76 = vector.shape_cast %75 : vector<8xf32> to vector<8x1xf32>
      %77 = vector.broadcast %76 : vector<8x1xf32> to vector<8x8xf32>
      %78 = arith.subf %74, %77 : vector<8x8xf32>
      %79 = math.exp %78 : vector<8x8xf32>
      %cst_50 = arith.constant dense<0.000000e+00> : vector<8xf32>
      %80 = vector.multi_reduction <add>, %79, %cst_50 [1] : vector<8x8xf32> to vector<8xf32>
      %81 = vector.shape_cast %80 : vector<8xf32> to vector<8x1xf32>
      %82 = arith.truncf %79 : vector<8x8xf32> to vector<8x8xbf16>
      %cst_51 = arith.constant dense<0.000000e+00> : vector<8x8xf32>
      %83 = tpu.matmul %82, %73, %cst_51 {dimension_numbers = #tpu.dot_dimension_numbers<[1], [0], [0], [1], [0, 0, 1, 1], [], []>} : vector<8x8xbf16>, vector<8x8xbf16>, vector<8x8xf32> -> vector<8x8xf32>
      %84 = tpu.reciprocal %81 {approx = true} : vector<8x1xf32> -> vector<8x1xf32>
      %85 = vector.broadcast %84 : vector<8x1xf32> to vector<8x8xf32>
      %86 = arith.mulf %83, %85 : vector<8x8xf32>
      %87 = arith.truncf %86 : vector<8x8xf32> to vector<8x8xbf16>
      %c0_52 = arith.constant 0 : index
      %c0_53 = arith.constant 0 : index
      %88 = vector.load %arg17[%c0_52, %c0_53] : memref<8x32xbf16, #tpu.memory_space<vmem>>, vector<8x8xbf16>
      tpu.vector_store %arg17[%c0_52, %c0_53], %87 {strides = array<i32>} : memref<8x32xbf16, #tpu.memory_space<vmem>>, vector<8x8xbf16>,
      %c0_54 = arith.constant 0 : index
      %c8 = arith.constant 8 : index
      %89 = vector.load %arg16[%c0_54, %c8] : memref<8x96xbf16, #tpu.memory_space<vmem>>, vector<8x8xbf16>
      %c0_55 = arith.constant 0 : index
      %c40 = arith.constant 40 : index
      %90 = vector.load %arg16[%c0_55, %c40] : memref<8x96xbf16, #tpu.memory_space<vmem>>, vector<8x8xbf16>
      %c0_56 = arith.constant 0 : index
      %c72 = arith.constant 72 : index
      %91 = vector.load %arg16[%c0_56, %c72] : memref<8x96xbf16, #tpu.memory_space<vmem>>, vector<8x8xbf16>
      %cst_57 = arith.constant dense<0.000000e+00> : vector<8x8xf32>
      %92 = tpu.matmul %89, %90, %cst_57 {dimension_numbers = #tpu.dot_dimension_numbers<[1], [1], [0], [0], [0, 0, 1, 0], [], []>} : vector<8x8xbf16>, vector<8x8xbf16>, vector<8x8xf32> -> vector<8x8xf32>
      %cst_58 = arith.constant dense<0xFF800000> : vector<8xf32>
      %93 = vector.multi_reduction <maximumf>, %92, %cst_58 [1] : vector<8x8xf32> to vector<8xf32>
      %94 = vector.shape_cast %93 : vector<8xf32> to vector<8x1xf32>
      %95 = vector.broadcast %94 : vector<8x1xf32> to vector<8x8xf32>
      %96 = arith.subf %92, %95 : vector<8x8xf32>
      %97 = math.exp %96 : vector<8x8xf32>
      %cst_59 = arith.constant dense<0.000000e+00> : vector<8xf32>
      %98 = vector.multi_reduction <add>, %97, %cst_59 [1] : vector<8x8xf32> to vector<8xf32>
      %99 = vector.shape_cast %98 : vector<8xf32> to vector<8x1xf32>
      %100 = arith.truncf %97 : vector<8x8xf32> to vector<8x8xbf16>
      %cst_60 = arith.constant dense<0.000000e+00> : vector<8x8xf32>
      %101 = tpu.matmul %100, %91, %cst_60 {dimension_numbers = #tpu.dot_dimension_numbers<[1], [0], [0], [1], [0, 0, 1, 1], [], []>} : vector<8x8xbf16>, vector<8x8xbf16>, vector<8x8xf32> -> vector<8x8xf32>
      %102 = tpu.reciprocal %99 {approx = true} : vector<8x1xf32> -> vector<8x1xf32>
      %103 = vector.broadcast %102 : vector<8x1xf32> to vector<8x8xf32>
      %104 = arith.mulf %101, %103 : vector<8x8xf32>
      %105 = arith.truncf %104 : vector<8x8xf32> to vector<8x8xbf16>
      %c0_61 = arith.constant 0 : index
      %c8_62 = arith.constant 8 : index
      %106 = vector.load %arg17[%c0_61, %c8_62] : memref<8x32xbf16, #tpu.memory_space<vmem>>, vector<8x8xbf16>
      tpu.vector_store %arg17[%c0_61, %c8_62], %105 {strides = array<i32>} : memref<8x32xbf16, #tpu.memory_space<vmem>>, vector<8x8xbf16>,
      %c0_63 = arith.constant 0 : index
      %c16 = arith.constant 16 : index
      %107 = vector.load %arg16[%c0_63, %c16] : memref<8x96xbf16, #tpu.memory_space<vmem>>, vector<8x8xbf16>
      %c0_64 = arith.constant 0 : index
      %c48 = arith.constant 48 : index
      %108 = vector.load %arg16[%c0_64, %c48] : memref<8x96xbf16, #tpu.memory_space<vmem>>, vector<8x8xbf16>
      %c0_65 = arith.constant 0 : index
      %c80 = arith.constant 80 : index
      %109 = vector.load %arg16[%c0_65, %c80] : memref<8x96xbf16, #tpu.memory_space<vmem>>, vector<8x8xbf16>
      %cst_66 = arith.constant dense<0.000000e+00> : vector<8x8xf32>
      %110 = tpu.matmul %107, %108, %cst_66 {dimension_numbers = #tpu.dot_dimension_numbers<[1], [1], [0], [0], [0, 0, 1, 0], [], []>} : vector<8x8xbf16>, vector<8x8xbf16>, vector<8x8xf32> -> vector<8x8xf32>
      %cst_67 = arith.constant dense<0xFF800000> : vector<8xf32>
      %111 = vector.multi_reduction <maximumf>, %110, %cst_67 [1] : vector<8x8xf32> to vector<8xf32>
      %112 = vector.shape_cast %111 : vector<8xf32> to vector<8x1xf32>
      %113 = vector.broadcast %112 : vector<8x1xf32> to vector<8x8xf32>
      %114 = arith.subf %110, %113 : vector<8x8xf32>
      %115 = math.exp %114 : vector<8x8xf32>
      %cst_68 = arith.constant dense<0.000000e+00> : vector<8xf32>
      %116 = vector.multi_reduction <add>, %115, %cst_68 [1] : vector<8x8xf32> to vector<8xf32>
      %117 = vector.shape_cast %116 : vector<8xf32> to vector<8x1xf32>
      %118 = arith.truncf %115 : vector<8x8xf32> to vector<8x8xbf16>
      %cst_69 = arith.constant dense<0.000000e+00> : vector<8x8xf32>
      %119 = tpu.matmul %118, %109, %cst_69 {dimension_numbers = #tpu.dot_dimension_numbers<[1], [0], [0], [1], [0, 0, 1, 1], [], []>} : vector<8x8xbf16>, vector<8x8xbf16>, vector<8x8xf32> -> vector<8x8xf32>
      %120 = tpu.reciprocal %117 {approx = true} : vector<8x1xf32> -> vector<8x1xf32>
      %121 = vector.broadcast %120 : vector<8x1xf32> to vector<8x8xf32>
      %122 = arith.mulf %119, %121 : vector<8x8xf32>
      %123 = arith.truncf %122 : vector<8x8xf32> to vector<8x8xbf16>
      %c0_70 = arith.constant 0 : index
      %c16_71 = arith.constant 16 : index
      %124 = vector.load %arg17[%c0_70, %c16_71] : memref<8x32xbf16, #tpu.memory_space<vmem>>, vector<8x8xbf16>
      tpu.vector_store %arg17[%c0_70, %c16_71], %123 {strides = array<i32>} : memref<8x32xbf16, #tpu.memory_space<vmem>>, vector<8x8xbf16>,
      %c0_72 = arith.constant 0 : index
      %c24 = arith.constant 24 : index
      %125 = vector.load %arg16[%c0_72, %c24] : memref<8x96xbf16, #tpu.memory_space<vmem>>, vector<8x8xbf16>
      %c0_73 = arith.constant 0 : index
      %c56 = arith.constant 56 : index
      %126 = vector.load %arg16[%c0_73, %c56] : memref<8x96xbf16, #tpu.memory_space<vmem>>, vector<8x8xbf16>
      %c0_74 = arith.constant 0 : index
      %c88 = arith.constant 88 : index
      %127 = vector.load %arg16[%c0_74, %c88] : memref<8x96xbf16, #tpu.memory_space<vmem>>, vector<8x8xbf16>
      %cst_75 = arith.constant dense<0.000000e+00> : vector<8x8xf32>
      %128 = tpu.matmul %125, %126, %cst_75 {dimension_numbers = #tpu.dot_dimension_numbers<[1], [1], [0], [0], [0, 0, 1, 0], [], []>} : vector<8x8xbf16>, vector<8x8xbf16>, vector<8x8xf32> -> vector<8x8xf32>
      %cst_76 = arith.constant dense<0xFF800000> : vector<8xf32>
      %129 = vector.multi_reduction <maximumf>, %128, %cst_76 [1] : vector<8x8xf32> to vector<8xf32>
      %130 = vector.shape_cast %129 : vector<8xf32> to vector<8x1xf32>
      %131 = vector.broadcast %130 : vector<8x1xf32> to vector<8x8xf32>
      %132 = arith.subf %128, %131 : vector<8x8xf32>
      %133 = math.exp %132 : vector<8x8xf32>
      %cst_77 = arith.constant dense<0.000000e+00> : vector<8xf32>
      %134 = vector.multi_reduction <add>, %133, %cst_77 [1] : vector<8x8xf32> to vector<8xf32>
      %135 = vector.shape_cast %134 : vector<8xf32> to vector<8x1xf32>
      %136 = arith.truncf %133 : vector<8x8xf32> to vector<8x8xbf16>
      %cst_78 = arith.constant dense<0.000000e+00> : vector<8x8xf32>
      %137 = tpu.matmul %136, %127, %cst_78 {dimension_numbers = #tpu.dot_dimension_numbers<[1], [0], [0], [1], [0, 0, 1, 1], [], []>} : vector<8x8xbf16>, vector<8x8xbf16>, vector<8x8xf32> -> vector<8x8xf32>
      %138 = tpu.reciprocal %135 {approx = true} : vector<8x1xf32> -> vector<8x1xf32>
      %139 = vector.broadcast %138 : vector<8x1xf32> to vector<8x8xf32>
      %140 = arith.mulf %137, %139 : vector<8x8xf32>
      %141 = arith.truncf %140 : vector<8x8xf32> to vector<8x8xbf16>
      %c0_79 = arith.constant 0 : index
      %c24_80 = arith.constant 24 : index
      %142 = vector.load %arg17[%c0_79, %c24_80] : memref<8x32xbf16, #tpu.memory_space<vmem>>, vector<8x8xbf16>
      tpu.vector_store %arg17[%c0_79, %c24_80], %141 {strides = array<i32>} : memref<8x32xbf16, #tpu.memory_space<vmem>>, vector<8x8xbf16>,
      %c0_81 = arith.constant 0 : index
      %c0_82 = arith.constant 0 : index
      %143 = vector.load %arg17[%c0_81, %c0_82] : memref<8x32xbf16, #tpu.memory_space<vmem>>, vector<8x32xbf16>
      %c0_83 = arith.constant 0 : index
      %c0_84 = arith.constant 0 : index
      %144 = vector.load %arg9[%c0_83, %c0_84] : memref<32x32xbf16, #tpu.memory_space<vmem>>, vector<32x32xbf16>
      %cst_85 = arith.constant dense<0.000000e+00> : vector<8x32xf32>
      %145 = tpu.matmul %143, %144, %cst_85 {dimension_numbers = #tpu.dot_dimension_numbers<[1], [0], [0], [1], [0, 0, 1, 1], [], []>} : vector<8x32xbf16>, vector<32x32xbf16>, vector<8x32xf32> -> vector<8x32xf32>
      %c0_86 = arith.constant 0 : index
      %c0_87 = arith.constant 0 : index
      %146 = vector.load %arg10[%c0_86, %c0_87] : memref<1x32xf32, #tpu.memory_space<vmem>>, vector<1x32xf32>
      %147 = vector.broadcast %146 : vector<1x32xf32> to vector<8x32xf32>
      %148 = arith.addf %145, %147 : vector<8x32xf32>
      %c0_88 = arith.constant 0 : index
      %c0_89 = arith.constant 0 : index
      %149 = vector.load %arg18[%c0_88, %c0_89] : memref<8x32xf32, #tpu.memory_space<vmem>>, vector<8x32xf32>
      %150 = arith.addf %149, %148 : vector<8x32xf32>
      %c0_90 = arith.constant 0 : index
      %c0_91 = arith.constant 0 : index
      %151 = vector.load %arg5[%c0_90, %c0_91] : memref<1x32xf32, #tpu.memory_space<vmem>>, vector<1x32xf32>
      %c0_92 = arith.constant 0 : index
      %c0_93 = arith.constant 0 : index
      %152 = vector.load %arg6[%c0_92, %c0_93] : memref<1x32xf32, #tpu.memory_space<vmem>>, vector<1x32xf32>
      %cst_94 = arith.constant dense<0.000000e+00> : vector<8xf32>
      %153 = vector.multi_reduction <add>, %150, %cst_94 [1] : vector<8x32xf32> to vector<8xf32>
      %154 = vector.shape_cast %153 : vector<8xf32> to vector<8x1xf32>
      %cst_95 = arith.constant 3.200000e+01 : f32
      %155 = vector.broadcast %cst_95 : f32 to vector<8x1xf32>
      %156 = arith.divf %154, %155 : vector<8x1xf32>
      %157 = vector.broadcast %156 : vector<8x1xf32> to vector<8x32xf32>
      %158 = arith.subf %150, %157 : vector<8x32xf32>
      %159 = arith.mulf %158, %158 : vector<8x32xf32>
      %cst_96 = arith.constant dense<0.000000e+00> : vector<8xf32>
      %160 = vector.multi_reduction <add>, %159, %cst_96 [1] : vector<8x32xf32> to vector<8xf32>
      %161 = vector.shape_cast %160 : vector<8xf32> to vector<8x1xf32>
      %cst_97 = arith.constant 3.200000e+01 : f32
      %162 = vector.broadcast %cst_97 : f32 to vector<8x1xf32>
      %163 = arith.divf %161, %162 : vector<8x1xf32>
      %164 = vector.broadcast %156 : vector<8x1xf32> to vector<8x32xf32>
      %165 = arith.subf %150, %164 : vector<8x32xf32>
      %cst_98 = arith.constant 9.99999997E-7 : f32
      %166 = vector.broadcast %cst_98 : f32 to vector<8x1xf32>
      %167 = arith.addf %163, %166 : vector<8x1xf32>
      %168 = math.rsqrt %167 : vector<8x1xf32>
      %169 = vector.broadcast %168 : vector<8x1xf32> to vector<8x32xf32>
      %170 = arith.mulf %165, %169 : vector<8x32xf32>
      %171 = vector.broadcast %151 : vector<1x32xf32> to vector<8x32xf32>
      %172 = arith.mulf %170, %171 : vector<8x32xf32>
      %173 = vector.broadcast %152 : vector<1x32xf32> to vector<8x32xf32>
      %174 = arith.addf %172, %173 : vector<8x32xf32>
      %c0_99 = arith.constant 0 : index
      %c0_100 = arith.constant 0 : index
      %175 = vector.load %arg18[%c0_99, %c0_100] : memref<8x32xf32, #tpu.memory_space<vmem>>, vector<8x32xf32>
      tpu.vector_store %arg18[%c0_99, %c0_100], %174 {strides = array<i32>} : memref<8x32xf32, #tpu.memory_space<vmem>>, vector<8x32xf32>,
      %cst_101 = arith.constant 0.000000e+00 : f32
      %176 = vector.broadcast %cst_101 : f32 to vector<8x32xf32>
      %c0_102 = arith.constant 0 : index
      %c0_103 = arith.constant 0 : index
      %c0_104 = arith.constant 0 : index
      %177 = vector.load %arg15[%c0_102, %c0_103, %c0_104] : memref<1x8x32xf32, #tpu.memory_space<vmem>>, vector<1x8x32xf32>
      %178 = vector.shape_cast %177 : vector<1x8x32xf32> to vector<8x32xf32>
      %179 = vector.shape_cast %176 : vector<8x32xf32> to vector<1x8x32xf32>
      tpu.vector_store %arg15[%c0_102, %c0_103, %c0_104], %179 {strides = array<i32>} : memref<1x8x32xf32, #tpu.memory_space<vmem>>, vector<1x8x32xf32>,
    } else {
    }
    %c0 = arith.constant 0 : index
    %c0_1 = arith.constant 0 : index
    %3 = vector.load %arg18[%c0, %c0_1] : memref<8x32xf32, #tpu.memory_space<vmem>>, vector<8x32xf32>
    %4 = arith.truncf %3 : vector<8x32xf32> to vector<8x32xbf16>
    %c0_2 = arith.constant 0 : index
    %c0_3 = arith.constant 0 : index
    %5 = vector.load %arg11[%c0_2, %c0_3] : memref<32x64xbf16, #tpu.memory_space<vmem>>, vector<32x64xbf16>
    %cst = arith.constant dense<0.000000e+00> : vector<8x64xf32>
    %6 = tpu.matmul %4, %5, %cst {dimension_numbers = #tpu.dot_dimension_numbers<[1], [0], [0], [1], [0, 0, 1, 1], [], []>} : vector<8x32xbf16>, vector<32x64xbf16>, vector<8x64xf32> -> vector<8x64xf32>
    %c0_4 = arith.constant 0 : index
    %c0_5 = arith.constant 0 : index
    %7 = vector.load %arg12[%c0_4, %c0_5] : memref<1x64xf32, #tpu.memory_space<vmem>>, vector<1x64xf32>
    %8 = vector.broadcast %7 : vector<1x64xf32> to vector<8x64xf32>
    %9 = arith.addf %6, %8 : vector<8x64xf32>
    %cst_6 = arith.constant 5.000000e-01 : f32
    %10 = vector.broadcast %cst_6 : f32 to vector<8x64xf32>
    %11 = arith.mulf %10, %9 : vector<8x64xf32>
    %cst_7 = arith.constant 0.707106769 : f32
    %12 = vector.broadcast %cst_7 : f32 to vector<8x64xf32>
    %13 = arith.mulf %9, %12 : vector<8x64xf32>
    %14 = math.erf %13 : vector<8x64xf32>
    %cst_8 = arith.constant 1.000000e+00 : f32
    %15 = vector.broadcast %cst_8 : f32 to vector<8x64xf32>
    %16 = arith.addf %15, %14 : vector<8x64xf32>
    %17 = arith.mulf %11, %16 : vector<8x64xf32>
    %18 = arith.truncf %17 : vector<8x64xf32> to vector<8x64xbf16>
    %c0_9 = arith.constant 0 : index
    %c0_10 = arith.constant 0 : index
    %19 = vector.load %arg13[%c0_9, %c0_10] : memref<64x32xbf16, #tpu.memory_space<vmem>>, vector<64x32xbf16>
    %cst_11 = arith.constant dense<0.000000e+00> : vector<8x32xf32>
    %20 = tpu.matmul %18, %19, %cst_11 {dimension_numbers = #tpu.dot_dimension_numbers<[1], [0], [0], [1], [0, 0, 1, 1], [], []>} : vector<8x64xbf16>, vector<64x32xbf16>, vector<8x32xf32> -> vector<8x32xf32>
    %c0_12 = arith.constant 0 : index
    %c0_13 = arith.constant 0 : index
    %c0_14 = arith.constant 0 : index
    %21 = vector.load %arg15[%c0_12, %c0_13, %c0_14] : memref<1x8x32xf32, #tpu.memory_space<vmem>>, vector<1x8x32xf32>
    %22 = vector.shape_cast %21 : vector<1x8x32xf32> to vector<8x32xf32>
    %23 = arith.addf %22, %20 : vector<8x32xf32>
    %c0_15 = arith.constant 0 : index
    %c0_16 = arith.constant 0 : index
    %c0_17 = arith.constant 0 : index
    %24 = vector.load %arg15[%c0_15, %c0_16, %c0_17] : memref<1x8x32xf32, #tpu.memory_space<vmem>>, vector<1x8x32xf32>
    %25 = vector.shape_cast %24 : vector<1x8x32xf32> to vector<8x32xf32>
    %26 = vector.shape_cast %23 : vector<8x32xf32> to vector<1x8x32xf32>
    tpu.vector_store %arg15[%c0_15, %c0_16, %c0_17], %26 {strides = array<i32>} : memref<1x8x32xf32, #tpu.memory_space<vmem>>, vector<1x8x32xf32>,
    %c0_i32_18 = arith.constant 0 : i32
    %27 = arith.cmpi eq, %arg1, %c0_i32_18 : i32
    %28 = arith.extui %27 : i1 to i32
    %c0_i32_19 = arith.constant 0 : i32
    %29 = arith.cmpi ne, %28, %c0_i32_19 : i32
    scf.if %29 {
      %c0_20 = arith.constant 0 : index
      %c0_21 = arith.constant 0 : index
      %c0_22 = arith.constant 0 : index
      %30 = vector.load %arg15[%c0_20, %c0_21, %c0_22] : memref<1x8x32xf32, #tpu.memory_space<vmem>>, vector<1x8x32xf32>
      %31 = vector.shape_cast %30 : vector<1x8x32xf32> to vector<8x32xf32>
      %c0_23 = arith.constant 0 : index
      %c0_24 = arith.constant 0 : index
      %32 = vector.load %arg18[%c0_23, %c0_24] : memref<8x32xf32, #tpu.memory_space<vmem>>, vector<8x32xf32>
      %33 = arith.addf %31, %32 : vector<8x32xf32>
      %c0_25 = arith.constant 0 : index
      %c0_26 = arith.constant 0 : index
      %34 = vector.load %arg14[%c0_25, %c0_26] : memref<1x32xf32, #tpu.memory_space<vmem>>, vector<1x32xf32>
      %35 = vector.broadcast %34 : vector<1x32xf32> to vector<8x32xf32>
      %36 = arith.addf %33, %35 : vector<8x32xf32>
      %c0_27 = arith.constant 0 : index
      %c0_28 = arith.constant 0 : index
      %c0_29 = arith.constant 0 : index
      %37 = vector.load %arg15[%c0_27, %c0_28, %c0_29] : memref<1x8x32xf32, #tpu.memory_space<vmem>>, vector<1x8x32xf32>
      %38 = vector.shape_cast %37 : vector<1x8x32xf32> to vector<8x32xf32>
      %39 = vector.shape_cast %36 : vector<8x32xf32> to vector<1x8x32xf32>
      tpu.vector_store %arg15[%c0_27, %c0_28, %c0_29], %39 {strides = array<i32>} : memref<1x8x32xf32, #tpu.memory_space<vmem>>, vector<1x8x32xf32>,
    } else {
    }
    return
  }
  func.func @transform_0(%arg0: i32, %arg1: i32) -> (i32, i32, i32) {
    %c0_i32 = arith.constant 0 : i32
    %c0_i32_0 = arith.constant 0 : i32
    %c0_i32_1 = arith.constant 0 : i32
    return %arg0, %c0_i32, %c0_i32_0 : i32, i32, i32
  }
  func.func @transform_1(%arg0: i32, %arg1: i32) -> (i32, i32) {
    %c0_i32 = arith.constant 0 : i32
    %c0_i32_0 = arith.constant 0 : i32
    %c0_i32_1 = arith.constant 0 : i32
    return %c0_i32, %c0_i32_0 : i32, i32
  }
  func.func @transform_2(%arg0: i32, %arg1: i32) -> (i32, i32) {
    %c0_i32 = arith.constant 0 : i32
    %c0_i32_0 = arith.constant 0 : i32
    %c0_i32_1 = arith.constant 0 : i32
    return %c0_i32, %c0_i32_0 : i32, i32
  }
  func.func @transform_3(%arg0: i32, %arg1: i32) -> (i32, i32) {
    %c0_i32 = arith.constant 0 : i32
    %c0_i32_0 = arith.constant 0 : i32
    %c0_i32_1 = arith.constant 0 : i32
    return %c0_i32, %c0_i32_0 : i32, i32
  }
  func.func @transform_4(%arg0: i32, %arg1: i32) -> (i32, i32) {
    %c0_i32 = arith.constant 0 : i32
    %c0_i32_0 = arith.constant 0 : i32
    %c0_i32_1 = arith.constant 0 : i32
    return %c0_i32, %c0_i32_0 : i32, i32
  }
  func.func @transform_5(%arg0: i32, %arg1: i32) -> (i32, i32) {
    %c0_i32 = arith.constant 0 : i32
    %c0_i32_0 = arith.constant 0 : i32
    %c0_i32_1 = arith.constant 0 : i32
    return %c0_i32, %c0_i32_0 : i32, i32
  }
  func.func @transform_6(%arg0: i32, %arg1: i32) -> (i32, i32) {
    %c0_i32 = arith.constant 0 : i32
    %c0_i32_0 = arith.constant 0 : i32
    %c0_i32_1 = arith.constant 0 : i32
    return %c0_i32, %c0_i32_0 : i32, i32
  }
  func.func @transform_7(%arg0: i32, %arg1: i32) -> (i32, i32) {
    %c0_i32 = arith.constant 0 : i32
    %c0_i32_0 = arith.constant 0 : i32
    %c0_i32_1 = arith.constant 0 : i32
    return %c0_i32, %c0_i32_0 : i32, i32
  }
  func.func @transform_8(%arg0: i32, %arg1: i32) -> (i32, i32) {
    %c0_i32 = arith.constant 0 : i32
    %c0_i32_0 = arith.constant 0 : i32
    %c0_i32_1 = arith.constant 0 : i32
    return %c0_i32, %c0_i32_0 : i32, i32
  }
  func.func @transform_9(%arg0: i32, %arg1: i32) -> (i32, i32) {
    %c0_i32 = arith.constant 0 : i32
    %c0_i32_0 = arith.constant 0 : i32
    return %c0_i32, %arg1 : i32, i32
  }
  func.func @transform_10(%arg0: i32, %arg1: i32) -> (i32, i32) {
    %c0_i32 = arith.constant 0 : i32
    %c0_i32_0 = arith.constant 0 : i32
    return %c0_i32, %arg1 : i32, i32
  }
  func.func @transform_11(%arg0: i32, %arg1: i32) -> (i32, i32) {
    %c0_i32 = arith.constant 0 : i32
    %c0_i32_0 = arith.constant 0 : i32
    return %arg1, %c0_i32 : i32, i32
  }
  func.func @transform_12(%arg0: i32, %arg1: i32) -> (i32, i32) {
    %c0_i32 = arith.constant 0 : i32
    %c0_i32_0 = arith.constant 0 : i32
    %c0_i32_1 = arith.constant 0 : i32
    return %c0_i32, %c0_i32_0 : i32, i32
  }
  func.func @transform_13(%arg0: i32, %arg1: i32) -> (i32, i32, i32) {
    %c0_i32 = arith.constant 0 : i32
    %c0_i32_0 = arith.constant 0 : i32
    %c0_i32_1 = arith.constant 0 : i32
    return %arg0, %c0_i32, %c0_i32_0 : i32, i32, i32
  }
}

</mosaic_0001>

<llo_original>
// kernel: tpu_custom_call.1
$region0: #{tpu_custom_call.1}
  #allocation0 [shape = 'u32[]', space=smem, size = 0x4, offset = 0x4, fixed_abs, tag = 'smem constant byte address 0x4 - core index']
  #allocation1 [shape = 'u32[144,128]{1,0:T(1,128)}', space=vmem, size = 0x12000, scoped, tag = 'internal scratch']
  #allocation2 [shape = 'bf16[8,96]{1,0:T(8,128)(2,1)}', space=vmem, size = 0x800, scoped, tag = 'scratch operand']
  #allocation3 [shape = 'bf16[8,32]{1,0:T(8,128)(2,1)}', space=vmem, size = 0x800, scoped, tag = 'scratch operand']
  #allocation4 [shape = 'f32[8,32]{1,0:T(8,128)}', space=vmem, size = 0x1000, scoped, tag = 'scratch operand']
  %s0 = inlined_call_operand.vmem [shape: f32[2,8,32], index: 0, kind: input, shape index: {}]
  %s1 = inlined_call_operand.vmem [shape: f32[1,32], index: 1, kind: input, shape index: {}]
  %s2 = inlined_call_operand.vmem [shape: f32[1,32], index: 2, kind: input, shape index: {}]
  %s3 = inlined_call_operand.hbm [shape: f32[1,32], index: 3, kind: input, shape index: {}]
  %s4 = inlined_call_operand.hbm [shape: f32[1,32], index: 4, kind: input, shape index: {}]
  %s5 = inlined_call_operand.vmem [shape: bf16[32,96], index: 5, kind: input, shape index: {}]
  %s6 = inlined_call_operand.hbm [shape: f32[1,96], index: 6, kind: input, shape index: {}]
  %s7 = inlined_call_operand.vmem [shape: bf16[32,32], index: 7, kind: input, shape index: {}]
  %s8 = inlined_call_operand.hbm [shape: f32[1,32], index: 8, kind: input, shape index: {}]
  %s9 = inlined_call_operand.vmem [shape: bf16[32,64], index: 9, kind: input, shape index: {}]
  %s10 = inlined_call_operand.vmem [shape: f32[1,64], index: 10, kind: input, shape index: {}]
  %s11 = inlined_call_operand.vmem [shape: bf16[64,32], index: 11, kind: input, shape index: {}]
  %s12 = inlined_call_operand.vmem [shape: f32[1,32], index: 12, kind: input, shape index: {}]
  %s13 = inlined_call_operand.hbm [shape: f32[2,8,32], index: 13, kind: output, shape index: {}]
  %s14 = sld [smem:[#allocation0]]
  $region109: #{tpu_custom_call.1} parent=0
    _
  %s16 = ssub.s32 1, %s14
  %s17 = scalar_select 0, %s16, %s14
  $region1: #{tpu_custom_call.1} parent=0
    #allocation5 [shape = 'u8[512]{0}', space=vmem, size = 0x400, scoped, tag = 'input window, operand 3, single buffered']
    #allocation6 [shape = 's32[2]{0}', space=sflag, size = 0x8, scoped, tag = 'scoped memory for tpu_custom_call.1']
    #allocation7 [shape = 's32[2]{0}', space=sflag, size = 0x8, scoped, tag = 'scoped memory for tpu_custom_call.1']
    #allocation8 [shape = 'u8[512]{0}', space=vmem, size = 0x400, scoped, tag = 'input window, operand 4, single buffered']
    #allocation9 [shape = 's32[1]{0}', space=sflag, size = 0x4, scoped, tag = 'scoped memory for tpu_custom_call.1']
    #allocation10 [shape = 'u8[512]{0}', space=vmem, size = 0x400, scoped, tag = 'input window, operand 6, single buffered']
    #allocation11 [shape = 'u8[512]{0}', space=vmem, size = 0x400, scoped, tag = 'input window, operand 8, single buffered']
    #allocation12 [shape = 's32[1]{0}', space=sflag, size = 0x4, scoped, tag = 'scoped memory for tpu_custom_call.1']
    #allocation13 [shape = 'u8[8192]{0}', space=vmem, size = 0x2000, scoped, tag = 'output window, operand 0']
    %18 = vsyncpa [#allocation6], 0
    %19 = vsyncpa [#allocation9], 0
    %20 = vsyncpa [#allocation12], 0
    %21 = vsyncpa [#allocation7], 0
    %s22 = scalar_lea.sflag [#allocation7], 1
    %23 = vsyncpa %s22, 0
    loop: start=0, step=1, limit=4
    $region2: #{tpu_custom_call.1} parent=1 // loop_pre_header
      _
    $region3: #{tpu_custom_call.1} parent=1 // loop_header
      %s25 = sphi 0, %s29
      %p26 = scmp.ge.s32.totalorder %s25, 4
      %s32 = sphi 0, %s44
      %s33 = sphi 0, %s40
      %s34 = sphi 0, %s32
      %s35 = sphi 0, %s33
      %s36 = sphi 0, %s34
      %s37 = sphi 0, %s35
      %s47 = sphi 0, %s49
      %s50 = sphi 0, %s47
      %s51 = sphi 0, %s50
      %s67 = sphi 0, %s51
      %s71 = sphi 0, %s71
      %s73 = sphi 0, %s71
      %s74 = sphi 0, %s73
      %s88 = sphi 0, %s74
      %s92 = sphi 0, %s92
      %s94 = sphi 0, %s92
      %s95 = sphi 0, %s94
      %s109 = sphi 0, %s95
      %s113 = sphi 0, %s113
      %s115 = sphi 0, %s113
      %s116 = sphi 0, %s115
      %s130 = sphi 0, %s116
      %s134 = sphi 0, %s134
      %s136 = sphi 0, %s134
      %s137 = sphi 0, %s136
      %s151 = sphi 0, %s137
      %s155 = sphi 0, %s155
      %s157 = sphi 0, %s155
      %s158 = sphi 0, %s157
      %s172 = sphi 0, %s158
      %s176 = sphi 0, %s176
      %s178 = sphi 0, %s176
      %s179 = sphi 0, %s178
      %s193 = sphi 0, %s179
      %s197 = sphi 0, %s197
      %s199 = sphi 0, %s197
      %s200 = sphi 0, %s199
      %s214 = sphi 0, %s200
      %s218 = sphi 0, %s218
      %s220 = sphi 0, %s218
      %s221 = sphi 0, %s220
      %s235 = sphi 0, %s221
      %s241 = sphi 0, %s243
      %s244 = sphi 0, %s241
      %s245 = sphi 0, %s244
      %s261 = sphi 0, %s245
      %s267 = sphi 0, %s269
      %s270 = sphi 0, %s267
      %s271 = sphi 0, %s270
      %s287 = sphi 0, %s271
      %s293 = sphi 0, %s295
      %s296 = sphi 0, %s293
      %s297 = sphi 0, %s296
      %s313 = sphi 0, %s297
      %s317 = sphi 0, %s317
      %s319 = sphi 0, %s317
      %s320 = sphi 0, %s319
      %s334 = sphi 0, %s320
      %s340 = sphi 0, %s342
      %s343 = sphi 0, %s340
      %s344 = sphi 0, %s343
      %s360 = sphi 0, %s344
    $region4: #{tpu_custom_call.1} parent=1 // loop_header_branch
      %28 = sbr.rel (%p26) target = $region8
    $region5: #{tpu_custom_call.1} parent=1 // loop_body
      %s30 = ssub.s32 %s25, 1
      %s31 = ssub.s32 %s25, 2
      %s38 = sadd.s32 1, %s33
      %p39 = scmp.ge.s32.totalorder %s38, 1
      %s40 = scalar_select %p39, 0, %s38
      %s41 = sadd.s32 1, %s32
      %s42 = scalar_select %p39, %s41, %s32
      %p43 = scmp.ge.s32.totalorder %s42, 2
      %s44 = scalar_select %p43, 0, %s42
      %s45 = ssub.s32 %s32, %s44
      %p46 = scmp.eq.s32.totalorder %s45, 0
      %s48 = sadd.s32 %s47, 1
      %s49 = scalar_select %p46, %s47, %s48
      %p52 = pneg %p46
      %p53 = scmp.eq.s32.totalorder %s25, 1
      %p54 = por %p52, %p53
      %p55 = scmp.ne.s32.totalorder %s47, %s50
      %p56 = scmp.eq.s32.totalorder %s25, 0
      %p57 = por %p55, %p56
      %p58 = scmp.ne.s32.totalorder %s47, %s50
      %p59 = scmp.eq.s32.totalorder %s30, 1
      %p60 = por %p58, %p59
      %p61 = scmp.ne.s32.totalorder %s50, %s51
      %p62 = scmp.eq.s32.totalorder %s30, 0
      %p63 = por %p61, %p62
      %p64 = scmp.ne.s32.totalorder %s50, %s51
      %p65 = scmp.eq.s32.totalorder %s31, 1
      %p66 = por %p64, %p65
      %p68 = scmp.ne.s32.totalorder %s51, %s67
      %p69 = scmp.eq.s32.totalorder %s31, 0
      %p70 = por %p68, %p69
      %s72 = sadd.s32 %s71, 1
      %p75 = scmp.eq.s32.totalorder %s25, 1
      %p76 = scmp.ne.s32.totalorder %s71, %s73
      %p77 = scmp.eq.s32.totalorder %s25, 0
      %p78 = por %p76, %p77
      %p79 = scmp.ne.s32.totalorder %s71, %s73
      %p80 = scmp.eq.s32.totalorder %s30, 1
      %p81 = por %p79, %p80
      %p82 = scmp.ne.s32.totalorder %s73, %s74
      %p83 = scmp.eq.s32.totalorder %s30, 0
      %p84 = por %p82, %p83
      %p85 = scmp.ne.s32.totalorder %s73, %s74
      %p86 = scmp.eq.s32.totalorder %s31, 1
      %p87 = por %p85, %p86
      %p89 = scmp.ne.s32.totalorder %s74, %s88
      %p90 = scmp.eq.s32.totalorder %s31, 0
      %p91 = por %p89, %p90
      %s93 = sadd.s32 %s92, 1
      %p96 = scmp.eq.s32.totalorder %s25, 1
      %p97 = scmp.ne.s32.totalorder %s92, %s94
      %p98 = scmp.eq.s32.totalorder %s25, 0
      %p99 = por %p97, %p98
      %p100 = scmp.ne.s32.totalorder %s92, %s94
      %p101 = scmp.eq.s32.totalorder %s30, 1
      %p102 = por %p100, %p101
      %p103 = scmp.ne.s32.totalorder %s94, %s95
      %p104 = scmp.eq.s32.totalorder %s30, 0
      %p105 = por %p103, %p104
      %p106 = scmp.ne.s32.totalorder %s94, %s95
      %p107 = scmp.eq.s32.totalorder %s31, 1
      %p108 = por %p106, %p107
      %p110 = scmp.ne.s32.totalorder %s95, %s109
      %p111 = scmp.eq.s32.totalorder %s31, 0
      %p112 = por %p110, %p111
      %s114 = sadd.s32 %s113, 1
      %p117 = scmp.eq.s32.totalorder %s25, 1
      %p118 = scmp.ne.s32.totalorder %s113, %s115
      %p119 = scmp.eq.s32.totalorder %s25, 0
      %p120 = por %p118, %p119
      %p121 = scmp.ne.s32.totalorder %s113, %s115
      %p122 = scmp.eq.s32.totalorder %s30, 1
      %p123 = por %p121, %p122
      %p124 = scmp.ne.s32.totalorder %s115, %s116
      %p125 = scmp.eq.s32.totalorder %s30, 0
      %p126 = por %p124, %p125
      %p127 = scmp.ne.s32.totalorder %s115, %s116
      %p128 = scmp.eq.s32.totalorder %s31, 1
      %p129 = por %p127, %p128
      %p131 = scmp.ne.s32.totalorder %s116, %s130
      %p132 = scmp.eq.s32.totalorder %s31, 0
      %p133 = por %p131, %p132
      %s135 = sadd.s32 %s134, 1
      %p138 = scmp.eq.s32.totalorder %s25, 1
      %p139 = scmp.ne.s32.totalorder %s134, %s136
      %p140 = scmp.eq.s32.totalorder %s25, 0
      %p141 = por %p139, %p140
      %p142 = scmp.ne.s32.totalorder %s134, %s136
      %p143 = scmp.eq.s32.totalorder %s30, 1
      %p144 = por %p142, %p143
      %p145 = scmp.ne.s32.totalorder %s136, %s137
      %p146 = scmp.eq.s32.totalorder %s30, 0
      %p147 = por %p145, %p146
      %p148 = scmp.ne.s32.totalorder %s136, %s137
      %p149 = scmp.eq.s32.totalorder %s31, 1
      %p150 = por %p148, %p149
      %p152 = scmp.ne.s32.totalorder %s137, %s151
      %p153 = scmp.eq.s32.totalorder %s31, 0
      %p154 = por %p152, %p153
      %s156 = sadd.s32 %s155, 1
      %p159 = scmp.eq.s32.totalorder %s25, 1
      %p160 = scmp.ne.s32.totalorder %s155, %s157
      %p161 = scmp.eq.s32.totalorder %s25, 0
      %p162 = por %p160, %p161
      %p163 = scmp.ne.s32.totalorder %s155, %s157
      %p164 = scmp.eq.s32.totalorder %s30, 1
      %p165 = por %p163, %p164
      %p166 = scmp.ne.s32.totalorder %s157, %s158
      %p167 = scmp.eq.s32.totalorder %s30, 0
      %p168 = por %p166, %p167
      %p169 = scmp.ne.s32.totalorder %s157, %s158
      %p170 = scmp.eq.s32.totalorder %s31, 1
      %p171 = por %p169, %p170
      %p173 = scmp.ne.s32.totalorder %s158, %s172
      %p174 = scmp.eq.s32.totalorder %s31, 0
      %p175 = por %p173, %p174
      %s177 = sadd.s32 %s176, 1
      %p180 = scmp.eq.s32.totalorder %s25, 1
      %p181 = scmp.ne.s32.totalorder %s176, %s178
      %p182 = scmp.eq.s32.totalorder %s25, 0
      %p183 = por %p181, %p182
      %p184 = scmp.ne.s32.totalorder %s176, %s178
      %p185 = scmp.eq.s32.totalorder %s30, 1
      %p186 = por %p184, %p185
      %p187 = scmp.ne.s32.totalorder %s178, %s179
      %p188 = scmp.eq.s32.totalorder %s30, 0
      %p189 = por %p187, %p188
      %p190 = scmp.ne.s32.totalorder %s178, %s179
      %p191 = scmp.eq.s32.totalorder %s31, 1
      %p192 = por %p190, %p191
      %p194 = scmp.ne.s32.totalorder %s179, %s193
      %p195 = scmp.eq.s32.totalorder %s31, 0
      %p196 = por %p194, %p195
      %s198 = sadd.s32 %s197, 1
      %p201 = scmp.eq.s32.totalorder %s25, 1
      %p202 = scmp.ne.s32.totalorder %s197, %s199
      %p203 = scmp.eq.s32.totalorder %s25, 0
      %p204 = por %p202, %p203
      %p205 = scmp.ne.s32.totalorder %s197, %s199
      %p206 = scmp.eq.s32.totalorder %s30, 1
      %p207 = por %p205, %p206
      %p208 = scmp.ne.s32.totalorder %s199, %s200
      %p209 = scmp.eq.s32.totalorder %s30, 0
      %p210 = por %p208, %p209
      %p211 = scmp.ne.s32.totalorder %s199, %s200
      %p212 = scmp.eq.s32.totalorder %s31, 1
      %p213 = por %p211, %p212
      %p215 = scmp.ne.s32.totalorder %s200, %s214
      %p216 = scmp.eq.s32.totalorder %s31, 0
      %p217 = por %p215, %p216
      %s219 = sadd.s32 %s218, 1
      %p222 = scmp.eq.s32.totalorder %s25, 1
      %p223 = scmp.ne.s32.totalorder %s218, %s220
      %p224 = scmp.eq.s32.totalorder %s25, 0
      %p225 = por %p223, %p224
      %p226 = scmp.ne.s32.totalorder %s218, %s220
      %p227 = scmp.eq.s32.totalorder %s30, 1
      %p228 = por %p226, %p227
      %p229 = scmp.ne.s32.totalorder %s220, %s221
      %p230 = scmp.eq.s32.totalorder %s30, 0
      %p231 = por %p229, %p230
      %p232 = scmp.ne.s32.totalorder %s220, %s221
      %p233 = scmp.eq.s32.totalorder %s31, 1
      %p234 = por %p232, %p233
      %p236 = scmp.ne.s32.totalorder %s221, %s235
      %p237 = scmp.eq.s32.totalorder %s31, 0
      %p238 = por %p236, %p237
      %s239 = ssub.s32 %s33, %s40
      %p240 = scmp.eq.s32.totalorder %s239, 0
      %s242 = sadd.s32 %s241, 1
      %s243 = scalar_select %p240, %s241, %s242
      %p246 = pneg %p240
      %p247 = scmp.eq.s32.totalorder %s25, 1
      %p248 = por %p246, %p247
      %p249 = scmp.ne.s32.totalorder %s241, %s244
      %p250 = scmp.eq.s32.totalorder %s25, 0
      %p251 = por %p249, %p250
      %p252 = scmp.ne.s32.totalorder %s241, %s244
      %p253 = scmp.eq.s32.totalorder %s30, 1
      %p254 = por %p252, %p253
      %p255 = scmp.ne.s32.totalorder %s244, %s245
      %p256 = scmp.eq.s32.totalorder %s30, 0
      %p257 = por %p255, %p256
      %p258 = scmp.ne.s32.totalorder %s244, %s245
      %p259 = scmp.eq.s32.totalorder %s31, 1
      %p260 = por %p258, %p259
      %p262 = scmp.ne.s32.totalorder %s245, %s261
      %p263 = scmp.eq.s32.totalorder %s31, 0
      %p264 = por %p262, %p263
      %s265 = ssub.s32 %s33, %s40
      %p266 = scmp.eq.s32.totalorder %s265, 0
      %s268 = sadd.s32 %s267, 1
      %s269 = scalar_select %p266, %s267, %s268
      %p272 = pneg %p266
      %p273 = scmp.eq.s32.totalorder %s25, 1
      %p274 = por %p272, %p273
      %p275 = scmp.ne.s32.totalorder %s267, %s270
      %p276 = scmp.eq.s32.totalorder %s25, 0
      %p277 = por %p275, %p276
      %p278 = scmp.ne.s32.totalorder %s267, %s270
      %p279 = scmp.eq.s32.totalorder %s30, 1
      %p280 = por %p278, %p279
      %p281 = scmp.ne.s32.totalorder %s270, %s271
      %p282 = scmp.eq.s32.totalorder %s30, 0
      %p283 = por %p281, %p282
      %p284 = scmp.ne.s32.totalorder %s270, %s271
      %p285 = scmp.eq.s32.totalorder %s31, 1
      %p286 = por %p284, %p285
      %p288 = scmp.ne.s32.totalorder %s271, %s287
      %p289 = scmp.eq.s32.totalorder %s31, 0
      %p290 = por %p288, %p289
      %s291 = ssub.s32 %s33, %s40
      %p292 = scmp.eq.s32.totalorder %s291, 0
      %s294 = sadd.s32 %s293, 1
      %s295 = scalar_select %p292, %s293, %s294
      %p298 = pneg %p292
      %p299 = scmp.eq.s32.totalorder %s25, 1
      %p300 = por %p298, %p299
      %p301 = scmp.ne.s32.totalorder %s293, %s296
      %p302 = scmp.eq.s32.totalorder %s25, 0
      %p303 = por %p301, %p302
      %p304 = scmp.ne.s32.totalorder %s293, %s296
      %p305 = scmp.eq.s32.totalorder %s30, 1
      %p306 = por %p304, %p305
      %p307 = scmp.ne.s32.totalorder %s296, %s297
      %p308 = scmp.eq.s32.totalorder %s30, 0
      %p309 = por %p307, %p308
      %p310 = scmp.ne.s32.totalorder %s296, %s297
      %p311 = scmp.eq.s32.totalorder %s31, 1
      %p312 = por %p310, %p311
      %p314 = scmp.ne.s32.totalorder %s297, %s313
      %p315 = scmp.eq.s32.totalorder %s31, 0
      %p316 = por %p314, %p315
      %s318 = sadd.s32 %s317, 1
      %p321 = scmp.eq.s32.totalorder %s25, 1
      %p322 = scmp.ne.s32.totalorder %s317, %s319
      %p323 = scmp.eq.s32.totalorder %s25, 0
      %p324 = por %p322, %p323
      %p325 = scmp.ne.s32.totalorder %s317, %s319
      %p326 = scmp.eq.s32.totalorder %s30, 1
      %p327 = por %p325, %p326
      %p328 = scmp.ne.s32.totalorder %s319, %s320
      %p329 = scmp.eq.s32.totalorder %s30, 0
      %p330 = por %p328, %p329
      %p331 = scmp.ne.s32.totalorder %s319, %s320
      %p332 = scmp.eq.s32.totalorder %s31, 1
      %p333 = por %p331, %p332
      %p335 = scmp.ne.s32.totalorder %s320, %s334
      %p336 = scmp.eq.s32.totalorder %s31, 0
      %p337 = por %p335, %p336
      %s338 = ssub.s32 %s32, %s44
      %p339 = scmp.eq.s32.totalorder %s338, 0
      %s341 = sadd.s32 %s340, 1
      %s342 = scalar_select %p339, %s340, %s341
      %p345 = pneg %p339
      %p346 = scmp.eq.s32.totalorder %s25, 1
      %p347 = por %p345, %p346
      %p348 = scmp.ne.s32.totalorder %s340, %s343
      %p349 = scmp.eq.s32.totalorder %s25, 0
      %p350 = por %p348, %p349
      %p351 = scmp.ne.s32.totalorder %s340, %s343
      %p352 = scmp.eq.s32.totalorder %s30, 1
      %p353 = por %p351, %p352
      %p354 = scmp.ne.s32.totalorder %s343, %s344
      %p355 = scmp.eq.s32.totalorder %s30, 0
      %p356 = por %p354, %p355
      %p357 = scmp.ne.s32.totalorder %s343, %s344
      %p358 = scmp.eq.s32.totalorder %s31, 1
      %p359 = por %p357, %p358
      %p361 = scmp.ne.s32.totalorder %s344, %s360
      %p362 = scmp.eq.s32.totalorder %s31, 0
      %p363 = por %p361, %p362
      %p364 = scmp.le.s32.totalorder 1, %s25
      %p365 = scmp.lt.s32.totalorder %s25, 3
      %p366 = pnand %p364, %p365
      %p367 = pneg %p366
      // Predicated region
      $region9: #{tpu_custom_call.1} parent=5 // pred_check
        _
      $region10: #{tpu_custom_call.1} parent=5 // pred_check_branch
        %369 = sbr.rel (%p366) target = $region12
      $region11: #{tpu_custom_call.1} parent=5 // pred_region
        %s370 = ssub.s32 %s25, 1
        // Predicated region
        $region13: #{tpu_custom_call.1} parent=11 // pred_check
          %p371 = pneg %p84
        $region14: #{tpu_custom_call.1} parent=11 // pred_check_branch
          %373 = sbr.rel (%p371) target = $region16
        $region15: #{tpu_custom_call.1} parent=11 // pred_region
          _
        $region16: #{tpu_custom_call.1} parent=11 // pred_fallthru
          _
        // Predicated region
        $region17: #{tpu_custom_call.1} parent=11 // pred_check
          %p374 = pneg %p105
        $region18: #{tpu_custom_call.1} parent=11 // pred_check_branch
          %376 = sbr.rel (%p374) target = $region20
        $region19: #{tpu_custom_call.1} parent=11 // pred_region
          _
        $region20: #{tpu_custom_call.1} parent=11 // pred_fallthru
          _
        // Predicated region
        $region21: #{tpu_custom_call.1} parent=11 // pred_check
          %p377 = pneg %p126
        $region22: #{tpu_custom_call.1} parent=11 // pred_check_branch
          %379 = sbr.rel (%p377) target = $region24
        $region23: #{tpu_custom_call.1} parent=11 // pred_region
          %s381 = ssub.s32 16, 16
          %382 = vsyncadd [#allocation6], %s381
          %s384 = sshll.u32 [#allocation5], 4
          %s385 = int_to_ptr.vmem [resolvable:$true] %s384
          %387 = dma.hbm_to_vmem [thread:$0]  %s3, 16, %s385, [#allocation6]
        $region24: #{tpu_custom_call.1} parent=11 // pred_fallthru
          _
        // Predicated region
        $region25: #{tpu_custom_call.1} parent=11 // pred_check
          %p388 = pneg %p147
        $region26: #{tpu_custom_call.1} parent=11 // pred_check_branch
          %390 = sbr.rel (%p388) target = $region28
        $region27: #{tpu_custom_call.1} parent=11 // pred_region
          %s392 = ssub.s32 16, 16
          %393 = vsyncadd [#allocation9], %s392
          %s395 = sshll.u32 [#allocation8], 4
          %s396 = int_to_ptr.vmem [resolvable:$true] %s395
          %398 = dma.hbm_to_vmem [thread:$0]  %s4, 16, %s396, [#allocation9]
        $region28: #{tpu_custom_call.1} parent=11 // pred_fallthru
          _
        // Predicated region
        $region29: #{tpu_custom_call.1} parent=11 // pred_check
          %p399 = pneg %p168
        $region30: #{tpu_custom_call.1} parent=11 // pred_check_branch
          %401 = sbr.rel (%p399) target = $region32
        $region31: #{tpu_custom_call.1} parent=11 // pred_region
          _
        $region32: #{tpu_custom_call.1} parent=11 // pred_fallthru
          _
        // Predicated region
        $region33: #{tpu_custom_call.1} parent=11 // pred_check
          %p402 = pneg %p189
        $region34: #{tpu_custom_call.1} parent=11 // pred_check_branch
          %404 = sbr.rel (%p402) target = $region36
        $region35: #{tpu_custom_call.1} parent=11 // pred_region
          %s406 = ssub.s32 16, 16
          %407 = vsyncadd [#allocation9], %s406
          %s409 = sshll.u32 [#allocation10], 4
          %s410 = int_to_ptr.vmem [resolvable:$true] %s409
          %412 = dma.hbm_to_vmem [thread:$0]  %s6, 16, %s410, [#allocation9]
        $region36: #{tpu_custom_call.1} parent=11 // pred_fallthru
          _
        // Predicated region
        $region37: #{tpu_custom_call.1} parent=11 // pred_check
          %p413 = pneg %p210
        $region38: #{tpu_custom_call.1} parent=11 // pred_check_branch
          %415 = sbr.rel (%p413) target = $region40
        $region39: #{tpu_custom_call.1} parent=11 // pred_region
          _
        $region40: #{tpu_custom_call.1} parent=11 // pred_fallthru
          _
        // Predicated region
        $region41: #{tpu_custom_call.1} parent=11 // pred_check
          %p416 = pneg %p231
        $region42: #{tpu_custom_call.1} parent=11 // pred_check_branch
          %418 = sbr.rel (%p416) target = $region44
        $region43: #{tpu_custom_call.1} parent=11 // pred_region
          %s420 = ssub.s32 16, 16
          %421 = vsyncadd [#allocation12], %s420
          %s423 = sshll.u32 [#allocation11], 4
          %s424 = int_to_ptr.vmem [resolvable:$true] %s423
          %426 = dma.hbm_to_vmem [thread:$0]  %s8, 16, %s424, [#allocation12]
        $region44: #{tpu_custom_call.1} parent=11 // pred_fallthru
          _
        // Predicated region
        $region45: #{tpu_custom_call.1} parent=11 // pred_check
          %p427 = pneg %p257
        $region46: #{tpu_custom_call.1} parent=11 // pred_check_branch
          %429 = sbr.rel (%p427) target = $region48
        $region47: #{tpu_custom_call.1} parent=11 // pred_region
          %p430 = scmp.lt.s32.totalorder %s35, 0
          %s431 = scalar_select %p430, %s35, 0
          %s432 = smul.addr %s431, 4
          %s433 = scalar_lea.vmem %s9, %s432
        $region48: #{tpu_custom_call.1} parent=11 // pred_fallthru
          _
        // Predicated region
        $region49: #{tpu_custom_call.1} parent=11 // pred_check
          %p434 = pneg %p283
        $region50: #{tpu_custom_call.1} parent=11 // pred_check_branch
          %436 = sbr.rel (%p434) target = $region52
        $region51: #{tpu_custom_call.1} parent=11 // pred_region
          %p437 = scmp.lt.s32.totalorder %s35, 0
          %s438 = scalar_select %p437, %s35, 0
          %s439 = scalar_lea.vmem %s10, %s438
        $region52: #{tpu_custom_call.1} parent=11 // pred_fallthru
          _
        // Predicated region
        $region53: #{tpu_custom_call.1} parent=11 // pred_check
          %p440 = pneg %p309
        $region54: #{tpu_custom_call.1} parent=11 // pred_check_branch
          %442 = sbr.rel (%p440) target = $region56
        $region55: #{tpu_custom_call.1} parent=11 // pred_region
          %s443 = smul.u32 8, %s35
          %p444 = scmp.lt.s32.totalorder %s443, 7
          %s445 = scalar_select %p444, %s443, 7
          %s446 = smul.addr %s445, 4
          %s447 = scalar_lea.vmem %s11, %s446
          %s448 = smul.u32 8, %s35
        $region56: #{tpu_custom_call.1} parent=11 // pred_fallthru
          _
        // Predicated region
        $region57: #{tpu_custom_call.1} parent=11 // pred_check
          %p449 = pneg %p330
        $region58: #{tpu_custom_call.1} parent=11 // pred_check_branch
          %451 = sbr.rel (%p449) target = $region60
        $region59: #{tpu_custom_call.1} parent=11 // pred_region
          _
        $region60: #{tpu_custom_call.1} parent=11 // pred_fallthru
          _
      $region12: #{tpu_custom_call.1} parent=5 // pred_fallthru
        _
      %p452 = scmp.lt.s32.totalorder %s25, 2
      // Predicated region
      $region61: #{tpu_custom_call.1} parent=5 // pred_check
        %p453 = pneg %p452
      $region62: #{tpu_custom_call.1} parent=5 // pred_check_branch
        %455 = sbr.rel (%p453) target = $region64
      $region63: #{tpu_custom_call.1} parent=5 // pred_region
        // Predicated region
        $region65: #{tpu_custom_call.1} parent=63 // pred_check
          %p456 = pneg %p57
        $region66: #{tpu_custom_call.1} parent=63 // pred_check_branch
          %458 = sbr.rel (%p456) target = $region68
        $region67: #{tpu_custom_call.1} parent=63 // pred_region
          %p459 = scmp.lt.s32.totalorder %s32, 1
          %s460 = scalar_select %p459, %s32, 1
          %s461 = smul.addr %s460, 8
          %s462 = scalar_lea.vmem %s0, %s461
        $region68: #{tpu_custom_call.1} parent=63 // pred_fallthru
          _
      $region64: #{tpu_custom_call.1} parent=5 // pred_fallthru
        _
      %p463 = scmp.le.s32.totalorder 1, %s25
      %p464 = scmp.lt.s32.totalorder %s25, 3
      %p465 = pnand %p463, %p464
      %p466 = pneg %p465
      // Predicated region
      $region69: #{tpu_custom_call.1} parent=5 // pred_check
        _
      $region70: #{tpu_custom_call.1} parent=5 // pred_check_branch
        %468 = sbr.rel (%p465) target = $region72
      $region71: #{tpu_custom_call.1} parent=5 // pred_region
        %s469 = ssub.s32 %s25, 1
        // Predicated region
        $region73: #{tpu_custom_call.1} parent=71 // pred_check
          %p470 = pneg %p126
        $region74: #{tpu_custom_call.1} parent=71 // pred_check_branch
          %472 = sbr.rel (%p470) target = $region76
        $region75: #{tpu_custom_call.1} parent=71 // pred_region
          %473 = dma.done [#allocation6], 16
        $region76: #{tpu_custom_call.1} parent=71 // pred_fallthru
          _
        // Predicated region
        $region77: #{tpu_custom_call.1} parent=71 // pred_check
          %p474 = pneg %p147
        $region78: #{tpu_custom_call.1} parent=71 // pred_check_branch
          %476 = sbr.rel (%p474) target = $region80
        $region79: #{tpu_custom_call.1} parent=71 // pred_region
          %477 = dma.done [#allocation9], 16
        $region80: #{tpu_custom_call.1} parent=71 // pred_fallthru
          _
        // Predicated region
        $region81: #{tpu_custom_call.1} parent=71 // pred_check
          %p478 = pneg %p189
        $region82: #{tpu_custom_call.1} parent=71 // pred_check_branch
          %480 = sbr.rel (%p478) target = $region84
        $region83: #{tpu_custom_call.1} parent=71 // pred_region
          %481 = dma.done [#allocation9], 16
        $region84: #{tpu_custom_call.1} parent=71 // pred_fallthru
          _
        // Predicated region
        $region85: #{tpu_custom_call.1} parent=71 // pred_check
          %p482 = pneg %p231
        $region86: #{tpu_custom_call.1} parent=71 // pred_check_branch
          %484 = sbr.rel (%p482) target = $region88
        $region87: #{tpu_custom_call.1} parent=71 // pred_region
          %485 = dma.done [#allocation12], 16
        $region88: #{tpu_custom_call.1} parent=71 // pred_fallthru
          _
        %p486 = scmp.lt.s32.totalorder %s34, 1
        %s487 = scalar_select %p486, %s34, 1
        %s488 = smul.addr %s487, 8
        %s489 = scalar_lea.vmem %s0, %s488
        %p490 = pneg %p63
        %p491 = pneg %p60
        %p492 = pneg %p84
        %p493 = pneg %p81
        %p494 = pneg %p105
        %p495 = pneg %p102
        %p496 = pneg %p126
        %p497 = pneg %p123
        %p498 = pneg %p147
        %p499 = pneg %p144
        %p500 = pneg %p168
        %p501 = pneg %p165
        %p502 = pneg %p189
        %p503 = pneg %p186
        %p504 = pneg %p210
        %p505 = pneg %p207
        %p506 = pneg %p231
        %p507 = pneg %p228
        %p508 = scmp.lt.s32.totalorder %s35, 0
        %s509 = scalar_select %p508, %s35, 0
        %s510 = smul.addr %s509, 4
        %s511 = scalar_lea.vmem %s9, %s510
        %p512 = pneg %p257
        %p513 = pneg %p254
        %p514 = scmp.lt.s32.totalorder %s35, 0
        %s515 = scalar_select %p514, %s35, 0
        %s516 = scalar_lea.vmem %s10, %s515
        %p517 = pneg %p283
        %p518 = pneg %p280
        %s519 = smul.u32 8, %s35
        %p520 = scmp.lt.s32.totalorder %s519, 7
        %s521 = scalar_select %p520, %s519, 7
        %s522 = smul.addr %s521, 4
        %s523 = scalar_lea.vmem %s11, %s522
        %p524 = pneg %p309
        %p525 = pneg %p306
        %p526 = pneg %p330
        %p527 = pneg %p327
        %p528 = pneg %p356
        %p529 = pneg %p353
        %s530 = sand.u32 %s343, 1
        %s531 = scalar_lea.sflag [#allocation7], %s530
        %s532 = sand.u32 %s343, 1
        %s533 = smul.addr %s532, 8
        %s534 = scalar_lea.vmem [#allocation13], %s533
        %p535 = scmp.lt.s32.totalorder %s34, 1
        %s536 = scalar_select %p535, %s34, 1
        %s537 = smul.addr %s536, 8
        %s538 = scalar_lea.vmem %s0, %s537
        %p539 = scmp.lt.s32.totalorder %s35, 0
        %s540 = scalar_select %p539, %s35, 0
        %s541 = smul.addr %s540, 4
        %s542 = scalar_lea.vmem %s9, %s541
        %p543 = scmp.lt.s32.totalorder %s35, 0
        %s544 = scalar_select %p543, %s35, 0
        %s545 = scalar_lea.vmem %s10, %s544
        %s546 = smul.u32 8, %s35
        %p547 = scmp.lt.s32.totalorder %s546, 7
        %s548 = scalar_select %p547, %s546, 7
        %s549 = smul.addr %s548, 4
        %s550 = scalar_lea.vmem %s11, %s549
        %s551 = smul.u32 8, %s35
        %p553 = scmp.eq.s32.totalorder %s35, 0
        // Predicated region
        $region89: #{tpu_custom_call.1} parent=71 // pred_check
          %p554 = pneg %p553
        $region90: #{tpu_custom_call.1} parent=71 // pred_check_branch
          %556 = sbr.rel (%p554) target = $region92
        $region91: #{tpu_custom_call.1} parent=71 // pred_region
          %v557 = vld [vmem:[%s538] sm:$0xff]
          %v558 = vld [vmem:[%s1] sm:$0x1]
          %v559 = vld [vmem:[%s2] sm:$0x1]
          %vm560 = vcmask 261120
          %v561 = vsel %vm560, %v557, 0.0
          %562 = vadd.xlane.f32.xlu0 %v561
          %v563 = vpop.xlane.xlu0 %562
          %v564 = vrcp.pop 32.0
          %v565 = vmul.f32 %v563, %v564
          %v566 = vsub.f32 %v557, %v565
          %v567 = vmul.f32 %v566, %v566
          %v568 = vsel %vm560, %v567, 0.0
          %569 = vadd.xlane.f32.xlu0 %v568
          %v570 = vpop.xlane.xlu0 %569
          %v571 = vmul.f32 %v570, %v564
          %v572 = vadd.f32 %v571, 1e-06
          %v573 = vrsqrt.pop %v572
          %v574 = vmul.f32 %v566, %v573
          %v576 = vlaneseq
          %v577 = vshrl.u32 %v576, 7
          %v578 = vsub.s32 0, %v577
          %v579 = vrot.slane %v558, %v578
          %v581 = vmul.f32 %v574, %v579
          %v583 = vlaneseq
          %v584 = vshrl.u32 %v583, 7
          %v585 = vsub.s32 0, %v584
          %v586 = vrot.slane %v559, %v585
          %v588 = vadd.f32 %v581, %v586
          %589 = vst.msk [vmem:[#allocation4] sm:$0xff] %vm560, %v588
          %v590 = vpack.c.bf16 %v588, %v588
          %v591 = vld [vmem:[%s5] sm:$0xf]
          %v592 = vld [vmem:[%s5 + $0x4] sm:$0xf]
          %v593 = vld [vmem:[%s5 + $0x8] sm:$0xf]
          %v594 = vld [vmem:[%s5 + $0xc] sm:$0xf]
          %v595 = vld [vmem:[#allocation10] sm:$0x1]
          %v597 = vlaneseq
          %v598 = vshrl.u32 %v597, 7
          %v599 = vsub.s32 0, %v598
          %v600 = vrot.slane %v595, %v599
          %v606 = vunpack.c.l.b16 %v591
          %v607 = vunpack.c.l.b16 %v592
          %v608 = vunpack.c.l.b16 %v593
          %v609 = vunpack.c.l.b16 %v594
          %v610 = vpack.c.b16 %v607, %v606
          %v611 = vpack.c.b16 %v609, %v608
          %v615 = vsel %vm560, %v590, 0
          %617 = vmatprep.subr.bf16.mxu0 0
          %618 = vmatpush1.bf16.msra.mxu0 %v610
          %619 = vmatprep.subr.bf16.mxu0 0
          %620 = vmatpush1.bf16.msra.mxu0 %v611
          %621 = vmatprep.subr.bf16.mxu0 0
          %622 = vmatpush1.bf16.msra.mxu0 0
          %623 = vmatprep.subr.bf16.mxu0 0
          %624 = vmatpush1.bf16.msra.mxu0 0
          %625 = vmatprep.subr.bf16.mxu0 0
          %626 = vmatpush1.bf16.msra.mxu0 0
          %627 = vmatprep.subr.bf16.mxu0 0
          %628 = vmatpush1.bf16.msra.mxu0 0
          %629 = vmatprep.subr.bf16.mxu0 0
          %630 = vmatpush1.bf16.msra.mxu0 0
          %631 = vmatprep.subr.bf16.mxu0 0
          %632 = vmatpush1.bf16.msra.mxu0 0
          %633 = vmatprep.subr.bf16.mxu0 0
          %634 = vmatpush1.bf16.msra.mxu0 0
          %635 = vmatprep.subr.bf16.mxu0 0
          %636 = vmatpush1.bf16.msra.mxu0 0
          %637 = vmatprep.subr.bf16.mxu0 0
          %638 = vmatpush1.bf16.msra.mxu0 0
          %639 = vmatprep.subr.bf16.mxu0 0
          %640 = vmatpush1.bf16.msra.mxu0 0
          %641 = vmatprep.subr.bf16.mxu0 0
          %642 = vmatpush1.bf16.msra.mxu0 0
          %643 = vmatprep.subr.bf16.mxu0 0
          %644 = vmatpush1.bf16.msra.mxu0 0
          %645 = vmatprep.subr.bf16.mxu0 0
          %646 = vmatpush1.bf16.msra.mxu0 0
          %647 = vmatprep.subr.bf16.mxu0 0
          %648 = vmatpush1.bf16.msra.mxu0 0
          %649 = vmatprep.mubr.bf16.mxu0 0
          %650 = vmatmul.mubr.bf16.gmra.mrb[0].mxu0 %v615
          %v651 = vpop.f32.mrb[0].mxu0
          %v652 = vadd.f32 %v600, %v651
          %v653 = vpop.f32.mrb[0].mxu0
          %v654 = vpop.f32.mrb[0].mxu0
          %v655 = vpop.f32.mrb[0].mxu0
          %656 = vdwg.mxu0
          %v657 = vmul.f32 %v652, 0.35355338
          %v658 = vpack.c.bf16 %v657, %v657
          %vm659 = vcmask 257024
          %660 = vst.msk [vmem:[#allocation2] sm:$0xf] %vm659, %v658
          %v661 = vpack.c.bf16 %v652, %v652
          %vm662 = vcmask 781568
          %663 = vst.msk [vmem:[#allocation2] sm:$0xf] %vm662, %v661
          %v664 = vld [vmem:[#allocation2] sm:$0xf]
          %v666 = vunpack.c.l.b16 %v664
          %v667 = vpack.c.b16 %v666, %v666
          %668 = vrot.lane.b32.xlu0 %v667, 96
          %v669 = vpop.permute.xlu0 %668
          %vm670 = vcmask 64512
          %v672 = vsel %vm670, %v664, 0
          %v675 = vsel %vm670, %v669, 0
          %677 = vmatprep.subr.bf16.mxu0 0
          %678 = vmatpush1.bf16.xpose.msra.mxu0 %v675
          %679 = vmatprep.subr.bf16.mxu0 0
          %680 = vmatpush1.bf16.xpose.msra.mxu0 0
          %681 = vmatprep.subr.bf16.mxu0 0
          %682 = vmatpush1.bf16.xpose.msra.mxu0 0
          %683 = vmatprep.subr.bf16.mxu0 0
          %684 = vmatpush1.bf16.xpose.msra.mxu0 0
          %685 = vmatprep.subr.bf16.mxu0 0
          %686 = vmatpush1.bf16.xpose.msra.mxu0 0
          %687 = vmatprep.subr.bf16.mxu0 0
          %688 = vmatpush1.bf16.xpose.msra.mxu0 0
          %689 = vmatprep.subr.bf16.mxu0 0
          %690 = vmatpush1.bf16.xpose.msra.mxu0 0
          %691 = vmatprep.subr.bf16.mxu0 0
          %692 = vmatpush1.bf16.xpose.msra.mxu0 0
          %693 = vmatprep.subr.bf16.mxu0 0
          %694 = vmatpush1.bf16.xpose.msra.mxu0 0
          %695 = vmatprep.subr.bf16.mxu0 0
          %696 = vmatpush1.bf16.xpose.msra.mxu0 0
          %697 = vmatprep.subr.bf16.mxu0 0
          %698 = vmatpush1.bf16.xpose.msra.mxu0 0
          %699 = vmatprep.subr.bf16.mxu0 0
          %700 = vmatpush1.bf16.xpose.msra.mxu0 0
          %701 = vmatprep.subr.bf16.mxu0 0
          %702 = vmatpush1.bf16.xpose.msra.mxu0 0
          %703 = vmatprep.subr.bf16.mxu0 0
          %704 = vmatpush1.bf16.xpose.msra.mxu0 0
          %705 = vmatprep.subr.bf16.mxu0 0
          %706 = vmatpush1.bf16.xpose.msra.mxu0 0
          %707 = vmatprep.subr.bf16.mxu0 0
          %708 = vmatpush1.bf16.xpose.msra.mxu0 0
          %709 = vmatprep.mubr.bf16.mxu0 0
          %710 = vmatmul.mubr.bf16.gmra.mrb[0].mxu0 %v672
          %v711 = vpop.f32.mrb[0].mxu0
          %v712 = vadd.f32 0.0, %v711
          %v713 = vpop.f32.mrb[0].mxu0
          %v714 = vpop.f32.mrb[0].mxu0
          %v715 = vpop.f32.mrb[0].mxu0
          %716 = vdwg.mxu0
          %v717 = vsel %vm670, %v712, -inf
          %718 = vmax.xlane.f32.xlu0 %v717
          %v719 = vpop.xlane.xlu0 %718
          %v720 = vsub.f32 %v712, %v719
          %v721 = vmul.f32 %v720, 1.442695
          %v722 = vpow.pop %v721
          %v723 = vsel %vm670, %v722, 0.0
          %724 = vadd.xlane.f32.xlu0 %v723
          %v725 = vpop.xlane.xlu0 %724
          %v726 = vpack.c.bf16 %v722, %v722
          %727 = vrot.lane.b32.xlu0 %v667, 64
          %v728 = vpop.permute.xlu0 %727
          %v730 = vsel %vm670, %v726, 0
          %vm732 = vcmask 1043456
          %v734 = vsel %vm732, %v728, 0
          %736 = vmatprep.subr.bf16.mxu0 0
          %737 = vmatpush1.bf16.msra.mxu0 %v734
          %738 = vmatprep.subr.bf16.mxu0 0
          %739 = vmatpush1.bf16.msra.mxu0 0
          %740 = vmatprep.subr.bf16.mxu0 0
          %741 = vmatpush1.bf16.msra.mxu0 0
          %742 = vmatprep.subr.bf16.mxu0 0
          %743 = vmatpush1.bf16.msra.mxu0 0
          %744 = vmatprep.subr.bf16.mxu0 0
          %745 = vmatpush1.bf16.msra.mxu0 0
          %746 = vmatprep.subr.bf16.mxu0 0
          %747 = vmatpush1.bf16.msra.mxu0 0
          %748 = vmatprep.subr.bf16.mxu0 0
          %749 = vmatpush1.bf16.msra.mxu0 0
          %750 = vmatprep.subr.bf16.mxu0 0
          %751 = vmatpush1.bf16.msra.mxu0 0
          %752 = vmatprep.subr.bf16.mxu0 0
          %753 = vmatpush1.bf16.msra.mxu0 0
          %754 = vmatprep.subr.bf16.mxu0 0
          %755 = vmatpush1.bf16.msra.mxu0 0
          %756 = vmatprep.subr.bf16.mxu0 0
          %757 = vmatpush1.bf16.msra.mxu0 0
          %758 = vmatprep.subr.bf16.mxu0 0
          %759 = vmatpush1.bf16.msra.mxu0 0
          %760 = vmatprep.subr.bf16.mxu0 0
          %761 = vmatpush1.bf16.msra.mxu0 0
          %762 = vmatprep.subr.bf16.mxu0 0
          %763 = vmatpush1.bf16.msra.mxu0 0
          %764 = vmatprep.subr.bf16.mxu0 0
          %765 = vmatpush1.bf16.msra.mxu0 0
          %766 = vmatprep.subr.bf16.mxu0 0
          %767 = vmatpush1.bf16.msra.mxu0 0
          %768 = vmatprep.mubr.bf16.mxu0 0
          %769 = vmatmul.mubr.bf16.gmra.mrb[0].mxu0 %v730
          %v770 = vpop.f32.mrb[0].mxu0
          %v771 = vadd.f32 0.0, %v770
          %v772 = vpop.f32.mrb[0].mxu0
          %v773 = vpop.f32.mrb[0].mxu0
          %v774 = vpop.f32.mrb[0].mxu0
          %775 = vdwg.mxu0
          %v776 = vrcp.pop %v725
          %v777 = vmul.f32 %v771, %v776
          %v778 = vpack.c.bf16 %v777, %v777
          %vm779 = vcmask 60416
          %780 = vst.msk [vmem:[#allocation3] sm:$0xf] %vm779, %v778
          %v781 = vld [vmem:[#allocation2] sm:$0xf]
          %v783 = vunpack.c.l.b16 %v781
          %v784 = vpack.c.b16 %v783, %v783
          %785 = vrot.lane.b32.xlu0 %v784, 120
          %v786 = vpop.permute.xlu0 %785
          %787 = vrot.lane.b32.xlu0 %v784, 88
          %v788 = vpop.permute.xlu0 %787
          %v790 = vsel %vm670, %v786, 0
          %v793 = vsel %vm670, %v788, 0
          %795 = vmatprep.subr.bf16.mxu0 0
          %796 = vmatpush1.bf16.xpose.msra.mxu0 %v793
          %797 = vmatprep.subr.bf16.mxu0 0
          %798 = vmatpush1.bf16.xpose.msra.mxu0 0
          %799 = vmatprep.subr.bf16.mxu0 0
          %800 = vmatpush1.bf16.xpose.msra.mxu0 0
          %801 = vmatprep.subr.bf16.mxu0 0
          %802 = vmatpush1.bf16.xpose.msra.mxu0 0
          %803 = vmatprep.subr.bf16.mxu0 0
          %804 = vmatpush1.bf16.xpose.msra.mxu0 0
          %805 = vmatprep.subr.bf16.mxu0 0
          %806 = vmatpush1.bf16.xpose.msra.mxu0 0
          %807 = vmatprep.subr.bf16.mxu0 0
          %808 = vmatpush1.bf16.xpose.msra.mxu0 0
          %809 = vmatprep.subr.bf16.mxu0 0
          %810 = vmatpush1.bf16.xpose.msra.mxu0 0
          %811 = vmatprep.subr.bf16.mxu0 0
          %812 = vmatpush1.bf16.xpose.msra.mxu0 0
          %813 = vmatprep.subr.bf16.mxu0 0
          %814 = vmatpush1.bf16.xpose.msra.mxu0 0
          %815 = vmatprep.subr.bf16.mxu0 0
          %816 = vmatpush1.bf16.xpose.msra.mxu0 0
          %817 = vmatprep.subr.bf16.mxu0 0
          %818 = vmatpush1.bf16.xpose.msra.mxu0 0
          %819 = vmatprep.subr.bf16.mxu0 0
          %820 = vmatpush1.bf16.xpose.msra.mxu0 0
          %821 = vmatprep.subr.bf16.mxu0 0
          %822 = vmatpush1.bf16.xpose.msra.mxu0 0
          %823 = vmatprep.subr.bf16.mxu0 0
          %824 = vmatpush1.bf16.xpose.msra.mxu0 0
          %825 = vmatprep.subr.bf16.mxu0 0
          %826 = vmatpush1.bf16.xpose.msra.mxu0 0
          %827 = vmatprep.mubr.bf16.mxu0 0
          %828 = vmatmul.mubr.bf16.gmra.mrb[0].mxu0 %v790
          %v829 = vpop.f32.mrb[0].mxu0
          %v830 = vadd.f32 0.0, %v829
          %v831 = vpop.f32.mrb[0].mxu0
          %v832 = vpop.f32.mrb[0].mxu0
          %v833 = vpop.f32.mrb[0].mxu0
          %834 = vdwg.mxu0
          %v835 = vsel %vm670, %v830, -inf
          %836 = vmax.xlane.f32.xlu0 %v835
          %v837 = vpop.xlane.xlu0 %836
          %v838 = vsub.f32 %v830, %v837
          %v839 = vmul.f32 %v838, 1.442695
          %v840 = vpow.pop %v839
          %v841 = vsel %vm670, %v840, 0.0
          %842 = vadd.xlane.f32.xlu0 %v841
          %v843 = vpop.xlane.xlu0 %842
          %v844 = vpack.c.bf16 %v840, %v840
          %845 = vrot.lane.b32.xlu0 %v784, 56
          %v846 = vpop.permute.xlu0 %845
          %v848 = vsel %vm670, %v844, 0
          %v851 = vsel %vm732, %v846, 0
          %853 = vmatprep.subr.bf16.mxu0 0
          %854 = vmatpush1.bf16.msra.mxu0 %v851
          %855 = vmatprep.subr.bf16.mxu0 0
          %856 = vmatpush1.bf16.msra.mxu0 0
          %857 = vmatprep.subr.bf16.mxu0 0
          %858 = vmatpush1.bf16.msra.mxu0 0
          %859 = vmatprep.subr.bf16.mxu0 0
          %860 = vmatpush1.bf16.msra.mxu0 0
          %861 = vmatprep.subr.bf16.mxu0 0
          %862 = vmatpush1.bf16.msra.mxu0 0
          %863 = vmatprep.subr.bf16.mxu0 0
          %864 = vmatpush1.bf16.msra.mxu0 0
          %865 = vmatprep.subr.bf16.mxu0 0
          %866 = vmatpush1.bf16.msra.mxu0 0
          %867 = vmatprep.subr.bf16.mxu0 0
          %868 = vmatpush1.bf16.msra.mxu0 0
          %869 = vmatprep.subr.bf16.mxu0 0
          %870 = vmatpush1.bf16.msra.mxu0 0
          %871 = vmatprep.subr.bf16.mxu0 0
          %872 = vmatpush1.bf16.msra.mxu0 0
          %873 = vmatprep.subr.bf16.mxu0 0
          %874 = vmatpush1.bf16.msra.mxu0 0
          %875 = vmatprep.subr.bf16.mxu0 0
          %876 = vmatpush1.bf16.msra.mxu0 0
          %877 = vmatprep.subr.bf16.mxu0 0
          %878 = vmatpush1.bf16.msra.mxu0 0
          %879 = vmatprep.subr.bf16.mxu0 0
          %880 = vmatpush1.bf16.msra.mxu0 0
          %881 = vmatprep.subr.bf16.mxu0 0
          %882 = vmatpush1.bf16.msra.mxu0 0
          %883 = vmatprep.subr.bf16.mxu0 0
          %884 = vmatpush1.bf16.msra.mxu0 0
          %885 = vmatprep.mubr.bf16.mxu0 0
          %886 = vmatmul.mubr.bf16.gmra.mrb[0].mxu0 %v848
          %v887 = vpop.f32.mrb[0].mxu0
          %v888 = vadd.f32 0.0, %v887
          %v889 = vpop.f32.mrb[0].mxu0
          %v890 = vpop.f32.mrb[0].mxu0
          %v891 = vpop.f32.mrb[0].mxu0
          %892 = vdwg.mxu0
          %v893 = vrcp.pop %v843
          %v894 = vmul.f32 %v888, %v893
          %v895 = vpack.c.bf16 %v894, %v894
          %v897 = vunpack.c.l.b16 %v895
          %v898 = vpack.c.b16 %v897, %v897
          %899 = vrot.lane.b32.xlu0 %v898, 8
          %v900 = vpop.permute.xlu0 %899
          %vm902 = vcmask 126016
          %903 = vst.msk [vmem:[#allocation3] sm:$0xf] %vm902, %v900
          %v904 = vld [vmem:[#allocation2] sm:$0xf]
          %v906 = vunpack.c.l.b16 %v904
          %v907 = vpack.c.b16 %v906, %v906
          %908 = vrot.lane.b32.xlu0 %v907, 112
          %v909 = vpop.permute.xlu0 %908
          %910 = vrot.lane.b32.xlu0 %v907, 80
          %v911 = vpop.permute.xlu0 %910
          %v913 = vsel %vm670, %v909, 0
          %v916 = vsel %vm670, %v911, 0
          %918 = vmatprep.subr.bf16.mxu0 0
          %919 = vmatpush1.bf16.xpose.msra.mxu0 %v916
          %920 = vmatprep.subr.bf16.mxu0 0
          %921 = vmatpush1.bf16.xpose.msra.mxu0 0
          %922 = vmatprep.subr.bf16.mxu0 0
          %923 = vmatpush1.bf16.xpose.msra.mxu0 0
          %924 = vmatprep.subr.bf16.mxu0 0
          %925 = vmatpush1.bf16.xpose.msra.mxu0 0
          %926 = vmatprep.subr.bf16.mxu0 0
          %927 = vmatpush1.bf16.xpose.msra.mxu0 0
          %928 = vmatprep.subr.bf16.mxu0 0
          %929 = vmatpush1.bf16.xpose.msra.mxu0 0
          %930 = vmatprep.subr.bf16.mxu0 0
          %931 = vmatpush1.bf16.xpose.msra.mxu0 0
          %932 = vmatprep.subr.bf16.mxu0 0
          %933 = vmatpush1.bf16.xpose.msra.mxu0 0
          %934 = vmatprep.subr.bf16.mxu0 0
          %935 = vmatpush1.bf16.xpose.msra.mxu0 0
          %936 = vmatprep.subr.bf16.mxu0 0
          %937 = vmatpush1.bf16.xpose.msra.mxu0 0
          %938 = vmatprep.subr.bf16.mxu0 0
          %939 = vmatpush1.bf16.xpose.msra.mxu0 0
          %940 = vmatprep.subr.bf16.mxu0 0
          %941 = vmatpush1.bf16.xpose.msra.mxu0 0
          %942 = vmatprep.subr.bf16.mxu0 0
          %943 = vmatpush1.bf16.xpose.msra.mxu0 0
          %944 = vmatprep.subr.bf16.mxu0 0
          %945 = vmatpush1.bf16.xpose.msra.mxu0 0
          %946 = vmatprep.subr.bf16.mxu0 0
          %947 = vmatpush1.bf16.xpose.msra.mxu0 0
          %948 = vmatprep.subr.bf16.mxu0 0
          %949 = vmatpush1.bf16.xpose.msra.mxu0 0
          %950 = vmatprep.mubr.bf16.mxu0 0
          %951 = vmatmul.mubr.bf16.gmra.mrb[0].mxu0 %v913
          %v952 = vpop.f32.mrb[0].mxu0
          %v953 = vadd.f32 0.0, %v952
          %v954 = vpop.f32.mrb[0].mxu0
          %v955 = vpop.f32.mrb[0].mxu0
          %v956 = vpop.f32.mrb[0].mxu0
          %957 = vdwg.mxu0
          %v958 = vsel %vm670, %v953, -inf
          %959 = vmax.xlane.f32.xlu0 %v958
          %v960 = vpop.xlane.xlu0 %959
          %v961 = vsub.f32 %v953, %v960
          %v962 = vmul.f32 %v961, 1.442695
          %v963 = vpow.pop %v962
          %v964 = vsel %vm670, %v963, 0.0
          %965 = vadd.xlane.f32.xlu0 %v964
          %v966 = vpop.xlane.xlu0 %965
          %v967 = vpack.c.bf16 %v963, %v963
          %968 = vrot.lane.b32.xlu0 %v907, 48
          %v969 = vpop.permute.xlu0 %968
          %v971 = vsel %vm670, %v967, 0
          %v974 = vsel %vm732, %v969, 0
          %976 = vmatprep.subr.bf16.mxu0 0
          %977 = vmatpush1.bf16.msra.mxu0 %v974
          %978 = vmatprep.subr.bf16.mxu0 0
          %979 = vmatpush1.bf16.msra.mxu0 0
          %980 = vmatprep.subr.bf16.mxu0 0
          %981 = vmatpush1.bf16.msra.mxu0 0
          %982 = vmatprep.subr.bf16.mxu0 0
          %983 = vmatpush1.bf16.msra.mxu0 0
          %984 = vmatprep.subr.bf16.mxu0 0
          %985 = vmatpush1.bf16.msra.mxu0 0
          %986 = vmatprep.subr.bf16.mxu0 0
          %987 = vmatpush1.bf16.msra.mxu0 0
          %988 = vmatprep.subr.bf16.mxu0 0
          %989 = vmatpush1.bf16.msra.mxu0 0
          %990 = vmatprep.subr.bf16.mxu0 0
          %991 = vmatpush1.bf16.msra.mxu0 0
          %992 = vmatprep.subr.bf16.mxu0 0
          %993 = vmatpush1.bf16.msra.mxu0 0
          %994 = vmatprep.subr.bf16.mxu0 0
          %995 = vmatpush1.bf16.msra.mxu0 0
          %996 = vmatprep.subr.bf16.mxu0 0
          %997 = vmatpush1.bf16.msra.mxu0 0
          %998 = vmatprep.subr.bf16.mxu0 0
          %999 = vmatpush1.bf16.msra.mxu0 0
          %1000 = vmatprep.subr.bf16.mxu0 0
          %1001 = vmatpush1.bf16.msra.mxu0 0
          %1002 = vmatprep.subr.bf16.mxu0 0
          %1003 = vmatpush1.bf16.msra.mxu0 0
          %1004 = vmatprep.subr.bf16.mxu0 0
          %1005 = vmatpush1.bf16.msra.mxu0 0
          %1006 = vmatprep.subr.bf16.mxu0 0
          %1007 = vmatpush1.bf16.msra.mxu0 0
          %1008 = vmatprep.mubr.bf16.mxu0 0
          %1009 = vmatmul.mubr.bf16.gmra.mrb[0].mxu0 %v971
          %v1010 = vpop.f32.mrb[0].mxu0
          %v1011 = vadd.f32 0.0, %v1010
          %v1012 = vpop.f32.mrb[0].mxu0
          %v1013 = vpop.f32.mrb[0].mxu0
          %v1014 = vpop.f32.mrb[0].mxu0
          %1015 = vdwg.mxu0
          %v1016 = vrcp.pop %v966
          %v1017 = vmul.f32 %v1011, %v1016
          %v1018 = vpack.c.bf16 %v1017, %v1017
          %v1020 = vunpack.c.l.b16 %v1018
          %v1021 = vpack.c.b16 %v1020, %v1020
          %1022 = vrot.lane.b32.xlu0 %v1021, 16
          %v1023 = vpop.permute.xlu0 %1022
          %vm1025 = vcmask 191616
          %1026 = vst.msk [vmem:[#allocation3] sm:$0xf] %vm1025, %v1023
          %v1027 = vld [vmem:[#allocation2] sm:$0xf]
          %v1029 = vunpack.c.l.b16 %v1027
          %v1030 = vpack.c.b16 %v1029, %v1029
          %1031 = vrot.lane.b32.xlu0 %v1030, 104
          %v1032 = vpop.permute.xlu0 %1031
          %1033 = vrot.lane.b32.xlu0 %v1030, 72
          %v1034 = vpop.permute.xlu0 %1033
          %v1036 = vsel %vm670, %v1032, 0
          %v1039 = vsel %vm670, %v1034, 0
          %1041 = vmatprep.subr.bf16.mxu0 0
          %1042 = vmatpush1.bf16.xpose.msra.mxu0 %v1039
          %1043 = vmatprep.subr.bf16.mxu0 0
          %1044 = vmatpush1.bf16.xpose.msra.mxu0 0
          %1045 = vmatprep.subr.bf16.mxu0 0
          %1046 = vmatpush1.bf16.xpose.msra.mxu0 0
          %1047 = vmatprep.subr.bf16.mxu0 0
          %1048 = vmatpush1.bf16.xpose.msra.mxu0 0
          %1049 = vmatprep.subr.bf16.mxu0 0
          %1050 = vmatpush1.bf16.xpose.msra.mxu0 0
          %1051 = vmatprep.subr.bf16.mxu0 0
          %1052 = vmatpush1.bf16.xpose.msra.mxu0 0
          %1053 = vmatprep.subr.bf16.mxu0 0
          %1054 = vmatpush1.bf16.xpose.msra.mxu0 0
          %1055 = vmatprep.subr.bf16.mxu0 0
          %1056 = vmatpush1.bf16.xpose.msra.mxu0 0
          %1057 = vmatprep.subr.bf16.mxu0 0
          %1058 = vmatpush1.bf16.xpose.msra.mxu0 0
          %1059 = vmatprep.subr.bf16.mxu0 0
          %1060 = vmatpush1.bf16.xpose.msra.mxu0 0
          %1061 = vmatprep.subr.bf16.mxu0 0
          %1062 = vmatpush1.bf16.xpose.msra.mxu0 0
          %1063 = vmatprep.subr.bf16.mxu0 0
          %1064 = vmatpush1.bf16.xpose.msra.mxu0 0
          %1065 = vmatprep.subr.bf16.mxu0 0
          %1066 = vmatpush1.bf16.xpose.msra.mxu0 0
          %1067 = vmatprep.subr.bf16.mxu0 0
          %1068 = vmatpush1.bf16.xpose.msra.mxu0 0
          %1069 = vmatprep.subr.bf16.mxu0 0
          %1070 = vmatpush1.bf16.xpose.msra.mxu0 0
          %1071 = vmatprep.subr.bf16.mxu0 0
          %1072 = vmatpush1.bf16.xpose.msra.mxu0 0
          %1073 = vmatprep.mubr.bf16.mxu0 0
          %1074 = vmatmul.mubr.bf16.gmra.mrb[0].mxu0 %v1036
          %v1075 = vpop.f32.mrb[0].mxu0
          %v1076 = vadd.f32 0.0, %v1075
          %v1077 = vpop.f32.mrb[0].mxu0
          %v1078 = vpop.f32.mrb[0].mxu0
          %v1079 = vpop.f32.mrb[0].mxu0
          %1080 = vdwg.mxu0
          %v1081 = vsel %vm670, %v1076, -inf
          %1082 = vmax.xlane.f32.xlu0 %v1081
          %v1083 = vpop.xlane.xlu0 %1082
          %v1084 = vsub.f32 %v1076, %v1083
          %v1085 = vmul.f32 %v1084, 1.442695
          %v1086 = vpow.pop %v1085
          %v1087 = vsel %vm670, %v1086, 0.0
          %1088 = vadd.xlane.f32.xlu0 %v1087
          %v1089 = vpop.xlane.xlu0 %1088
          %v1090 = vpack.c.bf16 %v1086, %v1086
          %1091 = vrot.lane.b32.xlu0 %v1030, 40
          %v1092 = vpop.permute.xlu0 %1091
          %v1094 = vsel %vm670, %v1090, 0
          %v1097 = vsel %vm732, %v1092, 0
          %1099 = vmatprep.subr.bf16.mxu0 0
          %1100 = vmatpush1.bf16.msra.mxu0 %v1097
          %1101 = vmatprep.subr.bf16.mxu0 0
          %1102 = vmatpush1.bf16.msra.mxu0 0
          %1103 = vmatprep.subr.bf16.mxu0 0
          %1104 = vmatpush1.bf16.msra.mxu0 0
          %1105 = vmatprep.subr.bf16.mxu0 0
          %1106 = vmatpush1.bf16.msra.mxu0 0
          %1107 = vmatprep.subr.bf16.mxu0 0
          %1108 = vmatpush1.bf16.msra.mxu0 0
          %1109 = vmatprep.subr.bf16.mxu0 0
          %1110 = vmatpush1.bf16.msra.mxu0 0
          %1111 = vmatprep.subr.bf16.mxu0 0
          %1112 = vmatpush1.bf16.msra.mxu0 0
          %1113 = vmatprep.subr.bf16.mxu0 0
          %1114 = vmatpush1.bf16.msra.mxu0 0
          %1115 = vmatprep.subr.bf16.mxu0 0
          %1116 = vmatpush1.bf16.msra.mxu0 0
          %1117 = vmatprep.subr.bf16.mxu0 0
          %1118 = vmatpush1.bf16.msra.mxu0 0
          %1119 = vmatprep.subr.bf16.mxu0 0
          %1120 = vmatpush1.bf16.msra.mxu0 0
          %1121 = vmatprep.subr.bf16.mxu0 0
          %1122 = vmatpush1.bf16.msra.mxu0 0
          %1123 = vmatprep.subr.bf16.mxu0 0
          %1124 = vmatpush1.bf16.msra.mxu0 0
          %1125 = vmatprep.subr.bf16.mxu0 0
          %1126 = vmatpush1.bf16.msra.mxu0 0
          %1127 = vmatprep.subr.bf16.mxu0 0
          %1128 = vmatpush1.bf16.msra.mxu0 0
          %1129 = vmatprep.subr.bf16.mxu0 0
          %1130 = vmatpush1.bf16.msra.mxu0 0
          %1131 = vmatprep.mubr.bf16.mxu0 0
          %1132 = vmatmul.mubr.bf16.gmra.mrb[0].mxu0 %v1094
          %v1133 = vpop.f32.mrb[0].mxu0
          %v1134 = vadd.f32 0.0, %v1133
          %v1135 = vpop.f32.mrb[0].mxu0
          %v1136 = vpop.f32.mrb[0].mxu0
          %v1137 = vpop.f32.mrb[0].mxu0
          %1138 = vdwg.mxu0
          %v1139 = vrcp.pop %v1089
          %v1140 = vmul.f32 %v1134, %v1139
          %v1141 = vpack.c.bf16 %v1140, %v1140
          %v1143 = vunpack.c.l.b16 %v1141
          %v1144 = vpack.c.b16 %v1143, %v1143
          %1145 = vrot.lane.b32.xlu0 %v1144, 24
          %v1146 = vpop.permute.xlu0 %1145
          %vm1148 = vcmask 257216
          %1149 = vst.msk [vmem:[#allocation3] sm:$0xf] %vm1148, %v1146
          %v1150 = vld [vmem:[#allocation3] sm:$0xf]
          %v1151 = vld [vmem:[%s7] sm:$0xf]
          %v1152 = vld [vmem:[%s7 + $0x4] sm:$0xf]
          %v1153 = vld [vmem:[%s7 + $0x8] sm:$0xf]
          %v1154 = vld [vmem:[%s7 + $0xc] sm:$0xf]
          %v1155 = vld [vmem:[#allocation11] sm:$0x1]
          %v1157 = vlaneseq
          %v1158 = vshrl.u32 %v1157, 7
          %v1159 = vsub.s32 0, %v1158
          %v1160 = vrot.slane %v1155, %v1159
          %v1166 = vunpack.c.l.b16 %v1151
          %v1167 = vunpack.c.l.b16 %v1152
          %v1168 = vunpack.c.l.b16 %v1153
          %v1169 = vunpack.c.l.b16 %v1154
          %v1170 = vpack.c.b16 %v1167, %v1166
          %v1171 = vpack.c.b16 %v1169, %v1168
          %v1175 = vsel %vm560, %v1150, 0
          %1177 = vmatprep.subr.bf16.mxu0 0
          %1178 = vmatpush1.bf16.msra.mxu0 %v1170
          %1179 = vmatprep.subr.bf16.mxu0 0
          %1180 = vmatpush1.bf16.msra.mxu0 %v1171
          %1181 = vmatprep.subr.bf16.mxu0 0
          %1182 = vmatpush1.bf16.msra.mxu0 0
          %1183 = vmatprep.subr.bf16.mxu0 0
          %1184 = vmatpush1.bf16.msra.mxu0 0
          %1185 = vmatprep.subr.bf16.mxu0 0
          %1186 = vmatpush1.bf16.msra.mxu0 0
          %1187 = vmatprep.subr.bf16.mxu0 0
          %1188 = vmatpush1.bf16.msra.mxu0 0
          %1189 = vmatprep.subr.bf16.mxu0 0
          %1190 = vmatpush1.bf16.msra.mxu0 0
          %1191 = vmatprep.subr.bf16.mxu0 0
          %1192 = vmatpush1.bf16.msra.mxu0 0
          %1193 = vmatprep.subr.bf16.mxu0 0
          %1194 = vmatpush1.bf16.msra.mxu0 0
          %1195 = vmatprep.subr.bf16.mxu0 0
          %1196 = vmatpush1.bf16.msra.mxu0 0
          %1197 = vmatprep.subr.bf16.mxu0 0
          %1198 = vmatpush1.bf16.msra.mxu0 0
          %1199 = vmatprep.subr.bf16.mxu0 0
          %1200 = vmatpush1.bf16.msra.mxu0 0
          %1201 = vmatprep.subr.bf16.mxu0 0
          %1202 = vmatpush1.bf16.msra.mxu0 0
          %1203 = vmatprep.subr.bf16.mxu0 0
          %1204 = vmatpush1.bf16.msra.mxu0 0
          %1205 = vmatprep.subr.bf16.mxu0 0
          %1206 = vmatpush1.bf16.msra.mxu0 0
          %1207 = vmatprep.subr.bf16.mxu0 0
          %1208 = vmatpush1.bf16.msra.mxu0 0
          %1209 = vmatprep.mubr.bf16.mxu0 0
          %1210 = vmatmul.mubr.bf16.gmra.mrb[0].mxu0 %v1175
          %v1211 = vpop.f32.mrb[0].mxu0
          %v1212 = vadd.f32 %v1160, %v1211
          %v1213 = vpop.f32.mrb[0].mxu0
          %v1214 = vpop.f32.mrb[0].mxu0
          %v1215 = vpop.f32.mrb[0].mxu0
          %1216 = vdwg.mxu0
          %v1217 = vld [vmem:[#allocation4] sm:$0xff]
          %v1218 = vadd.f32 %v1217, %v1212
          %v1219 = vld [vmem:[#allocation5] sm:$0x1]
          %v1220 = vld [vmem:[#allocation8] sm:$0x1]
          %v1221 = vsel %vm560, %v1218, 0.0
          %1222 = vadd.xlane.f32.xlu0 %v1221
          %v1223 = vpop.xlane.xlu0 %1222
          %v1224 = vmul.f32 %v1223, %v564
          %v1225 = vsub.f32 %v1218, %v1224
          %v1226 = vmul.f32 %v1225, %v1225
          %v1227 = vsel %vm560, %v1226, 0.0
          %1228 = vadd.xlane.f32.xlu0 %v1227
          %v1229 = vpop.xlane.xlu0 %1228
          %v1230 = vmul.f32 %v1229, %v564
          %v1231 = vadd.f32 %v1230, 1e-06
          %v1232 = vrsqrt.pop %v1231
          %v1233 = vmul.f32 %v1225, %v1232
          %v1235 = vlaneseq
          %v1236 = vshrl.u32 %v1235, 7
          %v1237 = vsub.s32 0, %v1236
          %v1238 = vrot.slane %v1219, %v1237
          %v1240 = vmul.f32 %v1233, %v1238
          %v1242 = vlaneseq
          %v1243 = vshrl.u32 %v1242, 7
          %v1244 = vsub.s32 0, %v1243
          %v1245 = vrot.slane %v1220, %v1244
          %v1247 = vadd.f32 %v1240, %v1245
          %1248 = vst.msk [vmem:[#allocation4] sm:$0xff] %vm560, %v1247
          %1249 = vst.msk [vmem:[%s534] sm:$0xff] %vm560, 0.0
        $region92: #{tpu_custom_call.1} parent=71 // pred_fallthru
          _
        %v1250 = vld [vmem:[#allocation4] sm:$0xff]
        %v1251 = vpack.c.bf16 %v1250, %v1250
        %v1252 = vld [vmem:[%s542] sm:$0xf]
        %v1253 = vld [vmem:[%s542 + $0x4] sm:$0xf]
        %v1254 = vld [vmem:[%s542 + $0x8] sm:$0xf]
        %v1255 = vld [vmem:[%s542 + $0xc] sm:$0xf]
        %v1256 = vld [vmem:[%s545] sm:$0x1]
        %v1258 = vlaneseq
        %v1259 = vshrl.u32 %v1258, 7
        %v1260 = vsub.s32 0, %v1259
        %v1261 = vrot.slane %v1256, %v1260
        %v1267 = vunpack.c.l.b16 %v1252
        %v1268 = vunpack.c.l.b16 %v1253
        %v1269 = vunpack.c.l.b16 %v1254
        %v1270 = vunpack.c.l.b16 %v1255
        %v1271 = vpack.c.b16 %v1268, %v1267
        %v1272 = vpack.c.b16 %v1270, %v1269
        %vm1275 = vcmask 261120
        %v1277 = vsel %vm1275, %v1251, 0
        %1279 = vmatprep.subr.bf16.mxu0 0
        %1280 = vmatpush1.bf16.msra.mxu0 %v1271
        %1281 = vmatprep.subr.bf16.mxu0 0
        %1282 = vmatpush1.bf16.msra.mxu0 %v1272
        %1283 = vmatprep.subr.bf16.mxu0 0
        %1284 = vmatpush1.bf16.msra.mxu0 0
        %1285 = vmatprep.subr.bf16.mxu0 0
        %1286 = vmatpush1.bf16.msra.mxu0 0
        %1287 = vmatprep.subr.bf16.mxu0 0
        %1288 = vmatpush1.bf16.msra.mxu0 0
        %1289 = vmatprep.subr.bf16.mxu0 0
        %1290 = vmatpush1.bf16.msra.mxu0 0
        %1291 = vmatprep.subr.bf16.mxu0 0
        %1292 = vmatpush1.bf16.msra.mxu0 0
        %1293 = vmatprep.subr.bf16.mxu0 0
        %1294 = vmatpush1.bf16.msra.mxu0 0
        %1295 = vmatprep.subr.bf16.mxu0 0
        %1296 = vmatpush1.bf16.msra.mxu0 0
        %1297 = vmatprep.subr.bf16.mxu0 0
        %1298 = vmatpush1.bf16.msra.mxu0 0
        %1299 = vmatprep.subr.bf16.mxu0 0
        %1300 = vmatpush1.bf16.msra.mxu0 0
        %1301 = vmatprep.subr.bf16.mxu0 0
        %1302 = vmatpush1.bf16.msra.mxu0 0
        %1303 = vmatprep.subr.bf16.mxu0 0
        %1304 = vmatpush1.bf16.msra.mxu0 0
        %1305 = vmatprep.subr.bf16.mxu0 0
        %1306 = vmatpush1.bf16.msra.mxu0 0
        %1307 = vmatprep.subr.bf16.mxu0 0
        %1308 = vmatpush1.bf16.msra.mxu0 0
        %1309 = vmatprep.subr.bf16.mxu0 0
        %1310 = vmatpush1.bf16.msra.mxu0 0
        %1311 = vmatprep.mubr.bf16.mxu0 0
        %1312 = vmatmul.mubr.bf16.gmra.mrb[0].mxu0 %v1277
        %v1313 = vpop.f32.mrb[0].mxu0
        %v1314 = vadd.f32 %v1261, %v1313
        %v1315 = vpop.f32.mrb[0].mxu0
        %v1316 = vpop.f32.mrb[0].mxu0
        %v1317 = vpop.f32.mrb[0].mxu0
        %1318 = vdwg.mxu0
        %v1319 = vmul.f32 %v1314, 0.5
        %v1320 = vmul.f32 %v1314, 0.70710677
        %v1321 = verf.f32.pop %v1320
        %v1322 = vadd.f32 %v1321, 1.0
        %v1323 = vmul.f32 %v1319, %v1322
        %v1324 = vpack.c.bf16 %v1323, %v1323
        %v1325 = vld [vmem:[%s550] sm:$0xf]
        %v1326 = vld [vmem:[%s550 + $0x4] sm:$0xf]
        %v1327 = vld [vmem:[%s550 + $0x8] sm:$0xf]
        %v1328 = vld [vmem:[%s550 + $0xc] sm:$0xf]
        %v1329 = vld [vmem:[%s550 + $0x10] sm:$0xf]
        %v1330 = vld [vmem:[%s550 + $0x14] sm:$0xf]
        %v1331 = vld [vmem:[%s550 + $0x18] sm:$0xf]
        %v1332 = vld [vmem:[%s550 + $0x1c] sm:$0xf]
        %v1341 = vunpack.c.l.b16 %v1325
        %v1342 = vunpack.c.l.b16 %v1326
        %v1343 = vunpack.c.l.b16 %v1327
        %v1344 = vunpack.c.l.b16 %v1328
        %v1345 = vunpack.c.l.b16 %v1329
        %v1346 = vunpack.c.l.b16 %v1330
        %v1347 = vunpack.c.l.b16 %v1331
        %v1348 = vunpack.c.l.b16 %v1332
        %v1349 = vpack.c.b16 %v1342, %v1341
        %v1350 = vpack.c.b16 %v1344, %v1343
        %v1351 = vpack.c.b16 %v1346, %v1345
        %v1352 = vpack.c.b16 %v1348, %v1347
        %vm1357 = vcmask 523264
        %v1359 = vsel %vm1357, %v1324, 0
        %1361 = vmatprep.subr.bf16.mxu0 0
        %1362 = vmatpush1.bf16.msra.mxu0 %v1349
        %1363 = vmatprep.subr.bf16.mxu0 0
        %1364 = vmatpush1.bf16.msra.mxu0 %v1350
        %1365 = vmatprep.subr.bf16.mxu0 0
        %1366 = vmatpush1.bf16.msra.mxu0 %v1351
        %1367 = vmatprep.subr.bf16.mxu0 0
        %1368 = vmatpush1.bf16.msra.mxu0 %v1352
        %1369 = vmatprep.subr.bf16.mxu0 0
        %1370 = vmatpush1.bf16.msra.mxu0 0
        %1371 = vmatprep.subr.bf16.mxu0 0
        %1372 = vmatpush1.bf16.msra.mxu0 0
        %1373 = vmatprep.subr.bf16.mxu0 0
        %1374 = vmatpush1.bf16.msra.mxu0 0
        %1375 = vmatprep.subr.bf16.mxu0 0
        %1376 = vmatpush1.bf16.msra.mxu0 0
        %1377 = vmatprep.subr.bf16.mxu0 0
        %1378 = vmatpush1.bf16.msra.mxu0 0
        %1379 = vmatprep.subr.bf16.mxu0 0
        %1380 = vmatpush1.bf16.msra.mxu0 0
        %1381 = vmatprep.subr.bf16.mxu0 0
        %1382 = vmatpush1.bf16.msra.mxu0 0
        %1383 = vmatprep.subr.bf16.mxu0 0
        %1384 = vmatpush1.bf16.msra.mxu0 0
        %1385 = vmatprep.subr.bf16.mxu0 0
        %1386 = vmatpush1.bf16.msra.mxu0 0
        %1387 = vmatprep.subr.bf16.mxu0 0
        %1388 = vmatpush1.bf16.msra.mxu0 0
        %1389 = vmatprep.subr.bf16.mxu0 0
        %1390 = vmatpush1.bf16.msra.mxu0 0
        %1391 = vmatprep.subr.bf16.mxu0 0
        %1392 = vmatpush1.bf16.msra.mxu0 0
        %1393 = vmatprep.mubr.bf16.mxu0 0
        %1394 = vmatmul.mubr.bf16.gmra.mrb[0].mxu0 %v1359
        %v1395 = vpop.f32.mrb[0].mxu0
        %v1396 = vadd.f32 0.0, %v1395
        %v1397 = vpop.f32.mrb[0].mxu0
        %v1398 = vpop.f32.mrb[0].mxu0
        %v1399 = vpop.f32.mrb[0].mxu0
        %1400 = vdwg.mxu0
        %v1401 = vld [vmem:[%s534] sm:$0xff]
        %v1402 = vadd.f32 %v1401, %v1396
        %1403 = vst.msk [vmem:[%s534] sm:$0xff] %vm1275, %v1402
        // Predicated region
        $region93: #{tpu_custom_call.1} parent=71 // pred_check
          %p1404 = pneg %p553
        $region94: #{tpu_custom_call.1} parent=71 // pred_check_branch
          %1406 = sbr.rel (%p1404) target = $region96
        $region95: #{tpu_custom_call.1} parent=71 // pred_region
          %v1407 = vld [vmem:[%s534] sm:$0xff]
          %v1408 = vld [vmem:[#allocation4] sm:$0xff]
          %v1409 = vadd.f32 %v1407, %v1408
          %v1410 = vld [vmem:[%s12] sm:$0x1]
          %v1412 = vlaneseq
          %v1413 = vshrl.u32 %v1412, 7
          %v1414 = vsub.s32 0, %v1413
          %v1415 = vrot.slane %v1410, %v1414
          %v1417 = vadd.f32 %v1409, %v1415
          %1418 = vst.msk [vmem:[%s534] sm:$0xff] %vm1275, %v1417
        $region96: #{tpu_custom_call.1} parent=71 // pred_fallthru
          _
        %s1419 = sand.u32 %s343, 1
        %s1420 = scalar_lea.sflag [#allocation7], %s1419
        %s1421 = sand.u32 %s343, 1
        %s1422 = smul.addr %s1421, 8
        %s1423 = scalar_lea.vmem [#allocation13], %s1422
        // Predicated region
        $region97: #{tpu_custom_call.1} parent=71 // pred_check
          %p1424 = pneg %p353
        $region98: #{tpu_custom_call.1} parent=71 // pred_check_branch
          %1426 = sbr.rel (%p1424) target = $region100
        $region99: #{tpu_custom_call.1} parent=71 // pred_region
          %s1428 = ssub.s32 128, 128
          %1429 = vsyncadd %s1420, %s1428
          %s1430 = smul.addr %s34, 128
          %s1431 = scalar_lea.hbm %s13, %s1430
          %s1433 = sshll.u32 %s1423, 4
          %s1434 = int_to_ptr.vmem [resolvable:$true] %s1433
          %1436 = dma.vmem_to_hbm [thread:$0]  %s1434, 128, %s1431, %s1420
        $region100: #{tpu_custom_call.1} parent=71 // pred_fallthru
          _
      $region72: #{tpu_custom_call.1} parent=5 // pred_fallthru
        _
      %p1437 = scmp.le.s32.totalorder 2, %s25
      // Predicated region
      $region101: #{tpu_custom_call.1} parent=5 // pred_check
        %p1438 = pneg %p1437
      $region102: #{tpu_custom_call.1} parent=5 // pred_check_branch
        %1440 = sbr.rel (%p1438) target = $region104
      $region103: #{tpu_custom_call.1} parent=5 // pred_region
        %s1441 = ssub.s32 %s25, 2
        // Predicated region
        $region105: #{tpu_custom_call.1} parent=103 // pred_check
          %p1442 = pneg %p359
        $region106: #{tpu_custom_call.1} parent=103 // pred_check_branch
          %1444 = sbr.rel (%p1442) target = $region108
        $region107: #{tpu_custom_call.1} parent=103 // pred_region
          %s1445 = sand.u32 %s344, 1
          %s1446 = scalar_lea.sflag [#allocation7], %s1445
          %s1447 = sand.u32 %s344, 1
          %s1448 = smul.addr %s1447, 8
          %s1449 = scalar_lea.vmem [#allocation13], %s1448
          %1450 = dma.done %s1446, 128
        $region108: #{tpu_custom_call.1} parent=103 // pred_fallthru
          _
      $region104: #{tpu_custom_call.1} parent=5 // pred_fallthru
        _
    $region6: #{tpu_custom_call.1} parent=1 // loop_footer
      %s29 = sadd.s32 1, %s25
    $region7: #{tpu_custom_call.1} parent=1 // loop_footer_branch
      %24 = sbr.rel target = $region3
    $region8: #{tpu_custom_call.1} parent=1 // loop_exit
      _
    %1451 = vsyncpa [#allocation6], 1
    %s1452 = scalar_lea.sflag [#allocation6], 1
    %1453 = vsyncpa %s1452, 1
    %1454 = vsyncpa [#allocation9], 1
    %1455 = vsyncpa [#allocation12], 1
    %1456 = vsyncpa [#allocation7], 1
    %s1457 = scalar_lea.sflag [#allocation7], 1
    %1458 = vsyncpa %s1457, 1

// kernel: tpu_custom_call.1
$region0: #{tpu_custom_call.1}
  #allocation0 [shape = 'u32[]', space=smem, size = 0x4, offset = 0x4, fixed_abs, tag = 'smem constant byte address 0x4 - core index']
  #allocation1 [shape = 'u32[144,128]{1,0:T(1,128)}', space=vmem, size = 0x12000, scoped, tag = 'internal scratch']
  #allocation2 [shape = 'bf16[8,96]{1,0:T(8,128)(2,1)}', space=vmem, size = 0x800, scoped, tag = 'scratch operand']
  #allocation3 [shape = 'bf16[8,32]{1,0:T(8,128)(2,1)}', space=vmem, size = 0x800, scoped, tag = 'scratch operand']
  #allocation4 [shape = 'f32[8,32]{1,0:T(8,128)}', space=vmem, size = 0x1000, scoped, tag = 'scratch operand']
  %s0 = inlined_call_operand.vmem [shape: f32[2,8,32], index: 0, kind: input, shape index: {}]
  %s1 = inlined_call_operand.vmem [shape: f32[1,32], index: 1, kind: input, shape index: {}]
  %s2 = inlined_call_operand.vmem [shape: f32[1,32], index: 2, kind: input, shape index: {}]
  %s3 = inlined_call_operand.hbm [shape: f32[1,32], index: 3, kind: input, shape index: {}]
  %s4 = inlined_call_operand.hbm [shape: f32[1,32], index: 4, kind: input, shape index: {}]
  %s5 = inlined_call_operand.vmem [shape: bf16[32,96], index: 5, kind: input, shape index: {}]
  %s6 = inlined_call_operand.hbm [shape: f32[1,96], index: 6, kind: input, shape index: {}]
  %s7 = inlined_call_operand.vmem [shape: bf16[32,32], index: 7, kind: input, shape index: {}]
  %s8 = inlined_call_operand.hbm [shape: f32[1,32], index: 8, kind: input, shape index: {}]
  %s9 = inlined_call_operand.vmem [shape: bf16[32,64], index: 9, kind: input, shape index: {}]
  %s10 = inlined_call_operand.vmem [shape: f32[1,64], index: 10, kind: input, shape index: {}]
  %s11 = inlined_call_operand.vmem [shape: bf16[64,32], index: 11, kind: input, shape index: {}]
  %s12 = inlined_call_operand.vmem [shape: f32[1,32], index: 12, kind: input, shape index: {}]
  %s13 = inlined_call_operand.hbm [shape: f32[2,8,32], index: 13, kind: output, shape index: {}]
  %s14 = sld [smem:[#allocation0]]
  $region109: #{tpu_custom_call.1} parent=0
    _
  %s16 = ssub.s32 1, %s14
  %s17 = scalar_select 0, %s16, %s14
  $region1: #{tpu_custom_call.1} parent=0
    #allocation5 [shape = 'u8[512]{0}', space=vmem, size = 0x400, scoped, tag = 'input window, operand 3, single buffered']
    #allocation6 [shape = 's32[2]{0}', space=sflag, size = 0x8, scoped, tag = 'scoped memory for tpu_custom_call.1']
    #allocation7 [shape = 's32[2]{0}', space=sflag, size = 0x8, scoped, tag = 'scoped memory for tpu_custom_call.1']
    #allocation8 [shape = 'u8[512]{0}', space=vmem, size = 0x400, scoped, tag = 'input window, operand 4, single buffered']
    #allocation9 [shape = 's32[1]{0}', space=sflag, size = 0x4, scoped, tag = 'scoped memory for tpu_custom_call.1']
    #allocation10 [shape = 'u8[512]{0}', space=vmem, size = 0x400, scoped, tag = 'input window, operand 6, single buffered']
    #allocation11 [shape = 'u8[512]{0}', space=vmem, size = 0x400, scoped, tag = 'input window, operand 8, single buffered']
    #allocation12 [shape = 's32[1]{0}', space=sflag, size = 0x4, scoped, tag = 'scoped memory for tpu_custom_call.1']
    #allocation13 [shape = 'u8[8192]{0}', space=vmem, size = 0x2000, scoped, tag = 'output window, operand 0']
    %18 = vsyncpa [#allocation6], 0
    %19 = vsyncpa [#allocation9], 0
    %20 = vsyncpa [#allocation12], 0
    %21 = vsyncpa [#allocation7], 0
    %s22 = scalar_lea.sflag [#allocation7], 1
    %23 = vsyncpa %s22, 0
    loop: start=0, step=1, limit=4
    $region2: #{tpu_custom_call.1} parent=1 // loop_pre_header
      _
    $region3: #{tpu_custom_call.1} parent=1 // loop_header
      %s25 = sphi 0, %s29
      %p26 = scmp.ge.s32.totalorder %s25, 4
      %s32 = sphi 0, %s44
      %s33 = sphi 0, %s40
      %s34 = sphi 0, %s32
      %s35 = sphi 0, %s33
      %s36 = sphi 0, %s34
      %s37 = sphi 0, %s35
      %s47 = sphi 0, %s49
      %s50 = sphi 0, %s47
      %s51 = sphi 0, %s50
      %s67 = sphi 0, %s51
      %s71 = sphi 0, %s71
      %s73 = sphi 0, %s71
      %s74 = sphi 0, %s73
      %s88 = sphi 0, %s74
      %s92 = sphi 0, %s92
      %s94 = sphi 0, %s92
      %s95 = sphi 0, %s94
      %s109 = sphi 0, %s95
      %s113 = sphi 0, %s113
      %s115 = sphi 0, %s113
      %s116 = sphi 0, %s115
      %s130 = sphi 0, %s116
      %s134 = sphi 0, %s134
      %s136 = sphi 0, %s134
      %s137 = sphi 0, %s136
      %s151 = sphi 0, %s137
      %s155 = sphi 0, %s155
      %s157 = sphi 0, %s155
      %s158 = sphi 0, %s157
      %s172 = sphi 0, %s158
      %s176 = sphi 0, %s176
      %s178 = sphi 0, %s176
      %s179 = sphi 0, %s178
      %s193 = sphi 0, %s179
      %s197 = sphi 0, %s197
      %s199 = sphi 0, %s197
      %s200 = sphi 0, %s199
      %s214 = sphi 0, %s200
      %s218 = sphi 0, %s218
      %s220 = sphi 0, %s218
      %s221 = sphi 0, %s220
      %s235 = sphi 0, %s221
      %s241 = sphi 0, %s243
      %s244 = sphi 0, %s241
      %s245 = sphi 0, %s244
      %s261 = sphi 0, %s245
      %s267 = sphi 0, %s269
      %s270 = sphi 0, %s267
      %s271 = sphi 0, %s270
      %s287 = sphi 0, %s271
      %s293 = sphi 0, %s295
      %s296 = sphi 0, %s293
      %s297 = sphi 0, %s296
      %s313 = sphi 0, %s297
      %s317 = sphi 0, %s317
      %s319 = sphi 0, %s317
      %s320 = sphi 0, %s319
      %s334 = sphi 0, %s320
      %s340 = sphi 0, %s342
      %s343 = sphi 0, %s340
      %s344 = sphi 0, %s343
      %s360 = sphi 0, %s344
    $region4: #{tpu_custom_call.1} parent=1 // loop_header_branch
      %28 = sbr.rel (%p26) target = $region8
    $region5: #{tpu_custom_call.1} parent=1 // loop_body
      %s30 = ssub.s32 %s25, 1
      %s31 = ssub.s32 %s25, 2
      %s38 = sadd.s32 1, %s33
      %p39 = scmp.ge.s32.totalorder %s38, 1
      %s40 = scalar_select %p39, 0, %s38
      %s41 = sadd.s32 1, %s32
      %s42 = scalar_select %p39, %s41, %s32
      %p43 = scmp.ge.s32.totalorder %s42, 2
      %s44 = scalar_select %p43, 0, %s42
      %s45 = ssub.s32 %s32, %s44
      %p46 = scmp.eq.s32.totalorder %s45, 0
      %s48 = sadd.s32 %s47, 1
      %s49 = scalar_select %p46, %s47, %s48
      %p52 = pneg %p46
      %p53 = scmp.eq.s32.totalorder %s25, 1
      %p54 = por %p52, %p53
      %p55 = scmp.ne.s32.totalorder %s47, %s50
      %p56 = scmp.eq.s32.totalorder %s25, 0
      %p57 = por %p55, %p56
      %p58 = scmp.ne.s32.totalorder %s47, %s50
      %p59 = scmp.eq.s32.totalorder %s30, 1
      %p60 = por %p58, %p59
      %p61 = scmp.ne.s32.totalorder %s50, %s51
      %p62 = scmp.eq.s32.totalorder %s30, 0
      %p63 = por %p61, %p62
      %p64 = scmp.ne.s32.totalorder %s50, %s51
      %p65 = scmp.eq.s32.totalorder %s31, 1
      %p66 = por %p64, %p65
      %p68 = scmp.ne.s32.totalorder %s51, %s67
      %p69 = scmp.eq.s32.totalorder %s31, 0
      %p70 = por %p68, %p69
      %s72 = sadd.s32 %s71, 1
      %p75 = scmp.eq.s32.totalorder %s25, 1
      %p76 = scmp.ne.s32.totalorder %s71, %s73
      %p77 = scmp.eq.s32.totalorder %s25, 0
      %p78 = por %p76, %p77
      %p79 = scmp.ne.s32.totalorder %s71, %s73
      %p80 = scmp.eq.s32.totalorder %s30, 1
      %p81 = por %p79, %p80
      %p82 = scmp.ne.s32.totalorder %s73, %s74
      %p83 = scmp.eq.s32.totalorder %s30, 0
      %p84 = por %p82, %p83
      %p85 = scmp.ne.s32.totalorder %s73, %s74
      %p86 = scmp.eq.s32.totalorder %s31, 1
      %p87 = por %p85, %p86
      %p89 = scmp.ne.s32.totalorder %s74, %s88
      %p90 = scmp.eq.s32.totalorder %s31, 0
      %p91 = por %p89, %p90
      %s93 = sadd.s32 %s92, 1
      %p96 = scmp.eq.s32.totalorder %s25, 1
      %p97 = scmp.ne.s32.totalorder %s92, %s94
      %p98 = scmp.eq.s32.totalorder %s25, 0
      %p99 = por %p97, %p98
      %p100 = scmp.ne.s32.totalorder %s92, %s94
      %p101 = scmp.eq.s32.totalorder %s30, 1
      %p102 = por %p100, %p101
      %p103 = scmp.ne.s32.totalorder %s94, %s95
      %p104 = scmp.eq.s32.totalorder %s30, 0
      %p105 = por %p103, %p104
      %p106 = scmp.ne.s32.totalorder %s94, %s95
      %p107 = scmp.eq.s32.totalorder %s31, 1
      %p108 = por %p106, %p107
      %p110 = scmp.ne.s32.totalorder %s95, %s109
      %p111 = scmp.eq.s32.totalorder %s31, 0
      %p112 = por %p110, %p111
      %s114 = sadd.s32 %s113, 1
      %p117 = scmp.eq.s32.totalorder %s25, 1
      %p118 = scmp.ne.s32.totalorder %s113, %s115
      %p119 = scmp.eq.s32.totalorder %s25, 0
      %p120 = por %p118, %p119
      %p121 = scmp.ne.s32.totalorder %s113, %s115
      %p122 = scmp.eq.s32.totalorder %s30, 1
      %p123 = por %p121, %p122
      %p124 = scmp.ne.s32.totalorder %s115, %s116
      %p125 = scmp.eq.s32.totalorder %s30, 0
      %p126 = por %p124, %p125
      %p127 = scmp.ne.s32.totalorder %s115, %s116
      %p128 = scmp.eq.s32.totalorder %s31, 1
      %p129 = por %p127, %p128
      %p131 = scmp.ne.s32.totalorder %s116, %s130
      %p132 = scmp.eq.s32.totalorder %s31, 0
      %p133 = por %p131, %p132
      %s135 = sadd.s32 %s134, 1
      %p138 = scmp.eq.s32.totalorder %s25, 1
      %p139 = scmp.ne.s32.totalorder %s134, %s136
      %p140 = scmp.eq.s32.totalorder %s25, 0
      %p141 = por %p139, %p140
      %p142 = scmp.ne.s32.totalorder %s134, %s136
      %p143 = scmp.eq.s32.totalorder %s30, 1
      %p144 = por %p142, %p143
      %p145 = scmp.ne.s32.totalorder %s136, %s137
      %p146 = scmp.eq.s32.totalorder %s30, 0
      %p147 = por %p145, %p146
      %p148 = scmp.ne.s32.totalorder %s136, %s137
      %p149 = scmp.eq.s32.totalorder %s31, 1
      %p150 = por %p148, %p149
      %p152 = scmp.ne.s32.totalorder %s137, %s151
      %p153 = scmp.eq.s32.totalorder %s31, 0
      %p154 = por %p152, %p153
      %s156 = sadd.s32 %s155, 1
      %p159 = scmp.eq.s32.totalorder %s25, 1
      %p160 = scmp.ne.s32.totalorder %s155, %s157
      %p161 = scmp.eq.s32.totalorder %s25, 0
      %p162 = por %p160, %p161
      %p163 = scmp.ne.s32.totalorder %s155, %s157
      %p164 = scmp.eq.s32.totalorder %s30, 1
      %p165 = por %p163, %p164
      %p166 = scmp.ne.s32.totalorder %s157, %s158
      %p167 = scmp.eq.s32.totalorder %s30, 0
      %p168 = por %p166, %p167
      %p169 = scmp.ne.s32.totalorder %s157, %s158
      %p170 = scmp.eq.s32.totalorder %s31, 1
      %p171 = por %p169, %p170
      %p173 = scmp.ne.s32.totalorder %s158, %s172
      %p174 = scmp.eq.s32.totalorder %s31, 0
      %p175 = por %p173, %p174
      %s177 = sadd.s32 %s176, 1
      %p180 = scmp.eq.s32.totalorder %s25, 1
      %p181 = scmp.ne.s32.totalorder %s176, %s178
      %p182 = scmp.eq.s32.totalorder %s25, 0
      %p183 = por %p181, %p182
      %p184 = scmp.ne.s32.totalorder %s176, %s178
      %p185 = scmp.eq.s32.totalorder %s30, 1
      %p186 = por %p184, %p185
      %p187 = scmp.ne.s32.totalorder %s178, %s179
      %p188 = scmp.eq.s32.totalorder %s30, 0
      %p189 = por %p187, %p188
      %p190 = scmp.ne.s32.totalorder %s178, %s179
      %p191 = scmp.eq.s32.totalorder %s31, 1
      %p192 = por %p190, %p191
      %p194 = scmp.ne.s32.totalorder %s179, %s193
      %p195 = scmp.eq.s32.totalorder %s31, 0
      %p196 = por %p194, %p195
      %s198 = sadd.s32 %s197, 1
      %p201 = scmp.eq.s32.totalorder %s25, 1
      %p202 = scmp.ne.s32.totalorder %s197, %s199
      %p203 = scmp.eq.s32.totalorder %s25, 0
      %p204 = por %p202, %p203
      %p205 = scmp.ne.s32.totalorder %s197, %s199
      %p206 = scmp.eq.s32.totalorder %s30, 1
      %p207 = por %p205, %p206
      %p208 = scmp.ne.s32.totalorder %s199, %s200
      %p209 = scmp.eq.s32.totalorder %s30, 0
      %p210 = por %p208, %p209
      %p211 = scmp.ne.s32.totalorder %s199, %s200
      %p212 = scmp.eq.s32.totalorder %s31, 1
      %p213 = por %p211, %p212
      %p215 = scmp.ne.s32.totalorder %s200, %s214
      %p216 = scmp.eq.s32.totalorder %s31, 0
      %p217 = por %p215, %p216
      %s219 = sadd.s32 %s218, 1
      %p222 = scmp.eq.s32.totalorder %s25, 1
      %p223 = scmp.ne.s32.totalorder %s218, %s220
      %p224 = scmp.eq.s32.totalorder %s25, 0
      %p225 = por %p223, %p224
      %p226 = scmp.ne.s32.totalorder %s218, %s220
      %p227 = scmp.eq.s32.totalorder %s30, 1
      %p228 = por %p226, %p227
      %p229 = scmp.ne.s32.totalorder %s220, %s221
      %p230 = scmp.eq.s32.totalorder %s30, 0
      %p231 = por %p229, %p230
      %p232 = scmp.ne.s32.totalorder %s220, %s221
      %p233 = scmp.eq.s32.totalorder %s31, 1
      %p234 = por %p232, %p233
      %p236 = scmp.ne.s32.totalorder %s221, %s235
      %p237 = scmp.eq.s32.totalorder %s31, 0
      %p238 = por %p236, %p237
      %s239 = ssub.s32 %s33, %s40
      %p240 = scmp.eq.s32.totalorder %s239, 0
      %s242 = sadd.s32 %s241, 1
      %s243 = scalar_select %p240, %s241, %s242
      %p246 = pneg %p240
      %p247 = scmp.eq.s32.totalorder %s25, 1
      %p248 = por %p246, %p247
      %p249 = scmp.ne.s32.totalorder %s241, %s244
      %p250 = scmp.eq.s32.totalorder %s25, 0
      %p251 = por %p249, %p250
      %p252 = scmp.ne.s32.totalorder %s241, %s244
      %p253 = scmp.eq.s32.totalorder %s30, 1
      %p254 = por %p252, %p253
      %p255 = scmp.ne.s32.totalorder %s244, %s245
      %p256 = scmp.eq.s32.totalorder %s30, 0
      %p257 = por %p255, %p256
      %p258 = scmp.ne.s32.totalorder %s244, %s245
      %p259 = scmp.eq.s32.totalorder %s31, 1
      %p260 = por %p258, %p259
      %p262 = scmp.ne.s32.totalorder %s245, %s261
      %p263 = scmp.eq.s32.totalorder %s31, 0
      %p264 = por %p262, %p263
      %s265 = ssub.s32 %s33, %s40
      %p266 = scmp.eq.s32.totalorder %s265, 0
      %s268 = sadd.s32 %s267, 1
      %s269 = scalar_select %p266, %s267, %s268
      %p272 = pneg %p266
      %p273 = scmp.eq.s32.totalorder %s25, 1
      %p274 = por %p272, %p273
      %p275 = scmp.ne.s32.totalorder %s267, %s270
      %p276 = scmp.eq.s32.totalorder %s25, 0
      %p277 = por %p275, %p276
      %p278 = scmp.ne.s32.totalorder %s267, %s270
      %p279 = scmp.eq.s32.totalorder %s30, 1
      %p280 = por %p278, %p279
      %p281 = scmp.ne.s32.totalorder %s270, %s271
      %p282 = scmp.eq.s32.totalorder %s30, 0
      %p283 = por %p281, %p282
      %p284 = scmp.ne.s32.totalorder %s270, %s271
      %p285 = scmp.eq.s32.totalorder %s31, 1
      %p286 = por %p284, %p285
      %p288 = scmp.ne.s32.totalorder %s271, %s287
      %p289 = scmp.eq.s32.totalorder %s31, 0
      %p290 = por %p288, %p289
      %s291 = ssub.s32 %s33, %s40
      %p292 = scmp.eq.s32.totalorder %s291, 0
      %s294 = sadd.s32 %s293, 1
      %s295 = scalar_select %p292, %s293, %s294
      %p298 = pneg %p292
      %p299 = scmp.eq.s32.totalorder %s25, 1
      %p300 = por %p298, %p299
      %p301 = scmp.ne.s32.totalorder %s293, %s296
      %p302 = scmp.eq.s32.totalorder %s25, 0
      %p303 = por %p301, %p302
      %p304 = scmp.ne.s32.totalorder %s293, %s296
      %p305 = scmp.eq.s32.totalorder %s30, 1
      %p306 = por %p304, %p305
      %p307 = scmp.ne.s32.totalorder %s296, %s297
      %p308 = scmp.eq.s32.totalorder %s30, 0
      %p309 = por %p307, %p308
      %p310 = scmp.ne.s32.totalorder %s296, %s297
      %p311 = scmp.eq.s32.totalorder %s31, 1
      %p312 = por %p310, %p311
      %p314 = scmp.ne.s32.totalorder %s297, %s313
      %p315 = scmp.eq.s32.totalorder %s31, 0
      %p316 = por %p314, %p315
      %s318 = sadd.s32 %s317, 1
      %p321 = scmp.eq.s32.totalorder %s25, 1
      %p322 = scmp.ne.s32.totalorder %s317, %s319
      %p323 = scmp.eq.s32.totalorder %s25, 0
      %p324 = por %p322, %p323
      %p325 = scmp.ne.s32.totalorder %s317, %s319
      %p326 = scmp.eq.s32.totalorder %s30, 1
      %p327 = por %p325, %p326
      %p328 = scmp.ne.s32.totalorder %s319, %s320
      %p329 = scmp.eq.s32.totalorder %s30, 0
      %p330 = por %p328, %p329
      %p331 = scmp.ne.s32.totalorder %s319, %s320
      %p332 = scmp.eq.s32.totalorder %s31, 1
      %p333 = por %p331, %p332
      %p335 = scmp.ne.s32.totalorder %s320, %s334
      %p336 = scmp.eq.s32.totalorder %s31, 0
      %p337 = por %p335, %p336
      %s338 = ssub.s32 %s32, %s44
      %p339 = scmp.eq.s32.totalorder %s338, 0
      %s341 = sadd.s32 %s340, 1
      %s342 = scalar_select %p339, %s340, %s341
      %p345 = pneg %p339
      %p346 = scmp.eq.s32.totalorder %s25, 1
      %p347 = por %p345, %p346
      %p348 = scmp.ne.s32.totalorder %s340, %s343
      %p349 = scmp.eq.s32.totalorder %s25, 0
      %p350 = por %p348, %p349
      %p351 = scmp.ne.s32.totalorder %s340, %s343
      %p352 = scmp.eq.s32.totalorder %s30, 1
      %p353 = por %p351, %p352
      %p354 = scmp.ne.s32.totalorder %s343, %s344
      %p355 = scmp.eq.s32.totalorder %s30, 0
      %p356 = por %p354, %p355
      %p357 = scmp.ne.s32.totalorder %s343, %s344
      %p358 = scmp.eq.s32.totalorder %s31, 1
      %p359 = por %p357, %p358
      %p361 = scmp.ne.s32.totalorder %s344, %s360
      %p362 = scmp.eq.s32.totalorder %s31, 0
      %p363 = por %p361, %p362
      %p364 = scmp.le.s32.totalorder 1, %s25
      %p365 = scmp.lt.s32.totalorder %s25, 3
      %p366 = pnand %p364, %p365
      %p367 = pneg %p366
      // Predicated region
      $region9: #{tpu_custom_call.1} parent=5 // pred_check
        _
      $region10: #{tpu_custom_call.1} parent=5 // pred_check_branch
        %369 = sbr.rel (%p366) target = $region12
      $region11: #{tpu_custom_call.1} parent=5 // pred_region
        %s370 = ssub.s32 %s25, 1
        // Predicated region
        $region13: #{tpu_custom_call.1} parent=11 // pred_check
          %p371 = pneg %p84
        $region14: #{tpu_custom_call.1} parent=11 // pred_check_branch
          %373 = sbr.rel (%p371) target = $region16
        $region15: #{tpu_custom_call.1} parent=11 // pred_region
          _
        $region16: #{tpu_custom_call.1} parent=11 // pred_fallthru
          _
        // Predicated region
        $region17: #{tpu_custom_call.1} parent=11 // pred_check
          %p374 = pneg %p105
        $region18: #{tpu_custom_call.1} parent=11 // pred_check_branch
          %376 = sbr.rel (%p374) target = $region20
        $region19: #{tpu_custom_call.1} parent=11 // pred_region
          _
        $region20: #{tpu_custom_call.1} parent=11 // pred_fallthru
          _
        // Predicated region
        $region21: #{tpu_custom_call.1} parent=11 // pred_check
          %p377 = pneg %p126
        $region22: #{tpu_custom_call.1} parent=11 // pred_check_branch
          %379 = sbr.rel (%p377) target = $region24
        $region23: #{tpu_custom_call.1} parent=11 // pred_region
          %s381 = ssub.s32 16, 16
          %382 = vsyncadd [#allocation6], %s381
          %s384 = sshll.u32 [#allocation5], 4
          %s385 = int_to_ptr.vmem [resolvable:$true] %s384
          %387 = dma.hbm_to_vmem [thread:$0]  %s3, 16, %s385, [#allocation6]
        $region24: #{tpu_custom_call.1} parent=11 // pred_fallthru
          _
        // Predicated region
        $region25: #{tpu_custom_call.1} parent=11 // pred_check
          %p388 = pneg %p147
        $region26: #{tpu_custom_call.1} parent=11 // pred_check_branch
          %390 = sbr.rel (%p388) target = $region28
        $region27: #{tpu_custom_call.1} parent=11 // pred_region
          %s392 = ssub.s32 16, 16
          %393 = vsyncadd [#allocation9], %s392
          %s395 = sshll.u32 [#allocation8], 4
          %s396 = int_to_ptr.vmem [resolvable:$true] %s395
          %398 = dma.hbm_to_vmem [thread:$0]  %s4, 16, %s396, [#allocation9]
        $region28: #{tpu_custom_call.1} parent=11 // pred_fallthru
          _
        // Predicated region
        $region29: #{tpu_custom_call.1} parent=11 // pred_check
          %p399 = pneg %p168
        $region30: #{tpu_custom_call.1} parent=11 // pred_check_branch
          %401 = sbr.rel (%p399) target = $region32
        $region31: #{tpu_custom_call.1} parent=11 // pred_region
          _
        $region32: #{tpu_custom_call.1} parent=11 // pred_fallthru
          _
        // Predicated region
        $region33: #{tpu_custom_call.1} parent=11 // pred_check
          %p402 = pneg %p189
        $region34: #{tpu_custom_call.1} parent=11 // pred_check_branch
          %404 = sbr.rel (%p402) target = $region36
        $region35: #{tpu_custom_call.1} parent=11 // pred_region
          %s406 = ssub.s32 16, 16
          %407 = vsyncadd [#allocation9], %s406
          %s409 = sshll.u32 [#allocation10], 4
          %s410 = int_to_ptr.vmem [resolvable:$true] %s409
          %412 = dma.hbm_to_vmem [thread:$0]  %s6, 16, %s410, [#allocation9]
        $region36: #{tpu_custom_call.1} parent=11 // pred_fallthru
          _
        // Predicated region
        $region37: #{tpu_custom_call.1} parent=11 // pred_check
          %p413 = pneg %p210
        $region38: #{tpu_custom_call.1} parent=11 // pred_check_branch
          %415 = sbr.rel (%p413) target = $region40
        $region39: #{tpu_custom_call.1} parent=11 // pred_region
          _
        $region40: #{tpu_custom_call.1} parent=11 // pred_fallthru
          _
        // Predicated region
        $region41: #{tpu_custom_call.1} parent=11 // pred_check
          %p416 = pneg %p231
        $region42: #{tpu_custom_call.1} parent=11 // pred_check_branch
          %418 = sbr.rel (%p416) target = $region44
        $region43: #{tpu_custom_call.1} parent=11 // pred_region
          %s420 = ssub.s32 16, 16
          %421 = vsyncadd [#allocation12], %s420
          %s423 = sshll.u32 [#allocation11], 4
          %s424 = int_to_ptr.vmem [resolvable:$true] %s423
          %426 = dma.hbm_to_vmem [thread:$0]  %s8, 16, %s424, [#allocation12]
        $region44: #{tpu_custom_call.1} parent=11 // pred_fallthru
          _
        // Predicated region
        $region45: #{tpu_custom_call.1} parent=11 // pred_check
          %p427 = pneg %p257
        $region46: #{tpu_custom_call.1} parent=11 // pred_check_branch
          %429 = sbr.rel (%p427) target = $region48
        $region47: #{tpu_custom_call.1} parent=11 // pred_region
          %p430 = scmp.lt.s32.totalorder %s35, 0
          %s431 = scalar_select %p430, %s35, 0
          %s432 = smul.addr %s431, 4
          %s433 = scalar_lea.vmem %s9, %s432
        $region48: #{tpu_custom_call.1} parent=11 // pred_fallthru
          _
        // Predicated region
        $region49: #{tpu_custom_call.1} parent=11 // pred_check
          %p434 = pneg %p283
        $region50: #{tpu_custom_call.1} parent=11 // pred_check_branch
          %436 = sbr.rel (%p434) target = $region52
        $region51: #{tpu_custom_call.1} parent=11 // pred_region
          %p437 = scmp.lt.s32.totalorder %s35, 0
          %s438 = scalar_select %p437, %s35, 0
          %s439 = scalar_lea.vmem %s10, %s438
        $region52: #{tpu_custom_call.1} parent=11 // pred_fallthru
          _
        // Predicated region
        $region53: #{tpu_custom_call.1} parent=11 // pred_check
          %p440 = pneg %p309
        $region54: #{tpu_custom_call.1} parent=11 // pred_check_branch
          %442 = sbr.rel (%p440) target = $region56
        $region55: #{tpu_custom_call.1} parent=11 // pred_region
          %s443 = smul.u32 8, %s35
          %p444 = scmp.lt.s32.totalorder %s443, 7
          %s445 = scalar_select %p444, %s443, 7
          %s446 = smul.addr %s445, 4
          %s447 = scalar_lea.vmem %s11, %s446
          %s448 = smul.u32 8, %s35
        $region56: #{tpu_custom_call.1} parent=11 // pred_fallthru
          _
        // Predicated region
        $region57: #{tpu_custom_call.1} parent=11 // pred_check
          %p449 = pneg %p330
        $region58: #{tpu_custom_call.1} parent=11 // pred_check_branch
          %451 = sbr.rel (%p449) target = $region60
        $region59: #{tpu_custom_call.1} parent=11 // pred_region
          _
        $region60: #{tpu_custom_call.1} parent=11 // pred_fallthru
          _
      $region12: #{tpu_custom_call.1} parent=5 // pred_fallthru
        _
      %p452 = scmp.lt.s32.totalorder %s25, 2
      // Predicated region
      $region61: #{tpu_custom_call.1} parent=5 // pred_check
        %p453 = pneg %p452
      $region62: #{tpu_custom_call.1} parent=5 // pred_check_branch
        %455 = sbr.rel (%p453) target = $region64
      $region63: #{tpu_custom_call.1} parent=5 // pred_region
        // Predicated region
        $region65: #{tpu_custom_call.1} parent=63 // pred_check
          %p456 = pneg %p57
        $region66: #{tpu_custom_call.1} parent=63 // pred_check_branch
          %458 = sbr.rel (%p456) target = $region68
        $region67: #{tpu_custom_call.1} parent=63 // pred_region
          %p459 = scmp.lt.s32.totalorder %s32, 1
          %s460 = scalar_select %p459, %s32, 1
          %s461 = smul.addr %s460, 8
          %s462 = scalar_lea.vmem %s0, %s461
        $region68: #{tpu_custom_call.1} parent=63 // pred_fallthru
          _
      $region64: #{tpu_custom_call.1} parent=5 // pred_fallthru
        _
      %p463 = scmp.le.s32.totalorder 1, %s25
      %p464 = scmp.lt.s32.totalorder %s25, 3
      %p465 = pnand %p463, %p464
      %p466 = pneg %p465
      // Predicated region
      $region69: #{tpu_custom_call.1} parent=5 // pred_check
        _
      $region70: #{tpu_custom_call.1} parent=5 // pred_check_branch
        %468 = sbr.rel (%p465) target = $region72
      $region71: #{tpu_custom_call.1} parent=5 // pred_region
        %s469 = ssub.s32 %s25, 1
        // Predicated region
        $region73: #{tpu_custom_call.1} parent=71 // pred_check
          %p470 = pneg %p126
        $region74: #{tpu_custom_call.1} parent=71 // pred_check_branch
          %472 = sbr.rel (%p470) target = $region76
        $region75: #{tpu_custom_call.1} parent=71 // pred_region
          %473 = dma.done [#allocation6], 16
        $region76: #{tpu_custom_call.1} parent=71 // pred_fallthru
          _
        // Predicated region
        $region77: #{tpu_custom_call.1} parent=71 // pred_check
          %p474 = pneg %p147
        $region78: #{tpu_custom_call.1} parent=71 // pred_check_branch
          %476 = sbr.rel (%p474) target = $region80
        $region79: #{tpu_custom_call.1} parent=71 // pred_region
          %477 = dma.done [#allocation9], 16
        $region80: #{tpu_custom_call.1} parent=71 // pred_fallthru
          _
        // Predicated region
        $region81: #{tpu_custom_call.1} parent=71 // pred_check
          %p478 = pneg %p189
        $region82: #{tpu_custom_call.1} parent=71 // pred_check_branch
          %480 = sbr.rel (%p478) target = $region84
        $region83: #{tpu_custom_call.1} parent=71 // pred_region
          %481 = dma.done [#allocation9], 16
        $region84: #{tpu_custom_call.1} parent=71 // pred_fallthru
          _
        // Predicated region
        $region85: #{tpu_custom_call.1} parent=71 // pred_check
          %p482 = pneg %p231
        $region86: #{tpu_custom_call.1} parent=71 // pred_check_branch
          %484 = sbr.rel (%p482) target = $region88
        $region87: #{tpu_custom_call.1} parent=71 // pred_region
          %485 = dma.done [#allocation12], 16
        $region88: #{tpu_custom_call.1} parent=71 // pred_fallthru
          _
        %p486 = scmp.lt.s32.totalorder %s34, 1
        %s487 = scalar_select %p486, %s34, 1
        %s488 = smul.addr %s487, 8
        %s489 = scalar_lea.vmem %s0, %s488
        %p490 = pneg %p63
        %p491 = pneg %p60
        %p492 = pneg %p84
        %p493 = pneg %p81
        %p494 = pneg %p105
        %p495 = pneg %p102
        %p496 = pneg %p126
        %p497 = pneg %p123
        %p498 = pneg %p147
        %p499 = pneg %p144
        %p500 = pneg %p168
        %p501 = pneg %p165
        %p502 = pneg %p189
        %p503 = pneg %p186
        %p504 = pneg %p210
        %p505 = pneg %p207
        %p506 = pneg %p231
        %p507 = pneg %p228
        %p508 = scmp.lt.s32.totalorder %s35, 0
        %s509 = scalar_select %p508, %s35, 0
        %s510 = smul.addr %s509, 4
        %s511 = scalar_lea.vmem %s9, %s510
        %p512 = pneg %p257
        %p513 = pneg %p254
        %p514 = scmp.lt.s32.totalorder %s35, 0
        %s515 = scalar_select %p514, %s35, 0
        %s516 = scalar_lea.vmem %s10, %s515
        %p517 = pneg %p283
        %p518 = pneg %p280
        %s519 = smul.u32 8, %s35
        %p520 = scmp.lt.s32.totalorder %s519, 7
        %s521 = scalar_select %p520, %s519, 7
        %s522 = smul.addr %s521, 4
        %s523 = scalar_lea.vmem %s11, %s522
        %p524 = pneg %p309
        %p525 = pneg %p306
        %p526 = pneg %p330
        %p527 = pneg %p327
        %p528 = pneg %p356
        %p529 = pneg %p353
        %s530 = sand.u32 %s343, 1
        %s531 = scalar_lea.sflag [#allocation7], %s530
        %s532 = sand.u32 %s343, 1
        %s533 = smul.addr %s532, 8
        %s534 = scalar_lea.vmem [#allocation13], %s533
        %p535 = scmp.lt.s32.totalorder %s34, 1
        %s536 = scalar_select %p535, %s34, 1
        %s537 = smul.addr %s536, 8
        %s538 = scalar_lea.vmem %s0, %s537
        %p539 = scmp.lt.s32.totalorder %s35, 0
        %s540 = scalar_select %p539, %s35, 0
        %s541 = smul.addr %s540, 4
        %s542 = scalar_lea.vmem %s9, %s541
        %p543 = scmp.lt.s32.totalorder %s35, 0
        %s544 = scalar_select %p543, %s35, 0
        %s545 = scalar_lea.vmem %s10, %s544
        %s546 = smul.u32 8, %s35
        %p547 = scmp.lt.s32.totalorder %s546, 7
        %s548 = scalar_select %p547, %s546, 7
        %s549 = smul.addr %s548, 4
        %s550 = scalar_lea.vmem %s11, %s549
        %s551 = smul.u32 8, %s35
        %p553 = scmp.eq.s32.totalorder %s35, 0
        // Predicated region
        $region89: #{tpu_custom_call.1} parent=71 // pred_check
          %p554 = pneg %p553
        $region90: #{tpu_custom_call.1} parent=71 // pred_check_branch
          %556 = sbr.rel (%p554) target = $region92
        $region91: #{tpu_custom_call.1} parent=71 // pred_region
          %v557 = vld [vmem:[%s538] sm:$0xff]
          %v558 = vld [vmem:[%s1] sm:$0x1]
          %v559 = vld [vmem:[%s2] sm:$0x1]
          %vm560 = vcmask 261120
          %v561 = vsel %vm560, %v557, 0.0
          %562 = vadd.xlane.f32.xlu0 %v561
          %v563 = vpop.xlane.xlu0 %562
          %v564 = vrcp.pop 32.0
          %v565 = vmul.f32 %v563, %v564
          %v566 = vsub.f32 %v557, %v565
          %v567 = vmul.f32 %v566, %v566
          %v568 = vsel %vm560, %v567, 0.0
          %569 = vadd.xlane.f32.xlu0 %v568
          %v570 = vpop.xlane.xlu0 %569
          %v571 = vmul.f32 %v570, %v564
          %v572 = vadd.f32 %v571, 1e-06
          %v573 = vrsqrt.pop %v572
          %v574 = vmul.f32 %v566, %v573
          %v576 = vlaneseq
          %v577 = vshrl.u32 %v576, 7
          %v578 = vsub.s32 0, %v577
          %v579 = vrot.slane %v558, %v578
          %v581 = vmul.f32 %v574, %v579
          %v583 = vlaneseq
          %v584 = vshrl.u32 %v583, 7
          %v585 = vsub.s32 0, %v584
          %v586 = vrot.slane %v559, %v585
          %v588 = vadd.f32 %v581, %v586
          %589 = vst.msk [vmem:[#allocation4] sm:$0xff] %vm560, %v588
          %v590 = vpack.c.bf16 %v588, %v588
          %v591 = vld [vmem:[%s5] sm:$0xf]
          %v592 = vld [vmem:[%s5 + $0x4] sm:$0xf]
          %v593 = vld [vmem:[%s5 + $0x8] sm:$0xf]
          %v594 = vld [vmem:[%s5 + $0xc] sm:$0xf]
          %v595 = vld [vmem:[#allocation10] sm:$0x1]
          %v597 = vlaneseq
          %v598 = vshrl.u32 %v597, 7
          %v599 = vsub.s32 0, %v598
          %v600 = vrot.slane %v595, %v599
          %v606 = vunpack.c.l.b16 %v591
          %v607 = vunpack.c.l.b16 %v592
          %v608 = vunpack.c.l.b16 %v593
          %v609 = vunpack.c.l.b16 %v594
          %v610 = vpack.c.b16 %v607, %v606
          %v611 = vpack.c.b16 %v609, %v608
          %v615 = vsel %vm560, %v590, 0
          %617 = vmatprep.subr.bf16.mxu0 0
          %618 = vmatpush1.bf16.msra.mxu0 %v610
          %619 = vmatprep.subr.bf16.mxu0 0
          %620 = vmatpush1.bf16.msra.mxu0 %v611
          %621 = vmatprep.subr.bf16.mxu0 0
          %622 = vmatpush1.bf16.msra.mxu0 0
          %623 = vmatprep.subr.bf16.mxu0 0
          %624 = vmatpush1.bf16.msra.mxu0 0
          %625 = vmatprep.subr.bf16.mxu0 0
          %626 = vmatpush1.bf16.msra.mxu0 0
          %627 = vmatprep.subr.bf16.mxu0 0
          %628 = vmatpush1.bf16.msra.mxu0 0
          %629 = vmatprep.subr.bf16.mxu0 0
          %630 = vmatpush1.bf16.msra.mxu0 0
          %631 = vmatprep.subr.bf16.mxu0 0
          %632 = vmatpush1.bf16.msra.mxu0 0
          %633 = vmatprep.subr.bf16.mxu0 0
          %634 = vmatpush1.bf16.msra.mxu0 0
          %635 = vmatprep.subr.bf16.mxu0 0
          %636 = vmatpush1.bf16.msra.mxu0 0
          %637 = vmatprep.subr.bf16.mxu0 0
          %638 = vmatpush1.bf16.msra.mxu0 0
          %639 = vmatprep.subr.bf16.mxu0 0
          %640 = vmatpush1.bf16.msra.mxu0 0
          %641 = vmatprep.subr.bf16.mxu0 0
          %642 = vmatpush1.bf16.msra.mxu0 0
          %643 = vmatprep.subr.bf16.mxu0 0
          %644 = vmatpush1.bf16.msra.mxu0 0
          %645 = vmatprep.subr.bf16.mxu0 0
          %646 = vmatpush1.bf16.msra.mxu0 0
          %647 = vmatprep.subr.bf16.mxu0 0
          %648 = vmatpush1.bf16.msra.mxu0 0
          %649 = vmatprep.mubr.bf16.mxu0 0
          %650 = vmatmul.mubr.bf16.gmra.mrb[0].mxu0 %v615
          %v651 = vpop.f32.mrb[0].mxu0
          %v652 = vadd.f32 %v600, %v651
          %v653 = vpop.f32.mrb[0].mxu0
          %v654 = vpop.f32.mrb[0].mxu0
          %v655 = vpop.f32.mrb[0].mxu0
          %656 = vdwg.mxu0
          %v657 = vmul.f32 %v652, 0.35355338
          %v658 = vpack.c.bf16 %v657, %v657
          %vm659 = vcmask 257024
          %660 = vst.msk [vmem:[#allocation2] sm:$0xf] %vm659, %v658
          %v661 = vpack.c.bf16 %v652, %v652
          %vm662 = vcmask 781568
          %663 = vst.msk [vmem:[#allocation2] sm:$0xf] %vm662, %v661
          %v664 = vld [vmem:[#allocation2] sm:$0xf]
          %v666 = vunpack.c.l.b16 %v664
          %v667 = vpack.c.b16 %v666, %v666
          %668 = vrot.lane.b32.xlu0 %v667, 96
          %v669 = vpop.permute.xlu0 %668
          %vm670 = vcmask 64512
          %v672 = vsel %vm670, %v664, 0
          %v675 = vsel %vm670, %v669, 0
          %677 = vmatprep.subr.bf16.mxu0 0
          %678 = vmatpush1.bf16.xpose.msra.mxu0 %v675
          %679 = vmatprep.subr.bf16.mxu0 0
          %680 = vmatpush1.bf16.xpose.msra.mxu0 0
          %681 = vmatprep.subr.bf16.mxu0 0
          %682 = vmatpush1.bf16.xpose.msra.mxu0 0
          %683 = vmatprep.subr.bf16.mxu0 0
          %684 = vmatpush1.bf16.xpose.msra.mxu0 0
          %685 = vmatprep.subr.bf16.mxu0 0
          %686 = vmatpush1.bf16.xpose.msra.mxu0 0
          %687 = vmatprep.subr.bf16.mxu0 0
          %688 = vmatpush1.bf16.xpose.msra.mxu0 0
          %689 = vmatprep.subr.bf16.mxu0 0
          %690 = vmatpush1.bf16.xpose.msra.mxu0 0
          %691 = vmatprep.subr.bf16.mxu0 0
          %692 = vmatpush1.bf16.xpose.msra.mxu0 0
          %693 = vmatprep.subr.bf16.mxu0 0
          %694 = vmatpush1.bf16.xpose.msra.mxu0 0
          %695 = vmatprep.subr.bf16.mxu0 0
          %696 = vmatpush1.bf16.xpose.msra.mxu0 0
          %697 = vmatprep.subr.bf16.mxu0 0
          %698 = vmatpush1.bf16.xpose.msra.mxu0 0
          %699 = vmatprep.subr.bf16.mxu0 0
          %700 = vmatpush1.bf16.xpose.msra.mxu0 0
          %701 = vmatprep.subr.bf16.mxu0 0
          %702 = vmatpush1.bf16.xpose.msra.mxu0 0
          %703 = vmatprep.subr.bf16.mxu0 0
          %704 = vmatpush1.bf16.xpose.msra.mxu0 0
          %705 = vmatprep.subr.bf16.mxu0 0
          %706 = vmatpush1.bf16.xpose.msra.mxu0 0
          %707 = vmatprep.subr.bf16.mxu0 0
          %708 = vmatpush1.bf16.xpose.msra.mxu0 0
          %709 = vmatprep.mubr.bf16.mxu0 0
          %710 = vmatmul.mubr.bf16.gmra.mrb[0].mxu0 %v672
          %v711 = vpop.f32.mrb[0].mxu0
          %v712 = vadd.f32 0.0, %v711
          %v713 = vpop.f32.mrb[0].mxu0
          %v714 = vpop.f32.mrb[0].mxu0
          %v715 = vpop.f32.mrb[0].mxu0
          %716 = vdwg.mxu0
          %v717 = vsel %vm670, %v712, -inf
          %718 = vmax.xlane.f32.xlu0 %v717
          %v719 = vpop.xlane.xlu0 %718
          %v720 = vsub.f32 %v712, %v719
          %v721 = vmul.f32 %v720, 1.442695
          %v722 = vpow.pop %v721
          %v723 = vsel %vm670, %v722, 0.0
          %724 = vadd.xlane.f32.xlu0 %v723
          %v725 = vpop.xlane.xlu0 %724
          %v726 = vpack.c.bf16 %v722, %v722
          %727 = vrot.lane.b32.xlu0 %v667, 64
          %v728 = vpop.permute.xlu0 %727
          %v730 = vsel %vm670, %v726, 0
          %vm732 = vcmask 1043456
          %v734 = vsel %vm732, %v728, 0
          %736 = vmatprep.subr.bf16.mxu0 0
          %737 = vmatpush1.bf16.msra.mxu0 %v734
          %738 = vmatprep.subr.bf16.mxu0 0
          %739 = vmatpush1.bf16.msra.mxu0 0
          %740 = vmatprep.subr.bf16.mxu0 0
          %741 = vmatpush1.bf16.msra.mxu0 0
          %742 = vmatprep.subr.bf16.mxu0 0
          %743 = vmatpush1.bf16.msra.mxu0 0
          %744 = vmatprep.subr.bf16.mxu0 0
          %745 = vmatpush1.bf16.msra.mxu0 0
          %746 = vmatprep.subr.bf16.mxu0 0
          %747 = vmatpush1.bf16.msra.mxu0 0
          %748 = vmatprep.subr.bf16.mxu0 0
          %749 = vmatpush1.bf16.msra.mxu0 0
          %750 = vmatprep.subr.bf16.mxu0 0
          %751 = vmatpush1.bf16.msra.mxu0 0
          %752 = vmatprep.subr.bf16.mxu0 0
          %753 = vmatpush1.bf16.msra.mxu0 0
          %754 = vmatprep.subr.bf16.mxu0 0
          %755 = vmatpush1.bf16.msra.mxu0 0
          %756 = vmatprep.subr.bf16.mxu0 0
          %757 = vmatpush1.bf16.msra.mxu0 0
          %758 = vmatprep.subr.bf16.mxu0 0
          %759 = vmatpush1.bf16.msra.mxu0 0
          %760 = vmatprep.subr.bf16.mxu0 0
          %761 = vmatpush1.bf16.msra.mxu0 0
          %762 = vmatprep.subr.bf16.mxu0 0
          %763 = vmatpush1.bf16.msra.mxu0 0
          %764 = vmatprep.subr.bf16.mxu0 0
          %765 = vmatpush1.bf16.msra.mxu0 0
          %766 = vmatprep.subr.bf16.mxu0 0
          %767 = vmatpush1.bf16.msra.mxu0 0
          %768 = vmatprep.mubr.bf16.mxu0 0
          %769 = vmatmul.mubr.bf16.gmra.mrb[0].mxu0 %v730
          %v770 = vpop.f32.mrb[0].mxu0
          %v771 = vadd.f32 0.0, %v770
          %v772 = vpop.f32.mrb[0].mxu0
          %v773 = vpop.f32.mrb[0].mxu0
          %v774 = vpop.f32.mrb[0].mxu0
          %775 = vdwg.mxu0
          %v776 = vrcp.pop %v725
          %v777 = vmul.f32 %v771, %v776
          %v778 = vpack.c.bf16 %v777, %v777
          %vm779 = vcmask 60416
          %780 = vst.msk [vmem:[#allocation3] sm:$0xf] %vm779, %v778
          %v781 = vld [vmem:[#allocation2] sm:$0xf]
          %v783 = vunpack.c.l.b16 %v781
          %v784 = vpack.c.b16 %v783, %v783
          %785 = vrot.lane.b32.xlu0 %v784, 120
          %v786 = vpop.permute.xlu0 %785
          %787 = vrot.lane.b32.xlu0 %v784, 88
          %v788 = vpop.permute.xlu0 %787
          %v790 = vsel %vm670, %v786, 0
          %v793 = vsel %vm670, %v788, 0
          %795 = vmatprep.subr.bf16.mxu0 0
          %796 = vmatpush1.bf16.xpose.msra.mxu0 %v793
          %797 = vmatprep.subr.bf16.mxu0 0
          %798 = vmatpush1.bf16.xpose.msra.mxu0 0
          %799 = vmatprep.subr.bf16.mxu0 0
          %800 = vmatpush1.bf16.xpose.msra.mxu0 0
          %801 = vmatprep.subr.bf16.mxu0 0
          %802 = vmatpush1.bf16.xpose.msra.mxu0 0
          %803 = vmatprep.subr.bf16.mxu0 0
          %804 = vmatpush1.bf16.xpose.msra.mxu0 0
          %805 = vmatprep.subr.bf16.mxu0 0
          %806 = vmatpush1.bf16.xpose.msra.mxu0 0
          %807 = vmatprep.subr.bf16.mxu0 0
          %808 = vmatpush1.bf16.xpose.msra.mxu0 0
          %809 = vmatprep.subr.bf16.mxu0 0
          %810 = vmatpush1.bf16.xpose.msra.mxu0 0
          %811 = vmatprep.subr.bf16.mxu0 0
          %812 = vmatpush1.bf16.xpose.msra.mxu0 0
          %813 = vmatprep.subr.bf16.mxu0 0
          %814 = vmatpush1.bf16.xpose.msra.mxu0 0
          %815 = vmatprep.subr.bf16.mxu0 0
          %816 = vmatpush1.bf16.xpose.msra.mxu0 0
          %817 = vmatprep.subr.bf16.mxu0 0
          %818 = vmatpush1.bf16.xpose.msra.mxu0 0
          %819 = vmatprep.subr.bf16.mxu0 0
          %820 = vmatpush1.bf16.xpose.msra.mxu0 0
          %821 = vmatprep.subr.bf16.mxu0 0
          %822 = vmatpush1.bf16.xpose.msra.mxu0 0
          %823 = vmatprep.subr.bf16.mxu0 0
          %824 = vmatpush1.bf16.xpose.msra.mxu0 0
          %825 = vmatprep.subr.bf16.mxu0 0
          %826 = vmatpush1.bf16.xpose.msra.mxu0 0
          %827 = vmatprep.mubr.bf16.mxu0 0
          %828 = vmatmul.mubr.bf16.gmra.mrb[0].mxu0 %v790
          %v829 = vpop.f32.mrb[0].mxu0
          %v830 = vadd.f32 0.0, %v829
          %v831 = vpop.f32.mrb[0].mxu0
          %v832 = vpop.f32.mrb[0].mxu0
          %v833 = vpop.f32.mrb[0].mxu0
          %834 = vdwg.mxu0
          %v835 = vsel %vm670, %v830, -inf
          %836 = vmax.xlane.f32.xlu0 %v835
          %v837 = vpop.xlane.xlu0 %836
          %v838 = vsub.f32 %v830, %v837
          %v839 = vmul.f32 %v838, 1.442695
          %v840 = vpow.pop %v839
          %v841 = vsel %vm670, %v840, 0.0
          %842 = vadd.xlane.f32.xlu0 %v841
          %v843 = vpop.xlane.xlu0 %842
          %v844 = vpack.c.bf16 %v840, %v840
          %845 = vrot.lane.b32.xlu0 %v784, 56
          %v846 = vpop.permute.xlu0 %845
          %v848 = vsel %vm670, %v844, 0
          %v851 = vsel %vm732, %v846, 0
          %853 = vmatprep.subr.bf16.mxu0 0
          %854 = vmatpush1.bf16.msra.mxu0 %v851
          %855 = vmatprep.subr.bf16.mxu0 0
          %856 = vmatpush1.bf16.msra.mxu0 0
          %857 = vmatprep.subr.bf16.mxu0 0
          %858 = vmatpush1.bf16.msra.mxu0 0
          %859 = vmatprep.subr.bf16.mxu0 0
          %860 = vmatpush1.bf16.msra.mxu0 0
          %861 = vmatprep.subr.bf16.mxu0 0
          %862 = vmatpush1.bf16.msra.mxu0 0
          %863 = vmatprep.subr.bf16.mxu0 0
          %864 = vmatpush1.bf16.msra.mxu0 0
          %865 = vmatprep.subr.bf16.mxu0 0
          %866 = vmatpush1.bf16.msra.mxu0 0
          %867 = vmatprep.subr.bf16.mxu0 0
          %868 = vmatpush1.bf16.msra.mxu0 0
          %869 = vmatprep.subr.bf16.mxu0 0
          %870 = vmatpush1.bf16.msra.mxu0 0
          %871 = vmatprep.subr.bf16.mxu0 0
          %872 = vmatpush1.bf16.msra.mxu0 0
          %873 = vmatprep.subr.bf16.mxu0 0
          %874 = vmatpush1.bf16.msra.mxu0 0
          %875 = vmatprep.subr.bf16.mxu0 0
          %876 = vmatpush1.bf16.msra.mxu0 0
          %877 = vmatprep.subr.bf16.mxu0 0
          %878 = vmatpush1.bf16.msra.mxu0 0
          %879 = vmatprep.subr.bf16.mxu0 0
          %880 = vmatpush1.bf16.msra.mxu0 0
          %881 = vmatprep.subr.bf16.mxu0 0
          %882 = vmatpush1.bf16.msra.mxu0 0
          %883 = vmatprep.subr.bf16.mxu0 0
          %884 = vmatpush1.bf16.msra.mxu0 0
          %885 = vmatprep.mubr.bf16.mxu0 0
          %886 = vmatmul.mubr.bf16.gmra.mrb[0].mxu0 %v848
          %v887 = vpop.f32.mrb[0].mxu0
          %v888 = vadd.f32 0.0, %v887
          %v889 = vpop.f32.mrb[0].mxu0
          %v890 = vpop.f32.mrb[0].mxu0
          %v891 = vpop.f32.mrb[0].mxu0
          %892 = vdwg.mxu0
          %v893 = vrcp.pop %v843
          %v894 = vmul.f32 %v888, %v893
          %v895 = vpack.c.bf16 %v894, %v894
          %v897 = vunpack.c.l.b16 %v895
          %v898 = vpack.c.b16 %v897, %v897
          %899 = vrot.lane.b32.xlu0 %v898, 8
          %v900 = vpop.permute.xlu0 %899
          %vm902 = vcmask 126016
          %903 = vst.msk [vmem:[#allocation3] sm:$0xf] %vm902, %v900
          %v904 = vld [vmem:[#allocation2] sm:$0xf]
          %v906 = vunpack.c.l.b16 %v904
          %v907 = vpack.c.b16 %v906, %v906
          %908 = vrot.lane.b32.xlu0 %v907, 112
          %v909 = vpop.permute.xlu0 %908
          %910 = vrot.lane.b32.xlu0 %v907, 80
          %v911 = vpop.permute.xlu0 %910
          %v913 = vsel %vm670, %v909, 0
          %v916 = vsel %vm670, %v911, 0
          %918 = vmatprep.subr.bf16.mxu0 0
          %919 = vmatpush1.bf16.xpose.msra.mxu0 %v916
          %920 = vmatprep.subr.bf16.mxu0 0
          %921 = vmatpush1.bf16.xpose.msra.mxu0 0
          %922 = vmatprep.subr.bf16.mxu0 0
          %923 = vmatpush1.bf16.xpose.msra.mxu0 0
          %924 = vmatprep.subr.bf16.mxu0 0
          %925 = vmatpush1.bf16.xpose.msra.mxu0 0
          %926 = vmatprep.subr.bf16.mxu0 0
          %927 = vmatpush1.bf16.xpose.msra.mxu0 0
          %928 = vmatprep.subr.bf16.mxu0 0
          %929 = vmatpush1.bf16.xpose.msra.mxu0 0
          %930 = vmatprep.subr.bf16.mxu0 0
          %931 = vmatpush1.bf16.xpose.msra.mxu0 0
          %932 = vmatprep.subr.bf16.mxu0 0
          %933 = vmatpush1.bf16.xpose.msra.mxu0 0
          %934 = vmatprep.subr.bf16.mxu0 0
          %935 = vmatpush1.bf16.xpose.msra.mxu0 0
          %936 = vmatprep.subr.bf16.mxu0 0
          %937 = vmatpush1.bf16.xpose.msra.mxu0 0
          %938 = vmatprep.subr.bf16.mxu0 0
          %939 = vmatpush1.bf16.xpose.msra.mxu0 0
          %940 = vmatprep.subr.bf16.mxu0 0
          %941 = vmatpush1.bf16.xpose.msra.mxu0 0
          %942 = vmatprep.subr.bf16.mxu0 0
          %943 = vmatpush1.bf16.xpose.msra.mxu0 0
          %944 = vmatprep.subr.bf16.mxu0 0
          %945 = vmatpush1.bf16.xpose.msra.mxu0 0
          %946 = vmatprep.subr.bf16.mxu0 0
          %947 = vmatpush1.bf16.xpose.msra.mxu0 0
          %948 = vmatprep.subr.bf16.mxu0 0
          %949 = vmatpush1.bf16.xpose.msra.mxu0 0
          %950 = vmatprep.mubr.bf16.mxu0 0
          %951 = vmatmul.mubr.bf16.gmra.mrb[0].mxu0 %v913
          %v952 = vpop.f32.mrb[0].mxu0
          %v953 = vadd.f32 0.0, %v952
          %v954 = vpop.f32.mrb[0].mxu0
          %v955 = vpop.f32.mrb[0].mxu0
          %v956 = vpop.f32.mrb[0].mxu0
          %957 = vdwg.mxu0
          %v958 = vsel %vm670, %v953, -inf
          %959 = vmax.xlane.f32.xlu0 %v958
          %v960 = vpop.xlane.xlu0 %959
          %v961 = vsub.f32 %v953, %v960
          %v962 = vmul.f32 %v961, 1.442695
          %v963 = vpow.pop %v962
          %v964 = vsel %vm670, %v963, 0.0
          %965 = vadd.xlane.f32.xlu0 %v964
          %v966 = vpop.xlane.xlu0 %965
          %v967 = vpack.c.bf16 %v963, %v963
          %968 = vrot.lane.b32.xlu0 %v907, 48
          %v969 = vpop.permute.xlu0 %968
          %v971 = vsel %vm670, %v967, 0
          %v974 = vsel %vm732, %v969, 0
          %976 = vmatprep.subr.bf16.mxu0 0
          %977 = vmatpush1.bf16.msra.mxu0 %v974
          %978 = vmatprep.subr.bf16.mxu0 0
          %979 = vmatpush1.bf16.msra.mxu0 0
          %980 = vmatprep.subr.bf16.mxu0 0
          %981 = vmatpush1.bf16.msra.mxu0 0
          %982 = vmatprep.subr.bf16.mxu0 0
          %983 = vmatpush1.bf16.msra.mxu0 0
          %984 = vmatprep.subr.bf16.mxu0 0
          %985 = vmatpush1.bf16.msra.mxu0 0
          %986 = vmatprep.subr.bf16.mxu0 0
          %987 = vmatpush1.bf16.msra.mxu0 0
          %988 = vmatprep.subr.bf16.mxu0 0
          %989 = vmatpush1.bf16.msra.mxu0 0
          %990 = vmatprep.subr.bf16.mxu0 0
          %991 = vmatpush1.bf16.msra.mxu0 0
          %992 = vmatprep.subr.bf16.mxu0 0
          %993 = vmatpush1.bf16.msra.mxu0 0
          %994 = vmatprep.subr.bf16.mxu0 0
          %995 = vmatpush1.bf16.msra.mxu0 0
          %996 = vmatprep.subr.bf16.mxu0 0
          %997 = vmatpush1.bf16.msra.mxu0 0
          %998 = vmatprep.subr.bf16.mxu0 0
          %999 = vmatpush1.bf16.msra.mxu0 0
          %1000 = vmatprep.subr.bf16.mxu0 0
          %1001 = vmatpush1.bf16.msra.mxu0 0
          %1002 = vmatprep.subr.bf16.mxu0 0
          %1003 = vmatpush1.bf16.msra.mxu0 0
          %1004 = vmatprep.subr.bf16.mxu0 0
          %1005 = vmatpush1.bf16.msra.mxu0 0
          %1006 = vmatprep.subr.bf16.mxu0 0
          %1007 = vmatpush1.bf16.msra.mxu0 0
          %1008 = vmatprep.mubr.bf16.mxu0 0
          %1009 = vmatmul.mubr.bf16.gmra.mrb[0].mxu0 %v971
          %v1010 = vpop.f32.mrb[0].mxu0
          %v1011 = vadd.f32 0.0, %v1010
          %v1012 = vpop.f32.mrb[0].mxu0
          %v1013 = vpop.f32.mrb[0].mxu0
          %v1014 = vpop.f32.mrb[0].mxu0
          %1015 = vdwg.mxu0
          %v1016 = vrcp.pop %v966
          %v1017 = vmul.f32 %v1011, %v1016
          %v1018 = vpack.c.bf16 %v1017, %v1017
          %v1020 = vunpack.c.l.b16 %v1018
          %v1021 = vpack.c.b16 %v1020, %v1020
          %1022 = vrot.lane.b32.xlu0 %v1021, 16
          %v1023 = vpop.permute.xlu0 %1022
          %vm1025 = vcmask 191616
          %1026 = vst.msk [vmem:[#allocation3] sm:$0xf] %vm1025, %v1023
          %v1027 = vld [vmem:[#allocation2] sm:$0xf]
          %v1029 = vunpack.c.l.b16 %v1027
          %v1030 = vpack.c.b16 %v1029, %v1029
          %1031 = vrot.lane.b32.xlu0 %v1030, 104
          %v1032 = vpop.permute.xlu0 %1031
          %1033 = vrot.lane.b32.xlu0 %v1030, 72
          %v1034 = vpop.permute.xlu0 %1033
          %v1036 = vsel %vm670, %v1032, 0
          %v1039 = vsel %vm670, %v1034, 0
          %1041 = vmatprep.subr.bf16.mxu0 0
          %1042 = vmatpush1.bf16.xpose.msra.mxu0 %v1039
          %1043 = vmatprep.subr.bf16.mxu0 0
          %1044 = vmatpush1.bf16.xpose.msra.mxu0 0
          %1045 = vmatprep.subr.bf16.mxu0 0
          %1046 = vmatpush1.bf16.xpose.msra.mxu0 0
          %1047 = vmatprep.subr.bf16.mxu0 0
          %1048 = vmatpush1.bf16.xpose.msra.mxu0 0
          %1049 = vmatprep.subr.bf16.mxu0 0
          %1050 = vmatpush1.bf16.xpose.msra.mxu0 0
          %1051 = vmatprep.subr.bf16.mxu0 0
          %1052 = vmatpush1.bf16.xpose.msra.mxu0 0
          %1053 = vmatprep.subr.bf16.mxu0 0
          %1054 = vmatpush1.bf16.xpose.msra.mxu0 0
          %1055 = vmatprep.subr.bf16.mxu0 0
          %1056 = vmatpush1.bf16.xpose.msra.mxu0 0
          %1057 = vmatprep.subr.bf16.mxu0 0
          %1058 = vmatpush1.bf16.xpose.msra.mxu0 0
          %1059 = vmatprep.subr.bf16.mxu0 0
          %1060 = vmatpush1.bf16.xpose.msra.mxu0 0
          %1061 = vmatprep.subr.bf16.mxu0 0
          %1062 = vmatpush1.bf16.xpose.msra.mxu0 0
          %1063 = vmatprep.subr.bf16.mxu0 0
          %1064 = vmatpush1.bf16.xpose.msra.mxu0 0
          %1065 = vmatprep.subr.bf16.mxu0 0
          %1066 = vmatpush1.bf16.xpose.msra.mxu0 0
          %1067 = vmatprep.subr.bf16.mxu0 0
          %1068 = vmatpush1.bf16.xpose.msra.mxu0 0
          %1069 = vmatprep.subr.bf16.mxu0 0
          %1070 = vmatpush1.bf16.xpose.msra.mxu0 0
          %1071 = vmatprep.subr.bf16.mxu0 0
          %1072 = vmatpush1.bf16.xpose.msra.mxu0 0
          %1073 = vmatprep.mubr.bf16.mxu0 0
          %1074 = vmatmul.mubr.bf16.gmra.mrb[0].mxu0 %v1036
          %v1075 = vpop.f32.mrb[0].mxu0
          %v1076 = vadd.f32 0.0, %v1075
          %v1077 = vpop.f32.mrb[0].mxu0
          %v1078 = vpop.f32.mrb[0].mxu0
          %v1079 = vpop.f32.mrb[0].mxu0
          %1080 = vdwg.mxu0
          %v1081 = vsel %vm670, %v1076, -inf
          %1082 = vmax.xlane.f32.xlu0 %v1081
          %v1083 = vpop.xlane.xlu0 %1082
          %v1084 = vsub.f32 %v1076, %v1083
          %v1085 = vmul.f32 %v1084, 1.442695
          %v1086 = vpow.pop %v1085
          %v1087 = vsel %vm670, %v1086, 0.0
          %1088 = vadd.xlane.f32.xlu0 %v1087
          %v1089 = vpop.xlane.xlu0 %1088
          %v1090 = vpack.c.bf16 %v1086, %v1086
          %1091 = vrot.lane.b32.xlu0 %v1030, 40
          %v1092 = vpop.permute.xlu0 %1091
          %v1094 = vsel %vm670, %v1090, 0
          %v1097 = vsel %vm732, %v1092, 0
          %1099 = vmatprep.subr.bf16.mxu0 0
          %1100 = vmatpush1.bf16.msra.mxu0 %v1097
          %1101 = vmatprep.subr.bf16.mxu0 0
          %1102 = vmatpush1.bf16.msra.mxu0 0
          %1103 = vmatprep.subr.bf16.mxu0 0
          %1104 = vmatpush1.bf16.msra.mxu0 0
          %1105 = vmatprep.subr.bf16.mxu0 0
          %1106 = vmatpush1.bf16.msra.mxu0 0
          %1107 = vmatprep.subr.bf16.mxu0 0
          %1108 = vmatpush1.bf16.msra.mxu0 0
          %1109 = vmatprep.subr.bf16.mxu0 0
          %1110 = vmatpush1.bf16.msra.mxu0 0
          %1111 = vmatprep.subr.bf16.mxu0 0
          %1112 = vmatpush1.bf16.msra.mxu0 0
          %1113 = vmatprep.subr.bf16.mxu0 0
          %1114 = vmatpush1.bf16.msra.mxu0 0
          %1115 = vmatprep.subr.bf16.mxu0 0
          %1116 = vmatpush1.bf16.msra.mxu0 0
          %1117 = vmatprep.subr.bf16.mxu0 0
          %1118 = vmatpush1.bf16.msra.mxu0 0
          %1119 = vmatprep.subr.bf16.mxu0 0
          %1120 = vmatpush1.bf16.msra.mxu0 0
          %1121 = vmatprep.subr.bf16.mxu0 0
          %1122 = vmatpush1.bf16.msra.mxu0 0
          %1123 = vmatprep.subr.bf16.mxu0 0
          %1124 = vmatpush1.bf16.msra.mxu0 0
          %1125 = vmatprep.subr.bf16.mxu0 0
          %1126 = vmatpush1.bf16.msra.mxu0 0
          %1127 = vmatprep.subr.bf16.mxu0 0
          %1128 = vmatpush1.bf16.msra.mxu0 0
          %1129 = vmatprep.subr.bf16.mxu0 0
          %1130 = vmatpush1.bf16.msra.mxu0 0
          %1131 = vmatprep.mubr.bf16.mxu0 0
          %1132 = vmatmul.mubr.bf16.gmra.mrb[0].mxu0 %v1094
          %v1133 = vpop.f32.mrb[0].mxu0
          %v1134 = vadd.f32 0.0, %v1133
          %v1135 = vpop.f32.mrb[0].mxu0
          %v1136 = vpop.f32.mrb[0].mxu0
          %v1137 = vpop.f32.mrb[0].mxu0
          %1138 = vdwg.mxu0
          %v1139 = vrcp.pop %v1089
          %v1140 = vmul.f32 %v1134, %v1139
          %v1141 = vpack.c.bf16 %v1140, %v1140
          %v1143 = vunpack.c.l.b16 %v1141
          %v1144 = vpack.c.b16 %v1143, %v1143
          %1145 = vrot.lane.b32.xlu0 %v1144, 24
          %v1146 = vpop.permute.xlu0 %1145
          %vm1148 = vcmask 257216
          %1149 = vst.msk [vmem:[#allocation3] sm:$0xf] %vm1148, %v1146
          %v1150 = vld [vmem:[#allocation3] sm:$0xf]
          %v1151 = vld [vmem:[%s7] sm:$0xf]
          %v1152 = vld [vmem:[%s7 + $0x4] sm:$0xf]
          %v1153 = vld [vmem:[%s7 + $0x8] sm:$0xf]
          %v1154 = vld [vmem:[%s7 + $0xc] sm:$0xf]
          %v1155 = vld [vmem:[#allocation11] sm:$0x1]
          %v1157 = vlaneseq
          %v1158 = vshrl.u32 %v1157, 7
          %v1159 = vsub.s32 0, %v1158
          %v1160 = vrot.slane %v1155, %v1159
          %v1166 = vunpack.c.l.b16 %v1151
          %v1167 = vunpack.c.l.b16 %v1152
          %v1168 = vunpack.c.l.b16 %v1153
          %v1169 = vunpack.c.l.b16 %v1154
          %v1170 = vpack.c.b16 %v1167, %v1166
          %v1171 = vpack.c.b16 %v1169, %v1168
          %v1175 = vsel %vm560, %v1150, 0
          %1177 = vmatprep.subr.bf16.mxu0 0
          %1178 = vmatpush1.bf16.msra.mxu0 %v1170
          %1179 = vmatprep.subr.bf16.mxu0 0
          %1180 = vmatpush1.bf16.msra.mxu0 %v1171
          %1181 = vmatprep.subr.bf16.mxu0 0
          %1182 = vmatpush1.bf16.msra.mxu0 0
          %1183 = vmatprep.subr.bf16.mxu0 0
          %1184 = vmatpush1.bf16.msra.mxu0 0
          %1185 = vmatprep.subr.bf16.mxu0 0
          %1186 = vmatpush1.bf16.msra.mxu0 0
          %1187 = vmatprep.subr.bf16.mxu0 0
          %1188 = vmatpush1.bf16.msra.mxu0 0
          %1189 = vmatprep.subr.bf16.mxu0 0
          %1190 = vmatpush1.bf16.msra.mxu0 0
          %1191 = vmatprep.subr.bf16.mxu0 0
          %1192 = vmatpush1.bf16.msra.mxu0 0
          %1193 = vmatprep.subr.bf16.mxu0 0
          %1194 = vmatpush1.bf16.msra.mxu0 0
          %1195 = vmatprep.subr.bf16.mxu0 0
          %1196 = vmatpush1.bf16.msra.mxu0 0
          %1197 = vmatprep.subr.bf16.mxu0 0
          %1198 = vmatpush1.bf16.msra.mxu0 0
          %1199 = vmatprep.subr.bf16.mxu0 0
          %1200 = vmatpush1.bf16.msra.mxu0 0
          %1201 = vmatprep.subr.bf16.mxu0 0
          %1202 = vmatpush1.bf16.msra.mxu0 0
          %1203 = vmatprep.subr.bf16.mxu0 0
          %1204 = vmatpush1.bf16.msra.mxu0 0
          %1205 = vmatprep.subr.bf16.mxu0 0
          %1206 = vmatpush1.bf16.msra.mxu0 0
          %1207 = vmatprep.subr.bf16.mxu0 0
          %1208 = vmatpush1.bf16.msra.mxu0 0
          %1209 = vmatprep.mubr.bf16.mxu0 0
          %1210 = vmatmul.mubr.bf16.gmra.mrb[0].mxu0 %v1175
          %v1211 = vpop.f32.mrb[0].mxu0
          %v1212 = vadd.f32 %v1160, %v1211
          %v1213 = vpop.f32.mrb[0].mxu0
          %v1214 = vpop.f32.mrb[0].mxu0
          %v1215 = vpop.f32.mrb[0].mxu0
          %1216 = vdwg.mxu0
          %v1217 = vld [vmem:[#allocation4] sm:$0xff]
          %v1218 = vadd.f32 %v1217, %v1212
          %v1219 = vld [vmem:[#allocation5] sm:$0x1]
          %v1220 = vld [vmem:[#allocation8] sm:$0x1]
          %v1221 = vsel %vm560, %v1218, 0.0
          %1222 = vadd.xlane.f32.xlu0 %v1221
          %v1223 = vpop.xlane.xlu0 %1222
          %v1224 = vmul.f32 %v1223, %v564
          %v1225 = vsub.f32 %v1218, %v1224
          %v1226 = vmul.f32 %v1225, %v1225
          %v1227 = vsel %vm560, %v1226, 0.0
          %1228 = vadd.xlane.f32.xlu0 %v1227
          %v1229 = vpop.xlane.xlu0 %1228
          %v1230 = vmul.f32 %v1229, %v564
          %v1231 = vadd.f32 %v1230, 1e-06
          %v1232 = vrsqrt.pop %v1231
          %v1233 = vmul.f32 %v1225, %v1232
          %v1235 = vlaneseq
          %v1236 = vshrl.u32 %v1235, 7
          %v1237 = vsub.s32 0, %v1236
          %v1238 = vrot.slane %v1219, %v1237
          %v1240 = vmul.f32 %v1233, %v1238
          %v1242 = vlaneseq
          %v1243 = vshrl.u32 %v1242, 7
          %v1244 = vsub.s32 0, %v1243
          %v1245 = vrot.slane %v1220, %v1244
          %v1247 = vadd.f32 %v1240, %v1245
          %1248 = vst.msk [vmem:[#allocation4] sm:$0xff] %vm560, %v1247
          %1249 = vst.msk [vmem:[%s534] sm:$0xff] %vm560, 0.0
        $region92: #{tpu_custom_call.1} parent=71 // pred_fallthru
          _
        %v1250 = vld [vmem:[#allocation4] sm:$0xff]
        %v1251 = vpack.c.bf16 %v1250, %v1250
        %v1252 = vld [vmem:[%s542] sm:$0xf]
        %v1253 = vld [vmem:[%s542 + $0x4] sm:$0xf]
        %v1254 = vld [vmem:[%s542 + $0x8] sm:$0xf]
        %v1255 = vld [vmem:[%s542 + $0xc] sm:$0xf]
        %v1256 = vld [vmem:[%s545] sm:$0x1]
        %v1258 = vlaneseq
        %v1259 = vshrl.u32 %v1258, 7
        %v1260 = vsub.s32 0, %v1259
        %v1261 = vrot.slane %v1256, %v1260
        %v1267 = vunpack.c.l.b16 %v1252
        %v1268 = vunpack.c.l.b16 %v1253
        %v1269 = vunpack.c.l.b16 %v1254
        %v1270 = vunpack.c.l.b16 %v1255
        %v1271 = vpack.c.b16 %v1268, %v1267
        %v1272 = vpack.c.b16 %v1270, %v1269
        %vm1275 = vcmask 261120
        %v1277 = vsel %vm1275, %v1251, 0
        %1279 = vmatprep.subr.bf16.mxu0 0
        %1280 = vmatpush1.bf16.msra.mxu0 %v1271
        %1281 = vmatprep.subr.bf16.mxu0 0
        %1282 = vmatpush1.bf16.msra.mxu0 %v1272
        %1283 = vmatprep.subr.bf16.mxu0 0
        %1284 = vmatpush1.bf16.msra.mxu0 0
        %1285 = vmatprep.subr.bf16.mxu0 0
        %1286 = vmatpush1.bf16.msra.mxu0 0
        %1287 = vmatprep.subr.bf16.mxu0 0
        %1288 = vmatpush1.bf16.msra.mxu0 0
        %1289 = vmatprep.subr.bf16.mxu0 0
        %1290 = vmatpush1.bf16.msra.mxu0 0
        %1291 = vmatprep.subr.bf16.mxu0 0
        %1292 = vmatpush1.bf16.msra.mxu0 0
        %1293 = vmatprep.subr.bf16.mxu0 0
        %1294 = vmatpush1.bf16.msra.mxu0 0
        %1295 = vmatprep.subr.bf16.mxu0 0
        %1296 = vmatpush1.bf16.msra.mxu0 0
        %1297 = vmatprep.subr.bf16.mxu0 0
        %1298 = vmatpush1.bf16.msra.mxu0 0
        %1299 = vmatprep.subr.bf16.mxu0 0
        %1300 = vmatpush1.bf16.msra.mxu0 0
        %1301 = vmatprep.subr.bf16.mxu0 0
        %1302 = vmatpush1.bf16.msra.mxu0 0
        %1303 = vmatprep.subr.bf16.mxu0 0
        %1304 = vmatpush1.bf16.msra.mxu0 0
        %1305 = vmatprep.subr.bf16.mxu0 0
        %1306 = vmatpush1.bf16.msra.mxu0 0
        %1307 = vmatprep.subr.bf16.mxu0 0
        %1308 = vmatpush1.bf16.msra.mxu0 0
        %1309 = vmatprep.subr.bf16.mxu0 0
        %1310 = vmatpush1.bf16.msra.mxu0 0
        %1311 = vmatprep.mubr.bf16.mxu0 0
        %1312 = vmatmul.mubr.bf16.gmra.mrb[0].mxu0 %v1277
        %v1313 = vpop.f32.mrb[0].mxu0
        %v1314 = vadd.f32 %v1261, %v1313
        %v1315 = vpop.f32.mrb[0].mxu0
        %v1316 = vpop.f32.mrb[0].mxu0
        %v1317 = vpop.f32.mrb[0].mxu0
        %1318 = vdwg.mxu0
        %v1319 = vmul.f32 %v1314, 0.5
        %v1320 = vmul.f32 %v1314, 0.70710677
        %v1321 = verf.f32.pop %v1320
        %v1322 = vadd.f32 %v1321, 1.0
        %v1323 = vmul.f32 %v1319, %v1322
        %v1324 = vpack.c.bf16 %v1323, %v1323
        %v1325 = vld [vmem:[%s550] sm:$0xf]
        %v1326 = vld [vmem:[%s550 + $0x4] sm:$0xf]
        %v1327 = vld [vmem:[%s550 + $0x8] sm:$0xf]
        %v1328 = vld [vmem:[%s550 + $0xc] sm:$0xf]
        %v1329 = vld [vmem:[%s550 + $0x10] sm:$0xf]
        %v1330 = vld [vmem:[%s550 + $0x14] sm:$0xf]
        %v1331 = vld [vmem:[%s550 + $0x18] sm:$0xf]
        %v1332 = vld [vmem:[%s550 + $0x1c] sm:$0xf]
        %v1341 = vunpack.c.l.b16 %v1325
        %v1342 = vunpack.c.l.b16 %v1326
        %v1343 = vunpack.c.l.b16 %v1327
        %v1344 = vunpack.c.l.b16 %v1328
        %v1345 = vunpack.c.l.b16 %v1329
        %v1346 = vunpack.c.l.b16 %v1330
        %v1347 = vunpack.c.l.b16 %v1331
        %v1348 = vunpack.c.l.b16 %v1332
        %v1349 = vpack.c.b16 %v1342, %v1341
        %v1350 = vpack.c.b16 %v1344, %v1343
        %v1351 = vpack.c.b16 %v1346, %v1345
        %v1352 = vpack.c.b16 %v1348, %v1347
        %vm1357 = vcmask 523264
        %v1359 = vsel %vm1357, %v1324, 0
        %1361 = vmatprep.subr.bf16.mxu0 0
        %1362 = vmatpush1.bf16.msra.mxu0 %v1349
        %1363 = vmatprep.subr.bf16.mxu0 0
        %1364 = vmatpush1.bf16.msra.mxu0 %v1350
        %1365 = vmatprep.subr.bf16.mxu0 0
        %1366 = vmatpush1.bf16.msra.mxu0 %v1351
        %1367 = vmatprep.subr.bf16.mxu0 0
        %1368 = vmatpush1.bf16.msra.mxu0 %v1352
        %1369 = vmatprep.subr.bf16.mxu0 0
        %1370 = vmatpush1.bf16.msra.mxu0 0
        %1371 = vmatprep.subr.bf16.mxu0 0
        %1372 = vmatpush1.bf16.msra.mxu0 0
        %1373 = vmatprep.subr.bf16.mxu0 0
        %1374 = vmatpush1.bf16.msra.mxu0 0
        %1375 = vmatprep.subr.bf16.mxu0 0
        %1376 = vmatpush1.bf16.msra.mxu0 0
        %1377 = vmatprep.subr.bf16.mxu0 0
        %1378 = vmatpush1.bf16.msra.mxu0 0
        %1379 = vmatprep.subr.bf16.mxu0 0
        %1380 = vmatpush1.bf16.msra.mxu0 0
        %1381 = vmatprep.subr.bf16.mxu0 0
        %1382 = vmatpush1.bf16.msra.mxu0 0
        %1383 = vmatprep.subr.bf16.mxu0 0
        %1384 = vmatpush1.bf16.msra.mxu0 0
        %1385 = vmatprep.subr.bf16.mxu0 0
        %1386 = vmatpush1.bf16.msra.mxu0 0
        %1387 = vmatprep.subr.bf16.mxu0 0
        %1388 = vmatpush1.bf16.msra.mxu0 0
        %1389 = vmatprep.subr.bf16.mxu0 0
        %1390 = vmatpush1.bf16.msra.mxu0 0
        %1391 = vmatprep.subr.bf16.mxu0 0
        %1392 = vmatpush1.bf16.msra.mxu0 0
        %1393 = vmatprep.mubr.bf16.mxu0 0
        %1394 = vmatmul.mubr.bf16.gmra.mrb[0].mxu0 %v1359
        %v1395 = vpop.f32.mrb[0].mxu0
        %v1396 = vadd.f32 0.0, %v1395
        %v1397 = vpop.f32.mrb[0].mxu0
        %v1398 = vpop.f32.mrb[0].mxu0
        %v1399 = vpop.f32.mrb[0].mxu0
        %1400 = vdwg.mxu0
        %v1401 = vld [vmem:[%s534] sm:$0xff]
        %v1402 = vadd.f32 %v1401, %v1396
        %1403 = vst.msk [vmem:[%s534] sm:$0xff] %vm1275, %v1402
        // Predicated region
        $region93: #{tpu_custom_call.1} parent=71 // pred_check
          %p1404 = pneg %p553
        $region94: #{tpu_custom_call.1} parent=71 // pred_check_branch
          %1406 = sbr.rel (%p1404) target = $region96
        $region95: #{tpu_custom_call.1} parent=71 // pred_region
          %v1407 = vld [vmem:[%s534] sm:$0xff]
          %v1408 = vld [vmem:[#allocation4] sm:$0xff]
          %v1409 = vadd.f32 %v1407, %v1408
          %v1410 = vld [vmem:[%s12] sm:$0x1]
          %v1412 = vlaneseq
          %v1413 = vshrl.u32 %v1412, 7
          %v1414 = vsub.s32 0, %v1413
          %v1415 = vrot.slane %v1410, %v1414
          %v1417 = vadd.f32 %v1409, %v1415
          %1418 = vst.msk [vmem:[%s534] sm:$0xff] %vm1275, %v1417
        $region96: #{tpu_custom_call.1} parent=71 // pred_fallthru
          _
        %s1419 = sand.u32 %s343, 1
        %s1420 = scalar_lea.sflag [#allocation7], %s1419
        %s1421 = sand.u32 %s343, 1
        %s1422 = smul.addr %s1421, 8
        %s1423 = scalar_lea.vmem [#allocation13], %s1422
        // Predicated region
        $region97: #{tpu_custom_call.1} parent=71 // pred_check
          %p1424 = pneg %p353
        $region98: #{tpu_custom_call.1} parent=71 // pred_check_branch
          %1426 = sbr.rel (%p1424) target = $region100
        $region99: #{tpu_custom_call.1} parent=71 // pred_region
          %s1428 = ssub.s32 128, 128
          %1429 = vsyncadd %s1420, %s1428
          %s1430 = smul.addr %s34, 128
          %s1431 = scalar_lea.hbm %s13, %s1430
          %s1433 = sshll.u32 %s1423, 4
          %s1434 = int_to_ptr.vmem [resolvable:$true] %s1433
          %1436 = dma.vmem_to_hbm [thread:$0]  %s1434, 128, %s1431, %s1420
        $region100: #{tpu_custom_call.1} parent=71 // pred_fallthru
          _
      $region72: #{tpu_custom_call.1} parent=5 // pred_fallthru
        _
      %p1437 = scmp.le.s32.totalorder 2, %s25
      // Predicated region
      $region101: #{tpu_custom_call.1} parent=5 // pred_check
        %p1438 = pneg %p1437
      $region102: #{tpu_custom_call.1} parent=5 // pred_check_branch
        %1440 = sbr.rel (%p1438) target = $region104
      $region103: #{tpu_custom_call.1} parent=5 // pred_region
        %s1441 = ssub.s32 %s25, 2
        // Predicated region
        $region105: #{tpu_custom_call.1} parent=103 // pred_check
          %p1442 = pneg %p359
        $region106: #{tpu_custom_call.1} parent=103 // pred_check_branch
          %1444 = sbr.rel (%p1442) target = $region108
        $region107: #{tpu_custom_call.1} parent=103 // pred_region
          %s1445 = sand.u32 %s344, 1
          %s1446 = scalar_lea.sflag [#allocation7], %s1445
          %s1447 = sand.u32 %s344, 1
          %s1448 = smul.addr %s1447, 8
          %s1449 = scalar_lea.vmem [#allocation13], %s1448
          %1450 = dma.done %s1446, 128
        $region108: #{tpu_custom_call.1} parent=103 // pred_fallthru
          _
      $region104: #{tpu_custom_call.1} parent=5 // pred_fallthru
        _
    $region6: #{tpu_custom_call.1} parent=1 // loop_footer
      %s29 = sadd.s32 1, %s25
    $region7: #{tpu_custom_call.1} parent=1 // loop_footer_branch
      %24 = sbr.rel target = $region3
    $region8: #{tpu_custom_call.1} parent=1 // loop_exit
      _
    %1451 = vsyncpa [#allocation6], 1
    %s1452 = scalar_lea.sflag [#allocation6], 1
    %1453 = vsyncpa %s1452, 1
    %1454 = vsyncpa [#allocation9], 1
    %1455 = vsyncpa [#allocation12], 1
    %1456 = vsyncpa [#allocation7], 1
    %s1457 = scalar_lea.sflag [#allocation7], 1
    %1458 = vsyncpa %s1457, 1

</llo_original>
